<compile_context>
chip_gen: v7x
topology: tpu7x:2x2x1
jax: 0.10.0
libtpu: 0.0.40
codegen_flags: <defaults>
</compile_context>

<pallas_src>
import functools

import jax
import jax.numpy as jnp
from jax.experimental import pallas as pl
from jax.experimental.pallas import tpu as pltpu

LANE = 128


def _round_up(x, m):
    return ((x + m - 1) // m) * m


def _pad_axis_to(a, size, axis):
    pads = [(0, 0)] * a.ndim
    pads[axis] = (0, size - a.shape[axis])
    return jnp.pad(a, pads)


def _bn_fold(gamma, beta, mean, var, eps=1e-5):
    scale = gamma / jnp.sqrt(var + eps)
    return scale, beta - mean * scale


# ---------------------------------------------------------------------------
# Fused kernel: conv1(1x1)+BN+ReLU -> conv2(3x3)+BN+ReLU -> conv3(1x1)+BN
#               -> +identity -> ReLU, all inside one grid step.
# ---------------------------------------------------------------------------
def _bottleneck_kernel(x_ref, w1_ref, s1_ref, b1_ref,
                       w2_ref, s2_ref, b2_ref,
                       w3_ref, s3_ref, b3_ref,
                       o_ref, h1_scr, *, th, w, h_img):
    # x_ref : (1, th+2, w, cin_p) f32 -- rows [ht*th, ht*th+th+2) of the
    #         H-zero-padded NHWC image (1-row halo on each side).
    # w*    : bf16 matmul-layout weights;  s*/b*: (1, C) f32 folded BN.
    # o_ref : (1, th, w, cout_p) f32.
    # h1_scr: (th+2, w+2, ci_p) bf16 VMEM scratch (W-padded conv1 output).
    ht = pl.program_id(1)
    cin_p = x_ref.shape[-1]
    ci_p = h1_scr.shape[-1]
    cout_p = o_ref.shape[-1]
    m1 = (th + 2) * w
    m2 = th * w

    x_tile = x_ref[0]                              # (th+2, w, cin_p) f32

    # ---- conv1: 1x1 + BN + ReLU (bf16 MXU inputs, f32 accumulate / BN) ----
    a1 = jnp.dot(x_tile.reshape(m1, cin_p).astype(jnp.bfloat16), w1_ref[...],
                 preferred_element_type=jnp.float32)
    h1 = jnp.maximum(a1 * s1_ref[...] + b1_ref[...], 0.0)
    h1 = h1.reshape(th + 2, w, ci_p)

    # Halo rows outside the image must be *zero* (conv2's zero padding),
    # not conv1(0) = relu(b1).  Padded-image row index of local row r is
    # ht*th + r; image rows live at padded indices [1, h_img].
    g = ht * th + jax.lax.broadcasted_iota(jnp.int32, (th + 2, 1, 1), 0)
    inside = jnp.logical_and(g >= 1, g <= h_img)
    h1 = jnp.where(inside, h1, 0.0)

    # ---- stage h1 into a W-padded bf16 scratch for the 3x3 window reads ----
    h1_scr[:, 0:1, :] = jnp.zeros((th + 2, 1, ci_p), h1_scr.dtype)
    h1_scr[:, w + 1:w + 2, :] = jnp.zeros((th + 2, 1, ci_p), h1_scr.dtype)
    h1_scr[:, 1:w + 1, :] = h1.astype(h1_scr.dtype)

    # ---- conv2: 3x3 pad 1 as 9 shifted matmuls, f32 accumulator ----
    acc2 = jnp.zeros((m2, ci_p), jnp.float32)
    for k in range(9):
        kh, kw = divmod(k, 3)
        patch = h1_scr[kh:kh + th, kw:kw + w, :].reshape(m2, ci_p)
        acc2 = acc2 + jnp.dot(patch, w2_ref[k],
                              preferred_element_type=jnp.float32)
    h2 = jnp.maximum(acc2 * s2_ref[...] + b2_ref[...], 0.0)

    # ---- conv3: 1x1 + BN, residual add (kept in f32), final ReLU ----
    a3 = jnp.dot(h2.astype(jnp.bfloat16), w3_ref[...],
                 preferred_element_type=jnp.float32)
    y = a3 * s3_ref[...] + b3_ref[...]
    identity = x_tile[1:th + 1, :, :].reshape(m2, cin_p)          # f32, no halo
    y = jnp.maximum(y + identity, 0.0)
    o_ref[0] = y.reshape(th, w, cout_p).astype(o_ref.dtype)


# ---------------------------------------------------------------------------
# Wrapper
# ---------------------------------------------------------------------------
@functools.partial(jax.jit, static_argnames=("out_channels", "row_tile"))
def bottleneck_forward(x_nchw, params, *, out_channels, row_tile=32):
    """FarSeg++ Bottleneck forward.  x_nchw: (N, C, H, W) f32; returns NCHW f32."""
    N, C, H, W = x_nchw.shape
    # The residual add requires in_channels == out_channels (same as the module).
    assert C == out_channels, "Bottleneck residual requires in_channels == out_channels"

    cin_p, ci_p = params["w1"].shape
    cout_p = params["w3"].shape[1]
    th = max(1, min(int(row_tile), H))     # clamp tile to the image height
    nh = -(-H // th)                       # cdiv
    hp = nh * th

    # NCHW -> NHWC, pad channels to a lane-dense multiple of 128.
    # TODO(synk): accept/return NHWC directly when the surrounding network is
    # channels-last, to avoid these two extra HBM transposes.
    x = jnp.transpose(x_nchw, (0, 2, 3, 1)).astype(jnp.float32)
    x = _pad_axis_to(x, cin_p, axis=3)

    # Zero-pad H (1-row conv halo top/bottom + round up to a multiple of th),
    # then gather overlapping (th+2)-row tiles so every grid step has its halo.
    xh = jnp.pad(x, ((0, 0), (1, hp - H + 1), (0, 0), (0, 0)))
    rows = jnp.arange(nh)[:, None] * th + jnp.arange(th + 2)[None, :]
    x_tiles = jnp.take(xh, rows, axis=1)                 # (N, nh, th+2, W, cin_p)
    x_tiles = x_tiles.reshape(N * nh, th + 2, W, cin_p)

    kernel = functools.partial(_bottleneck_kernel, th=th, w=W, h_img=H)
    out = pl.pallas_call(
        kernel,
        out_shape=jax.ShapeDtypeStruct((N * nh, th, W, cout_p), jnp.float32),
        grid_spec=pltpu.PrefetchScalarGridSpec(
            num_scalar_prefetch=0,
            grid=(N, nh),
            in_specs=[
                pl.BlockSpec((1, th + 2, W, cin_p),
                             lambda n, h: (n * nh + h, 0, 0, 0)),
                pl.BlockSpec((cin_p, ci_p), lambda n, h: (0, 0)),      # w1
                pl.BlockSpec((1, ci_p), lambda n, h: (0, 0)),          # s1
                pl.BlockSpec((1, ci_p), lambda n, h: (0, 0)),          # b1
                pl.BlockSpec((9, ci_p, ci_p), lambda n, h: (0, 0, 0)),  # w2
                pl.BlockSpec((1, ci_p), lambda n, h: (0, 0)),          # s2
                pl.BlockSpec((1, ci_p), lambda n, h: (0, 0)),          # b2
                pl.BlockSpec((ci_p, cout_p), lambda n, h: (0, 0)),     # w3
                pl.BlockSpec((1, cout_p), lambda n, h: (0, 0)),        # s3
                pl.BlockSpec((1, cout_p), lambda n, h: (0, 0)),        # b3
            ],
            out_specs=pl.BlockSpec((1, th, W, cout_p),
                                   lambda n, h: (n * nh + h, 0, 0, 0)),
            scratch_shapes=[pltpu.VMEM((th + 2, W + 2, ci_p), jnp.bfloat16)],
        ),
        compiler_params=pltpu.CompilerParams(
            dimension_semantics=("parallel", "parallel"),
            vmem_limit_bytes=32 * 1024 * 1024),
    )(x_tiles, params["w1"], params["s1"], params["b1"],
      params["w2"], params["s2"], params["b2"],
      params["w3"], params["s3"], params["b3"])

    out = out.reshape(N, nh * th, W, cout_p)[:, :H, :, :out_channels]
    return jnp.transpose(out, (0, 3, 1, 2))


# ---------------------------------------------------------------------------
# Parameters (PyTorch layout) + preparation into kernel layout
# ---------------------------------------------------------------------------
def init_torch_params(key, in_channels, inner_channels, out_channels):
    """Random parameters in PyTorch layout (Conv2d OIHW weights, BN stats)."""
    ks = jax.random.split(key, 15)
    f32 = jnp.float32

    def bn(i, c):
        gamma = 1.0 + 0.1 * jax.random.normal(ks[i], (c,), f32)
        beta = 0.1 * jax.random.normal(ks[i + 1], (c,), f32)
        mean = 0.1 * jax.random.normal(ks[i + 2], (c,), f32)
        var = 1.0 + 0.1 * jax.random.uniform(ks[i + 3], (c,), f32)
        return (gamma, beta, mean, var)

    return dict(
        w1=0.2 * jax.random.normal(ks[0], (inner_channels, in_channels, 1, 1), f32),
        w2=0.1 * jax.random.normal(ks[1], (inner_channels, inner_channels, 3, 3), f32),
        w3=0.2 * jax.random.normal(ks[2], (out_channels, inner_channels, 1, 1), f32),
        bn1=bn(3, inner_channels),
        bn2=bn(7, inner_channels),
        bn3=bn(11, out_channels),
    )


def prepare_params(tp):
    """Fold BN, put conv weights in matmul layout, pad channels to 128, cast bf16."""
    ci, cin = tp["w1"].shape[:2]
    cout = tp["w3"].shape[0]
    cin_p, ci_p, cout_p = (_round_up(c, LANE) for c in (cin, ci, cout))

    w1 = jnp.transpose(tp["w1"][:, :, 0, 0], (1, 0))                 # (cin, ci)
    w3 = jnp.transpose(tp["w3"][:, :, 0, 0], (1, 0))                 # (ci, cout)
    w2 = jnp.transpose(tp["w2"], (2, 3, 1, 0)).reshape(9, ci, ci)    # k=kh*3+kw, rows=cin

    w1 = _pad_axis_to(_pad_axis_to(w1, cin_p, 0), ci_p, 1).astype(jnp.bfloat16)
    w2 = _pad_axis_to(_pad_axis_to(w2, ci_p, 1), ci_p, 2).astype(jnp.bfloat16)
    w3 = _pad_axis_to(_pad_axis_to(w3, ci_p, 0), cout_p, 1).astype(jnp.bfloat16)

    s1, b1 = _bn_fold(*tp["bn1"])
    s2, b2 = _bn_fold(*tp["bn2"])
    s3, b3 = _bn_fold(*tp["bn3"])

    def vec(v, cp):
        return _pad_axis_to(v.reshape(1, -1).astype(jnp.float32), cp, 1)

    return dict(w1=w1, w2=w2, w3=w3,
                s1=vec(s1, ci_p), b1=vec(b1, ci_p),
                s2=vec(s2, ci_p), b2=vec(b2, ci_p),
                s3=vec(s3, cout_p), b3=vec(b3, cout_p))


# ---------------------------------------------------------------------------
# Pure-JAX reference (lax.conv) with matching bf16-input / f32-accumulate precision
# ---------------------------------------------------------------------------
def reference_forward(x_nchw, tp):
    x = jnp.transpose(x_nchw, (0, 2, 3, 1)).astype(jnp.float32)      # NHWC

    def conv_bn(h, w_oihw, bn, relu, pad):
        w_hwio = jnp.transpose(w_oihw, (2, 3, 1, 0))
        y = jax.lax.conv_general_dilated(
            h.astype(jnp.bfloat16), w_hwio.astype(jnp.bfloat16),
            window_strides=(1, 1), padding=pad,
            dimension_numbers=("NHWC", "HWIO", "NHWC"),
            preferred_element_type=jnp.float32)
        s, b = _bn_fold(*bn)
        y = y * s + b
        return jnp.maximum(y, 0.0) if relu else y

    h = conv_bn(x, tp["w1"], tp["bn1"], True, "VALID")
    h = conv_bn(h, tp["w2"], tp["bn2"], True, "SAME")
    y = conv_bn(h, tp["w3"], tp["bn3"], False, "VALID")
    y = jnp.maximum(y + x, 0.0)
    return jnp.transpose(y, (0, 3, 1, 2))


if __name__ == "__main__":
    N, Cin, H, W = 2, 4, 16, 16
    Cinner, Cout = 8, 4            # residual add requires Cout == Cin

    key = jax.random.PRNGKey(0)
    kx, kp = jax.random.split(key)
    x = jax.random.normal(kx, (N, Cin, H, W), jnp.float32)

    torch_params = init_torch_params(kp, Cin, Cinner, Cout)
    kernel_params = prepare_params(torch_params)

    # row_tile=8 -> 2 row tiles per image, exercising the halo / multi-tile path.
    out = bottleneck_forward(x, kernel_params, out_channels=Cout, row_tile=8)
    out = jax.block_until_ready(out)

    ref = reference_forward(x, torch_params)
    assert out.shape == (N, Cout, H, W)
    max_err = float(jnp.max(jnp.abs(out - ref)))
    # bf16 MXU inputs -> bf16-level tolerance vs the bf16 reference.
    assert jnp.allclose(out, ref, atol=2e-2, rtol=2e-2), \
        f"mismatch vs reference (max abs err {max_err})"

    print("KERNEL_OK")
</pallas_src>

<mosaic_0001>
module attributes {stable_mosaic.version = 11 : i64} {
  func.func @_bottleneck_kernel(%arg0: i32, %arg1: i32, %arg2: memref<1x10x16x128xf32, #tpu.memory_space<vmem>>, %arg3: memref<128x128xbf16, #tpu.memory_space<vmem>>, %arg4: memref<1x128xf32, #tpu.memory_space<vmem>>, %arg5: memref<1x128xf32, #tpu.memory_space<vmem>>, %arg6: memref<9x128x128xbf16, #tpu.memory_space<vmem>>, %arg7: memref<1x128xf32, #tpu.memory_space<vmem>>, %arg8: memref<1x128xf32, #tpu.memory_space<vmem>>, %arg9: memref<128x128xbf16, #tpu.memory_space<vmem>>, %arg10: memref<1x128xf32, #tpu.memory_space<vmem>>, %arg11: memref<1x128xf32, #tpu.memory_space<vmem>>, %arg12: memref<1x8x16x128xf32, #tpu.memory_space<vmem>>, %arg13: memref<10x18x128xbf16, #tpu.memory_space<vmem>>) attributes {dimension_semantics = [#tpu.dimension_semantics<parallel>, #tpu.dimension_semantics<parallel>], iteration_bounds = array<i64: 2, 2>, scalar_prefetch = 0 : i64, scratch_operands = 1 : i64, tpu.core_type = #tpu.core_type<tc>, window_params = [{transform_indices = @transform_0, window_bounds = array<i64: 1, 10, 16, 128>}, {pipeline_mode = #tpu.pipeline_mode<synchronous>, transform_indices = @transform_1, window_bounds = array<i64: 128, 128>}, {pipeline_mode = #tpu.pipeline_mode<synchronous>, transform_indices = @transform_2, window_bounds = array<i64: 1, 128>}, {pipeline_mode = #tpu.pipeline_mode<synchronous>, transform_indices = @transform_3, window_bounds = array<i64: 1, 128>}, {pipeline_mode = #tpu.pipeline_mode<synchronous>, transform_indices = @transform_4, window_bounds = array<i64: 9, 128, 128>}, {pipeline_mode = #tpu.pipeline_mode<synchronous>, transform_indices = @transform_5, window_bounds = array<i64: 1, 128>}, {pipeline_mode = #tpu.pipeline_mode<synchronous>, transform_indices = @transform_6, window_bounds = array<i64: 1, 128>}, {pipeline_mode = #tpu.pipeline_mode<synchronous>, transform_indices = @transform_7, window_bounds = array<i64: 128, 128>}, {pipeline_mode = #tpu.pipeline_mode<synchronous>, transform_indices = @transform_8, window_bounds = array<i64: 1, 128>}, {pipeline_mode = #tpu.pipeline_mode<synchronous>, transform_indices = @transform_9, window_bounds = array<i64: 1, 128>}, {transform_indices = @transform_10, window_bounds = array<i64: 1, 8, 16, 128>}]} {
    %c0 = arith.constant 0 : index
    %c0_0 = arith.constant 0 : index
    %c0_1 = arith.constant 0 : index
    %c0_2 = arith.constant 0 : index
    %0 = vector.load %arg2[%c0, %c0_0, %c0_1, %c0_2] : memref<1x10x16x128xf32, #tpu.memory_space<vmem>>, vector<1x10x16x128xf32>
    %1 = vector.shape_cast %0 : vector<1x10x16x128xf32> to vector<10x16x128xf32>
    %2 = vector.shape_cast %1 : vector<10x16x128xf32> to vector<160x128xf32>
    %3 = arith.truncf %2 : vector<160x128xf32> to vector<160x128xbf16>
    %c0_3 = arith.constant 0 : index
    %c0_4 = arith.constant 0 : index
    %4 = vector.load %arg3[%c0_3, %c0_4] : memref<128x128xbf16, #tpu.memory_space<vmem>>, vector<128x128xbf16>
    %cst = arith.constant dense<0.000000e+00> : vector<160x128xf32>
    %5 = tpu.matmul %3, %4, %cst {dimension_numbers = #tpu.dot_dimension_numbers<[1], [0], [0], [1], [0, 0, 1, 1], [], []>} : vector<160x128xbf16>, vector<128x128xbf16>, vector<160x128xf32> -> vector<160x128xf32>
    %c0_5 = arith.constant 0 : index
    %c0_6 = arith.constant 0 : index
    %6 = vector.load %arg4[%c0_5, %c0_6] : memref<1x128xf32, #tpu.memory_space<vmem>>, vector<1x128xf32>
    %7 = vector.broadcast %6 : vector<1x128xf32> to vector<160x128xf32>
    %8 = arith.mulf %5, %7 : vector<160x128xf32>
    %c0_7 = arith.constant 0 : index
    %c0_8 = arith.constant 0 : index
    %9 = vector.load %arg5[%c0_7, %c0_8] : memref<1x128xf32, #tpu.memory_space<vmem>>, vector<1x128xf32>
    %10 = vector.broadcast %9 : vector<1x128xf32> to vector<160x128xf32>
    %11 = arith.addf %8, %10 : vector<160x128xf32>
    %cst_9 = arith.constant 0.000000e+00 : f32
    %12 = vector.broadcast %cst_9 : f32 to vector<160x128xf32>
    %13 = arith.maximumf %11, %12 : vector<160x128xf32>
    %14 = vector.shape_cast %13 : vector<160x128xf32> to vector<10x16x128xf32>
    %c8_i32 = arith.constant 8 : i32
    %15 = arith.muli %arg1, %c8_i32 : i32
    %16 = tpu.iota {dimensions = array<i32: 0>} : vector<10x1x1xi32>
    %17 = vector.broadcast %15 : i32 to vector<10x1x1xi32>
    %18 = arith.addi %17, %16 : vector<10x1x1xi32>
    %c1_i32 = arith.constant 1 : i32
    %19 = vector.broadcast %c1_i32 : i32 to vector<10x1x1xi32>
    %20 = arith.cmpi sge, %18, %19 : vector<10x1x1xi32>
    %c16_i32 = arith.constant 16 : i32
    %21 = vector.broadcast %c16_i32 : i32 to vector<10x1x1xi32>
    %22 = arith.cmpi sle, %18, %21 : vector<10x1x1xi32>
    %23 = arith.andi %20, %22 : vector<10x1x1xi1>
    %cst_10 = arith.constant 0.000000e+00 : f32
    %24 = vector.shape_cast %23 : vector<10x1x1xi1> to vector<10x1x1xi1>
    %25 = vector.broadcast %24 : vector<10x1x1xi1> to vector<10x16x128xi1>
    %26 = vector.broadcast %cst_10 : f32 to vector<10x16x128xf32>
    %27 = arith.select %25, %14, %26 : vector<10x16x128xi1>, vector<10x16x128xf32>
    %cst_11 = arith.constant 0.000000e+00 : bf16
    %28 = vector.broadcast %cst_11 : bf16 to vector<10x1x128xbf16>
    %c0_12 = arith.constant 0 : index
    %c0_13 = arith.constant 0 : index
    %c0_14 = arith.constant 0 : index
    %29 = vector.load %arg13[%c0_12, %c0_13, %c0_14] : memref<10x18x128xbf16, #tpu.memory_space<vmem>>, vector<10x1x128xbf16>
    tpu.vector_store %arg13[%c0_12, %c0_13, %c0_14], %28 {strides = array<i32>} : memref<10x18x128xbf16, #tpu.memory_space<vmem>>, vector<10x1x128xbf16>,
    %cst_15 = arith.constant 0.000000e+00 : bf16
    %30 = vector.broadcast %cst_15 : bf16 to vector<10x1x128xbf16>
    %c0_16 = arith.constant 0 : index
    %c17 = arith.constant 17 : index
    %c0_17 = arith.constant 0 : index
    %31 = vector.load %arg13[%c0_16, %c17, %c0_17] : memref<10x18x128xbf16, #tpu.memory_space<vmem>>, vector<10x1x128xbf16>
    tpu.vector_store %arg13[%c0_16, %c17, %c0_17], %30 {strides = array<i32>} : memref<10x18x128xbf16, #tpu.memory_space<vmem>>, vector<10x1x128xbf16>,
    %32 = arith.truncf %27 : vector<10x16x128xf32> to vector<10x16x128xbf16>
    %c0_18 = arith.constant 0 : index
    %c1 = arith.constant 1 : index
    %c0_19 = arith.constant 0 : index
    %33 = vector.load %arg13[%c0_18, %c1, %c0_19] : memref<10x18x128xbf16, #tpu.memory_space<vmem>>, vector<10x16x128xbf16>
    tpu.vector_store %arg13[%c0_18, %c1, %c0_19], %32 {strides = array<i32>} : memref<10x18x128xbf16, #tpu.memory_space<vmem>>, vector<10x16x128xbf16>,
    %cst_20 = arith.constant 0.000000e+00 : f32
    %34 = vector.broadcast %cst_20 : f32 to vector<128x128xf32>
    %c0_21 = arith.constant 0 : index
    %c0_22 = arith.constant 0 : index
    %c0_23 = arith.constant 0 : index
    %35 = vector.load %arg13[%c0_21, %c0_22, %c0_23] : memref<10x18x128xbf16, #tpu.memory_space<vmem>>, vector<8x16x128xbf16>
    %36 = vector.shape_cast %35 : vector<8x16x128xbf16> to vector<128x128xbf16>
    %c0_24 = arith.constant 0 : index
    %c0_25 = arith.constant 0 : index
    %c0_26 = arith.constant 0 : index
    %37 = vector.load %arg6[%c0_24, %c0_25, %c0_26] : memref<9x128x128xbf16, #tpu.memory_space<vmem>>, vector<1x128x128xbf16>
    %38 = vector.shape_cast %37 : vector<1x128x128xbf16> to vector<128x128xbf16>
    %cst_27 = arith.constant dense<0.000000e+00> : vector<128x128xf32>
    %39 = tpu.matmul %36, %38, %cst_27 {dimension_numbers = #tpu.dot_dimension_numbers<[1], [0], [0], [1], [0, 0, 1, 1], [], []>} : vector<128x128xbf16>, vector<128x128xbf16>, vector<128x128xf32> -> vector<128x128xf32>
    %40 = arith.addf %34, %39 : vector<128x128xf32>
    %c0_28 = arith.constant 0 : index
    %c1_29 = arith.constant 1 : index
    %c0_30 = arith.constant 0 : index
    %41 = vector.load %arg13[%c0_28, %c1_29, %c0_30] : memref<10x18x128xbf16, #tpu.memory_space<vmem>>, vector<8x16x128xbf16>
    %42 = vector.shape_cast %41 : vector<8x16x128xbf16> to vector<128x128xbf16>
    %c1_31 = arith.constant 1 : index
    %c0_32 = arith.constant 0 : index
    %c0_33 = arith.constant 0 : index
    %43 = vector.load %arg6[%c1_31, %c0_32, %c0_33] : memref<9x128x128xbf16, #tpu.memory_space<vmem>>, vector<1x128x128xbf16>
    %44 = vector.shape_cast %43 : vector<1x128x128xbf16> to vector<128x128xbf16>
    %cst_34 = arith.constant dense<0.000000e+00> : vector<128x128xf32>
    %45 = tpu.matmul %42, %44, %cst_34 {dimension_numbers = #tpu.dot_dimension_numbers<[1], [0], [0], [1], [0, 0, 1, 1], [], []>} : vector<128x128xbf16>, vector<128x128xbf16>, vector<128x128xf32> -> vector<128x128xf32>
    %46 = arith.addf %40, %45 : vector<128x128xf32>
    %c0_35 = arith.constant 0 : index
    %c2 = arith.constant 2 : index
    %c0_36 = arith.constant 0 : index
    %47 = vector.load %arg13[%c0_35, %c2, %c0_36] : memref<10x18x128xbf16, #tpu.memory_space<vmem>>, vector<8x16x128xbf16>
    %48 = vector.shape_cast %47 : vector<8x16x128xbf16> to vector<128x128xbf16>
    %c2_37 = arith.constant 2 : index
    %c0_38 = arith.constant 0 : index
    %c0_39 = arith.constant 0 : index
    %49 = vector.load %arg6[%c2_37, %c0_38, %c0_39] : memref<9x128x128xbf16, #tpu.memory_space<vmem>>, vector<1x128x128xbf16>
    %50 = vector.shape_cast %49 : vector<1x128x128xbf16> to vector<128x128xbf16>
    %cst_40 = arith.constant dense<0.000000e+00> : vector<128x128xf32>
    %51 = tpu.matmul %48, %50, %cst_40 {dimension_numbers = #tpu.dot_dimension_numbers<[1], [0], [0], [1], [0, 0, 1, 1], [], []>} : vector<128x128xbf16>, vector<128x128xbf16>, vector<128x128xf32> -> vector<128x128xf32>
    %52 = arith.addf %46, %51 : vector<128x128xf32>
    %c1_41 = arith.constant 1 : index
    %c0_42 = arith.constant 0 : index
    %c0_43 = arith.constant 0 : index
    %53 = vector.load %arg13[%c1_41, %c0_42, %c0_43] : memref<10x18x128xbf16, #tpu.memory_space<vmem>>, vector<8x16x128xbf16>
    %54 = vector.shape_cast %53 : vector<8x16x128xbf16> to vector<128x128xbf16>
    %c3 = arith.constant 3 : index
    %c0_44 = arith.constant 0 : index
    %c0_45 = arith.constant 0 : index
    %55 = vector.load %arg6[%c3, %c0_44, %c0_45] : memref<9x128x128xbf16, #tpu.memory_space<vmem>>, vector<1x128x128xbf16>
    %56 = vector.shape_cast %55 : vector<1x128x128xbf16> to vector<128x128xbf16>
    %cst_46 = arith.constant dense<0.000000e+00> : vector<128x128xf32>
    %57 = tpu.matmul %54, %56, %cst_46 {dimension_numbers = #tpu.dot_dimension_numbers<[1], [0], [0], [1], [0, 0, 1, 1], [], []>} : vector<128x128xbf16>, vector<128x128xbf16>, vector<128x128xf32> -> vector<128x128xf32>
    %58 = arith.addf %52, %57 : vector<128x128xf32>
    %c1_47 = arith.constant 1 : index
    %c1_48 = arith.constant 1 : index
    %c0_49 = arith.constant 0 : index
    %59 = vector.load %arg13[%c1_47, %c1_48, %c0_49] : memref<10x18x128xbf16, #tpu.memory_space<vmem>>, vector<8x16x128xbf16>
    %60 = vector.shape_cast %59 : vector<8x16x128xbf16> to vector<128x128xbf16>
    %c4 = arith.constant 4 : index
    %c0_50 = arith.constant 0 : index
    %c0_51 = arith.constant 0 : index
    %61 = vector.load %arg6[%c4, %c0_50, %c0_51] : memref<9x128x128xbf16, #tpu.memory_space<vmem>>, vector<1x128x128xbf16>
    %62 = vector.shape_cast %61 : vector<1x128x128xbf16> to vector<128x128xbf16>
    %cst_52 = arith.constant dense<0.000000e+00> : vector<128x128xf32>
    %63 = tpu.matmul %60, %62, %cst_52 {dimension_numbers = #tpu.dot_dimension_numbers<[1], [0], [0], [1], [0, 0, 1, 1], [], []>} : vector<128x128xbf16>, vector<128x128xbf16>, vector<128x128xf32> -> vector<128x128xf32>
    %64 = arith.addf %58, %63 : vector<128x128xf32>
    %c1_53 = arith.constant 1 : index
    %c2_54 = arith.constant 2 : index
    %c0_55 = arith.constant 0 : index
    %65 = vector.load %arg13[%c1_53, %c2_54, %c0_55] : memref<10x18x128xbf16, #tpu.memory_space<vmem>>, vector<8x16x128xbf16>
    %66 = vector.shape_cast %65 : vector<8x16x128xbf16> to vector<128x128xbf16>
    %c5 = arith.constant 5 : index
    %c0_56 = arith.constant 0 : index
    %c0_57 = arith.constant 0 : index
    %67 = vector.load %arg6[%c5, %c0_56, %c0_57] : memref<9x128x128xbf16, #tpu.memory_space<vmem>>, vector<1x128x128xbf16>
    %68 = vector.shape_cast %67 : vector<1x128x128xbf16> to vector<128x128xbf16>
    %cst_58 = arith.constant dense<0.000000e+00> : vector<128x128xf32>
    %69 = tpu.matmul %66, %68, %cst_58 {dimension_numbers = #tpu.dot_dimension_numbers<[1], [0], [0], [1], [0, 0, 1, 1], [], []>} : vector<128x128xbf16>, vector<128x128xbf16>, vector<128x128xf32> -> vector<128x128xf32>
    %70 = arith.addf %64, %69 : vector<128x128xf32>
    %c2_59 = arith.constant 2 : index
    %c0_60 = arith.constant 0 : index
    %c0_61 = arith.constant 0 : index
    %71 = vector.load %arg13[%c2_59, %c0_60, %c0_61] : memref<10x18x128xbf16, #tpu.memory_space<vmem>>, vector<8x16x128xbf16>
    %72 = vector.shape_cast %71 : vector<8x16x128xbf16> to vector<128x128xbf16>
    %c6 = arith.constant 6 : index
    %c0_62 = arith.constant 0 : index
    %c0_63 = arith.constant 0 : index
    %73 = vector.load %arg6[%c6, %c0_62, %c0_63] : memref<9x128x128xbf16, #tpu.memory_space<vmem>>, vector<1x128x128xbf16>
    %74 = vector.shape_cast %73 : vector<1x128x128xbf16> to vector<128x128xbf16>
    %cst_64 = arith.constant dense<0.000000e+00> : vector<128x128xf32>
    %75 = tpu.matmul %72, %74, %cst_64 {dimension_numbers = #tpu.dot_dimension_numbers<[1], [0], [0], [1], [0, 0, 1, 1], [], []>} : vector<128x128xbf16>, vector<128x128xbf16>, vector<128x128xf32> -> vector<128x128xf32>
    %76 = arith.addf %70, %75 : vector<128x128xf32>
    %c2_65 = arith.constant 2 : index
    %c1_66 = arith.constant 1 : index
    %c0_67 = arith.constant 0 : index
    %77 = vector.load %arg13[%c2_65, %c1_66, %c0_67] : memref<10x18x128xbf16, #tpu.memory_space<vmem>>, vector<8x16x128xbf16>
    %78 = vector.shape_cast %77 : vector<8x16x128xbf16> to vector<128x128xbf16>
    %c7 = arith.constant 7 : index
    %c0_68 = arith.constant 0 : index
    %c0_69 = arith.constant 0 : index
    %79 = vector.load %arg6[%c7, %c0_68, %c0_69] : memref<9x128x128xbf16, #tpu.memory_space<vmem>>, vector<1x128x128xbf16>
    %80 = vector.shape_cast %79 : vector<1x128x128xbf16> to vector<128x128xbf16>
    %cst_70 = arith.constant dense<0.000000e+00> : vector<128x128xf32>
    %81 = tpu.matmul %78, %80, %cst_70 {dimension_numbers = #tpu.dot_dimension_numbers<[1], [0], [0], [1], [0, 0, 1, 1], [], []>} : vector<128x128xbf16>, vector<128x128xbf16>, vector<128x128xf32> -> vector<128x128xf32>
    %82 = arith.addf %76, %81 : vector<128x128xf32>
    %c2_71 = arith.constant 2 : index
    %c2_72 = arith.constant 2 : index
    %c0_73 = arith.constant 0 : index
    %83 = vector.load %arg13[%c2_71, %c2_72, %c0_73] : memref<10x18x128xbf16, #tpu.memory_space<vmem>>, vector<8x16x128xbf16>
    %84 = vector.shape_cast %83 : vector<8x16x128xbf16> to vector<128x128xbf16>
    %c8 = arith.constant 8 : index
    %c0_74 = arith.constant 0 : index
    %c0_75 = arith.constant 0 : index
    %85 = vector.load %arg6[%c8, %c0_74, %c0_75] : memref<9x128x128xbf16, #tpu.memory_space<vmem>>, vector<1x128x128xbf16>
    %86 = vector.shape_cast %85 : vector<1x128x128xbf16> to vector<128x128xbf16>
    %cst_76 = arith.constant dense<0.000000e+00> : vector<128x128xf32>
    %87 = tpu.matmul %84, %86, %cst_76 {dimension_numbers = #tpu.dot_dimension_numbers<[1], [0], [0], [1], [0, 0, 1, 1], [], []>} : vector<128x128xbf16>, vector<128x128xbf16>, vector<128x128xf32> -> vector<128x128xf32>
    %88 = arith.addf %82, %87 : vector<128x128xf32>
    %c0_77 = arith.constant 0 : index
    %c0_78 = arith.constant 0 : index
    %89 = vector.load %arg7[%c0_77, %c0_78] : memref<1x128xf32, #tpu.memory_space<vmem>>, vector<1x128xf32>
    %90 = vector.broadcast %89 : vector<1x128xf32> to vector<128x128xf32>
    %91 = arith.mulf %88, %90 : vector<128x128xf32>
    %c0_79 = arith.constant 0 : index
    %c0_80 = arith.constant 0 : index
    %92 = vector.load %arg8[%c0_79, %c0_80] : memref<1x128xf32, #tpu.memory_space<vmem>>, vector<1x128xf32>
    %93 = vector.broadcast %92 : vector<1x128xf32> to vector<128x128xf32>
    %94 = arith.addf %91, %93 : vector<128x128xf32>
    %cst_81 = arith.constant 0.000000e+00 : f32
    %95 = vector.broadcast %cst_81 : f32 to vector<128x128xf32>
    %96 = arith.maximumf %94, %95 : vector<128x128xf32>
    %97 = arith.truncf %96 : vector<128x128xf32> to vector<128x128xbf16>
    %c0_82 = arith.constant 0 : index
    %c0_83 = arith.constant 0 : index
    %98 = vector.load %arg9[%c0_82, %c0_83] : memref<128x128xbf16, #tpu.memory_space<vmem>>, vector<128x128xbf16>
    %cst_84 = arith.constant dense<0.000000e+00> : vector<128x128xf32>
    %99 = tpu.matmul %97, %98, %cst_84 {dimension_numbers = #tpu.dot_dimension_numbers<[1], [0], [0], [1], [0, 0, 1, 1], [], []>} : vector<128x128xbf16>, vector<128x128xbf16>, vector<128x128xf32> -> vector<128x128xf32>
    %c0_85 = arith.constant 0 : index
    %c0_86 = arith.constant 0 : index
    %100 = vector.load %arg10[%c0_85, %c0_86] : memref<1x128xf32, #tpu.memory_space<vmem>>, vector<1x128xf32>
    %101 = vector.broadcast %100 : vector<1x128xf32> to vector<128x128xf32>
    %102 = arith.mulf %99, %101 : vector<128x128xf32>
    %c0_87 = arith.constant 0 : index
    %c0_88 = arith.constant 0 : index
    %103 = vector.load %arg11[%c0_87, %c0_88] : memref<1x128xf32, #tpu.memory_space<vmem>>, vector<1x128xf32>
    %104 = vector.broadcast %103 : vector<1x128xf32> to vector<128x128xf32>
    %105 = arith.addf %102, %104 : vector<128x128xf32>
    %106 = vector.extract_strided_slice %1 {offsets = [1, 0, 0], sizes = [8, 16, 128], strides = [1, 1, 1]} : vector<10x16x128xf32> to vector<8x16x128xf32>
    %107 = vector.shape_cast %106 : vector<8x16x128xf32> to vector<128x128xf32>
    %108 = arith.addf %105, %107 : vector<128x128xf32>
    %cst_89 = arith.constant 0.000000e+00 : f32
    %109 = vector.broadcast %cst_89 : f32 to vector<128x128xf32>
    %110 = arith.maximumf %108, %109 : vector<128x128xf32>
    %111 = vector.shape_cast %110 : vector<128x128xf32> to vector<8x16x128xf32>
    %c0_90 = arith.constant 0 : index
    %c0_91 = arith.constant 0 : index
    %c0_92 = arith.constant 0 : index
    %c0_93 = arith.constant 0 : index
    %112 = vector.load %arg12[%c0_90, %c0_91, %c0_92, %c0_93] : memref<1x8x16x128xf32, #tpu.memory_space<vmem>>, vector<1x8x16x128xf32>
    %113 = vector.shape_cast %112 : vector<1x8x16x128xf32> to vector<8x16x128xf32>
    %114 = vector.shape_cast %111 : vector<8x16x128xf32> to vector<1x8x16x128xf32>
    tpu.vector_store %arg12[%c0_90, %c0_91, %c0_92, %c0_93], %114 {strides = array<i32>} : memref<1x8x16x128xf32, #tpu.memory_space<vmem>>, vector<1x8x16x128xf32>,
    return
  }
  func.func @transform_0(%arg0: i32, %arg1: i32) -> (i32, i32, i32, i32) {
    %c2_i32 = arith.constant 2 : i32
    %0 = arith.muli %arg0, %c2_i32 : i32
    %1 = arith.addi %0, %arg1 : i32
    %c0_i32 = arith.constant 0 : i32
    %c0_i32_0 = arith.constant 0 : i32
    %c0_i32_1 = arith.constant 0 : i32
    %c0_i32_2 = arith.constant 0 : i32
    return %1, %c0_i32, %c0_i32_0, %c0_i32_1 : i32, i32, i32, i32
  }
  func.func @transform_1(%arg0: i32, %arg1: i32) -> (i32, i32) {
    %c0_i32 = arith.constant 0 : i32
    %c0_i32_0 = arith.constant 0 : i32
    %c0_i32_1 = arith.constant 0 : i32
    return %c0_i32, %c0_i32_0 : i32, i32
  }
  func.func @transform_2(%arg0: i32, %arg1: i32) -> (i32, i32) {
    %c0_i32 = arith.constant 0 : i32
    %c0_i32_0 = arith.constant 0 : i32
    %c0_i32_1 = arith.constant 0 : i32
    return %c0_i32, %c0_i32_0 : i32, i32
  }
  func.func @transform_3(%arg0: i32, %arg1: i32) -> (i32, i32) {
    %c0_i32 = arith.constant 0 : i32
    %c0_i32_0 = arith.constant 0 : i32
    %c0_i32_1 = arith.constant 0 : i32
    return %c0_i32, %c0_i32_0 : i32, i32
  }
  func.func @transform_4(%arg0: i32, %arg1: i32) -> (i32, i32, i32) {
    %c0_i32 = arith.constant 0 : i32
    %c0_i32_0 = arith.constant 0 : i32
    %c0_i32_1 = arith.constant 0 : i32
    %c0_i32_2 = arith.constant 0 : i32
    return %c0_i32, %c0_i32_0, %c0_i32_1 : i32, i32, i32
  }
  func.func @transform_5(%arg0: i32, %arg1: i32) -> (i32, i32) {
    %c0_i32 = arith.constant 0 : i32
    %c0_i32_0 = arith.constant 0 : i32
    %c0_i32_1 = arith.constant 0 : i32
    return %c0_i32, %c0_i32_0 : i32, i32
  }
  func.func @transform_6(%arg0: i32, %arg1: i32) -> (i32, i32) {
    %c0_i32 = arith.constant 0 : i32
    %c0_i32_0 = arith.constant 0 : i32
    %c0_i32_1 = arith.constant 0 : i32
    return %c0_i32, %c0_i32_0 : i32, i32
  }
  func.func @transform_7(%arg0: i32, %arg1: i32) -> (i32, i32) {
    %c0_i32 = arith.constant 0 : i32
    %c0_i32_0 = arith.constant 0 : i32
    %c0_i32_1 = arith.constant 0 : i32
    return %c0_i32, %c0_i32_0 : i32, i32
  }
  func.func @transform_8(%arg0: i32, %arg1: i32) -> (i32, i32) {
    %c0_i32 = arith.constant 0 : i32
    %c0_i32_0 = arith.constant 0 : i32
    %c0_i32_1 = arith.constant 0 : i32
    return %c0_i32, %c0_i32_0 : i32, i32
  }
  func.func @transform_9(%arg0: i32, %arg1: i32) -> (i32, i32) {
    %c0_i32 = arith.constant 0 : i32
    %c0_i32_0 = arith.constant 0 : i32
    %c0_i32_1 = arith.constant 0 : i32
    return %c0_i32, %c0_i32_0 : i32, i32
  }
  func.func @transform_10(%arg0: i32, %arg1: i32) -> (i32, i32, i32, i32) {
    %c2_i32 = arith.constant 2 : i32
    %0 = arith.muli %arg0, %c2_i32 : i32
    %1 = arith.addi %0, %arg1 : i32
    %c0_i32 = arith.constant 0 : i32
    %c0_i32_0 = arith.constant 0 : i32
    %c0_i32_1 = arith.constant 0 : i32
    %c0_i32_2 = arith.constant 0 : i32
    return %1, %c0_i32, %c0_i32_0, %c0_i32_1 : i32, i32, i32, i32
  }
}

</mosaic_0001>

<llo_original>
// kernel: bottleneck_forward.1
$region0: #{bottleneck_forward.1}
  #allocation0 [shape = 'u32[]', space=smem, size = 0x4, offset = 0x4, fixed_abs, tag = 'smem constant byte address 0x4 - core index']
  #allocation1 [shape = 'u32[144,128]{1,0:T(1,128)}', space=vmem, size = 0x12000, scoped, tag = 'internal scratch']
  #allocation2 [shape = 'bf16[10,18,128]{2,1,0:T(8,128)(2,1)}', space=vmem, size = 0xf000, scoped, tag = 'scratch operand']
  %s0 = inlined_call_operand.vmem [shape: f32[4,10,16,128], index: 0, kind: input, shape index: {}]
  %s1 = inlined_call_operand.vmem [shape: bf16[128,128], index: 1, kind: input, shape index: {}]
  %s2 = inlined_call_operand.vmem [shape: f32[1,128], index: 2, kind: input, shape index: {}]
  %s3 = inlined_call_operand.vmem [shape: f32[1,128], index: 3, kind: input, shape index: {}]
  %s4 = inlined_call_operand.vmem [shape: bf16[9,128,128], index: 4, kind: input, shape index: {}]
  %s5 = inlined_call_operand.vmem [shape: f32[1,128], index: 5, kind: input, shape index: {}]
  %s6 = inlined_call_operand.vmem [shape: f32[1,128], index: 6, kind: input, shape index: {}]
  %s7 = inlined_call_operand.vmem [shape: bf16[128,128], index: 7, kind: input, shape index: {}]
  %s8 = inlined_call_operand.vmem [shape: f32[1,128], index: 8, kind: input, shape index: {}]
  %s9 = inlined_call_operand.vmem [shape: f32[1,128], index: 9, kind: input, shape index: {}]
  %s10 = inlined_call_operand.vmem [shape: f32[4,8,16,128], index: 10, kind: output, shape index: {}]
  %s11 = sld [smem:[#allocation0]]
  $region73: #{bottleneck_forward.1} parent=0
    _
  %s13 = ssub.s32 1, %s11
  %s14 = scalar_select 0, %s13, %s11
  loop: start=0, step=1, limit=6
  $region2: #{bottleneck_forward.1} parent=0 // loop_pre_header
    _
  $region3: #{bottleneck_forward.1} parent=0 // loop_header
    %s16 = sphi 0, %s20
    %p17 = scmp.ge.s32.totalorder %s16, 6
    %s23 = sphi 0, %s35
    %s24 = sphi 0, %s31
    %s25 = sphi 0, %s23
    %s26 = sphi 0, %s24
    %s27 = sphi 0, %s25
    %s28 = sphi 0, %s26
    %s42 = sphi 0, %s44
    %s45 = sphi 0, %s42
    %s46 = sphi 0, %s45
    %s62 = sphi 0, %s46
    %s66 = sphi 0, %s66
    %s68 = sphi 0, %s66
    %s69 = sphi 0, %s68
    %s83 = sphi 0, %s69
    %s87 = sphi 0, %s87
    %s89 = sphi 0, %s87
    %s90 = sphi 0, %s89
    %s104 = sphi 0, %s90
    %s108 = sphi 0, %s108
    %s110 = sphi 0, %s108
    %s111 = sphi 0, %s110
    %s125 = sphi 0, %s111
    %s129 = sphi 0, %s129
    %s131 = sphi 0, %s129
    %s132 = sphi 0, %s131
    %s146 = sphi 0, %s132
    %s150 = sphi 0, %s150
    %s152 = sphi 0, %s150
    %s153 = sphi 0, %s152
    %s167 = sphi 0, %s153
    %s171 = sphi 0, %s171
    %s173 = sphi 0, %s171
    %s174 = sphi 0, %s173
    %s188 = sphi 0, %s174
    %s192 = sphi 0, %s192
    %s194 = sphi 0, %s192
    %s195 = sphi 0, %s194
    %s209 = sphi 0, %s195
    %s213 = sphi 0, %s213
    %s215 = sphi 0, %s213
    %s216 = sphi 0, %s215
    %s230 = sphi 0, %s216
    %s234 = sphi 0, %s234
    %s236 = sphi 0, %s234
    %s237 = sphi 0, %s236
    %s251 = sphi 0, %s237
    %s261 = sphi 0, %s263
    %s264 = sphi 0, %s261
    %s265 = sphi 0, %s264
    %s281 = sphi 0, %s265
  $region4: #{bottleneck_forward.1} parent=0 // loop_header_branch
    %19 = sbr.rel (%p17) target = $region8
  $region5: #{bottleneck_forward.1} parent=0 // loop_body
    %s21 = ssub.s32 %s16, 1
    %s22 = ssub.s32 %s16, 2
    %s29 = sadd.s32 1, %s24
    %p30 = scmp.ge.s32.totalorder %s29, 2
    %s31 = scalar_select %p30, 0, %s29
    %s32 = sadd.s32 1, %s23
    %s33 = scalar_select %p30, %s32, %s23
    %p34 = scmp.ge.s32.totalorder %s33, 2
    %s35 = scalar_select %p34, 0, %s33
    %s36 = smul.u32 %s23, 2
    %s37 = sadd.s32 %s36, %s24
    %s38 = smul.u32 %s35, 2
    %s39 = sadd.s32 %s38, %s31
    %s40 = ssub.s32 %s37, %s39
    %p41 = scmp.eq.s32.totalorder %s40, 0
    %s43 = sadd.s32 %s42, 1
    %s44 = scalar_select %p41, %s42, %s43
    %p47 = pneg %p41
    %p48 = scmp.eq.s32.totalorder %s16, 3
    %p49 = por %p47, %p48
    %p50 = scmp.ne.s32.totalorder %s42, %s45
    %p51 = scmp.eq.s32.totalorder %s16, 0
    %p52 = por %p50, %p51
    %p53 = scmp.ne.s32.totalorder %s42, %s45
    %p54 = scmp.eq.s32.totalorder %s21, 3
    %p55 = por %p53, %p54
    %p56 = scmp.ne.s32.totalorder %s45, %s46
    %p57 = scmp.eq.s32.totalorder %s21, 0
    %p58 = por %p56, %p57
    %p59 = scmp.ne.s32.totalorder %s45, %s46
    %p60 = scmp.eq.s32.totalorder %s22, 3
    %p61 = por %p59, %p60
    %p63 = scmp.ne.s32.totalorder %s46, %s62
    %p64 = scmp.eq.s32.totalorder %s22, 0
    %p65 = por %p63, %p64
    %s67 = sadd.s32 %s66, 1
    %p70 = scmp.eq.s32.totalorder %s16, 3
    %p71 = scmp.ne.s32.totalorder %s66, %s68
    %p72 = scmp.eq.s32.totalorder %s16, 0
    %p73 = por %p71, %p72
    %p74 = scmp.ne.s32.totalorder %s66, %s68
    %p75 = scmp.eq.s32.totalorder %s21, 3
    %p76 = por %p74, %p75
    %p77 = scmp.ne.s32.totalorder %s68, %s69
    %p78 = scmp.eq.s32.totalorder %s21, 0
    %p79 = por %p77, %p78
    %p80 = scmp.ne.s32.totalorder %s68, %s69
    %p81 = scmp.eq.s32.totalorder %s22, 3
    %p82 = por %p80, %p81
    %p84 = scmp.ne.s32.totalorder %s69, %s83
    %p85 = scmp.eq.s32.totalorder %s22, 0
    %p86 = por %p84, %p85
    %s88 = sadd.s32 %s87, 1
    %p91 = scmp.eq.s32.totalorder %s16, 3
    %p92 = scmp.ne.s32.totalorder %s87, %s89
    %p93 = scmp.eq.s32.totalorder %s16, 0
    %p94 = por %p92, %p93
    %p95 = scmp.ne.s32.totalorder %s87, %s89
    %p96 = scmp.eq.s32.totalorder %s21, 3
    %p97 = por %p95, %p96
    %p98 = scmp.ne.s32.totalorder %s89, %s90
    %p99 = scmp.eq.s32.totalorder %s21, 0
    %p100 = por %p98, %p99
    %p101 = scmp.ne.s32.totalorder %s89, %s90
    %p102 = scmp.eq.s32.totalorder %s22, 3
    %p103 = por %p101, %p102
    %p105 = scmp.ne.s32.totalorder %s90, %s104
    %p106 = scmp.eq.s32.totalorder %s22, 0
    %p107 = por %p105, %p106
    %s109 = sadd.s32 %s108, 1
    %p112 = scmp.eq.s32.totalorder %s16, 3
    %p113 = scmp.ne.s32.totalorder %s108, %s110
    %p114 = scmp.eq.s32.totalorder %s16, 0
    %p115 = por %p113, %p114
    %p116 = scmp.ne.s32.totalorder %s108, %s110
    %p117 = scmp.eq.s32.totalorder %s21, 3
    %p118 = por %p116, %p117
    %p119 = scmp.ne.s32.totalorder %s110, %s111
    %p120 = scmp.eq.s32.totalorder %s21, 0
    %p121 = por %p119, %p120
    %p122 = scmp.ne.s32.totalorder %s110, %s111
    %p123 = scmp.eq.s32.totalorder %s22, 3
    %p124 = por %p122, %p123
    %p126 = scmp.ne.s32.totalorder %s111, %s125
    %p127 = scmp.eq.s32.totalorder %s22, 0
    %p128 = por %p126, %p127
    %s130 = sadd.s32 %s129, 1
    %p133 = scmp.eq.s32.totalorder %s16, 3
    %p134 = scmp.ne.s32.totalorder %s129, %s131
    %p135 = scmp.eq.s32.totalorder %s16, 0
    %p136 = por %p134, %p135
    %p137 = scmp.ne.s32.totalorder %s129, %s131
    %p138 = scmp.eq.s32.totalorder %s21, 3
    %p139 = por %p137, %p138
    %p140 = scmp.ne.s32.totalorder %s131, %s132
    %p141 = scmp.eq.s32.totalorder %s21, 0
    %p142 = por %p140, %p141
    %p143 = scmp.ne.s32.totalorder %s131, %s132
    %p144 = scmp.eq.s32.totalorder %s22, 3
    %p145 = por %p143, %p144
    %p147 = scmp.ne.s32.totalorder %s132, %s146
    %p148 = scmp.eq.s32.totalorder %s22, 0
    %p149 = por %p147, %p148
    %s151 = sadd.s32 %s150, 1
    %p154 = scmp.eq.s32.totalorder %s16, 3
    %p155 = scmp.ne.s32.totalorder %s150, %s152
    %p156 = scmp.eq.s32.totalorder %s16, 0
    %p157 = por %p155, %p156
    %p158 = scmp.ne.s32.totalorder %s150, %s152
    %p159 = scmp.eq.s32.totalorder %s21, 3
    %p160 = por %p158, %p159
    %p161 = scmp.ne.s32.totalorder %s152, %s153
    %p162 = scmp.eq.s32.totalorder %s21, 0
    %p163 = por %p161, %p162
    %p164 = scmp.ne.s32.totalorder %s152, %s153
    %p165 = scmp.eq.s32.totalorder %s22, 3
    %p166 = por %p164, %p165
    %p168 = scmp.ne.s32.totalorder %s153, %s167
    %p169 = scmp.eq.s32.totalorder %s22, 0
    %p170 = por %p168, %p169
    %s172 = sadd.s32 %s171, 1
    %p175 = scmp.eq.s32.totalorder %s16, 3
    %p176 = scmp.ne.s32.totalorder %s171, %s173
    %p177 = scmp.eq.s32.totalorder %s16, 0
    %p178 = por %p176, %p177
    %p179 = scmp.ne.s32.totalorder %s171, %s173
    %p180 = scmp.eq.s32.totalorder %s21, 3
    %p181 = por %p179, %p180
    %p182 = scmp.ne.s32.totalorder %s173, %s174
    %p183 = scmp.eq.s32.totalorder %s21, 0
    %p184 = por %p182, %p183
    %p185 = scmp.ne.s32.totalorder %s173, %s174
    %p186 = scmp.eq.s32.totalorder %s22, 3
    %p187 = por %p185, %p186
    %p189 = scmp.ne.s32.totalorder %s174, %s188
    %p190 = scmp.eq.s32.totalorder %s22, 0
    %p191 = por %p189, %p190
    %s193 = sadd.s32 %s192, 1
    %p196 = scmp.eq.s32.totalorder %s16, 3
    %p197 = scmp.ne.s32.totalorder %s192, %s194
    %p198 = scmp.eq.s32.totalorder %s16, 0
    %p199 = por %p197, %p198
    %p200 = scmp.ne.s32.totalorder %s192, %s194
    %p201 = scmp.eq.s32.totalorder %s21, 3
    %p202 = por %p200, %p201
    %p203 = scmp.ne.s32.totalorder %s194, %s195
    %p204 = scmp.eq.s32.totalorder %s21, 0
    %p205 = por %p203, %p204
    %p206 = scmp.ne.s32.totalorder %s194, %s195
    %p207 = scmp.eq.s32.totalorder %s22, 3
    %p208 = por %p206, %p207
    %p210 = scmp.ne.s32.totalorder %s195, %s209
    %p211 = scmp.eq.s32.totalorder %s22, 0
    %p212 = por %p210, %p211
    %s214 = sadd.s32 %s213, 1
    %p217 = scmp.eq.s32.totalorder %s16, 3
    %p218 = scmp.ne.s32.totalorder %s213, %s215
    %p219 = scmp.eq.s32.totalorder %s16, 0
    %p220 = por %p218, %p219
    %p221 = scmp.ne.s32.totalorder %s213, %s215
    %p222 = scmp.eq.s32.totalorder %s21, 3
    %p223 = por %p221, %p222
    %p224 = scmp.ne.s32.totalorder %s215, %s216
    %p225 = scmp.eq.s32.totalorder %s21, 0
    %p226 = por %p224, %p225
    %p227 = scmp.ne.s32.totalorder %s215, %s216
    %p228 = scmp.eq.s32.totalorder %s22, 3
    %p229 = por %p227, %p228
    %p231 = scmp.ne.s32.totalorder %s216, %s230
    %p232 = scmp.eq.s32.totalorder %s22, 0
    %p233 = por %p231, %p232
    %s235 = sadd.s32 %s234, 1
    %p238 = scmp.eq.s32.totalorder %s16, 3
    %p239 = scmp.ne.s32.totalorder %s234, %s236
    %p240 = scmp.eq.s32.totalorder %s16, 0
    %p241 = por %p239, %p240
    %p242 = scmp.ne.s32.totalorder %s234, %s236
    %p243 = scmp.eq.s32.totalorder %s21, 3
    %p244 = por %p242, %p243
    %p245 = scmp.ne.s32.totalorder %s236, %s237
    %p246 = scmp.eq.s32.totalorder %s21, 0
    %p247 = por %p245, %p246
    %p248 = scmp.ne.s32.totalorder %s236, %s237
    %p249 = scmp.eq.s32.totalorder %s22, 3
    %p250 = por %p248, %p249
    %p252 = scmp.ne.s32.totalorder %s237, %s251
    %p253 = scmp.eq.s32.totalorder %s22, 0
    %p254 = por %p252, %p253
    %s255 = smul.u32 %s23, 2
    %s256 = sadd.s32 %s255, %s24
    %s257 = smul.u32 %s35, 2
    %s258 = sadd.s32 %s257, %s31
    %s259 = ssub.s32 %s256, %s258
    %p260 = scmp.eq.s32.totalorder %s259, 0
    %s262 = sadd.s32 %s261, 1
    %s263 = scalar_select %p260, %s261, %s262
    %p266 = pneg %p260
    %p267 = scmp.eq.s32.totalorder %s16, 3
    %p268 = por %p266, %p267
    %p269 = scmp.ne.s32.totalorder %s261, %s264
    %p270 = scmp.eq.s32.totalorder %s16, 0
    %p271 = por %p269, %p270
    %p272 = scmp.ne.s32.totalorder %s261, %s264
    %p273 = scmp.eq.s32.totalorder %s21, 3
    %p274 = por %p272, %p273
    %p275 = scmp.ne.s32.totalorder %s264, %s265
    %p276 = scmp.eq.s32.totalorder %s21, 0
    %p277 = por %p275, %p276
    %p278 = scmp.ne.s32.totalorder %s264, %s265
    %p279 = scmp.eq.s32.totalorder %s22, 3
    %p280 = por %p278, %p279
    %p282 = scmp.ne.s32.totalorder %s265, %s281
    %p283 = scmp.eq.s32.totalorder %s22, 0
    %p284 = por %p282, %p283
    %p285 = scmp.le.s32.totalorder 1, %s16
    %p286 = scmp.lt.s32.totalorder %s16, 5
    %p287 = pnand %p285, %p286
    %p288 = pneg %p287
    // Predicated region
    $region9: #{bottleneck_forward.1} parent=5 // pred_check
      _
    $region10: #{bottleneck_forward.1} parent=5 // pred_check_branch
      %290 = sbr.rel (%p287) target = $region12
    $region11: #{bottleneck_forward.1} parent=5 // pred_region
      %s291 = ssub.s32 %s16, 1
      // Predicated region
      $region13: #{bottleneck_forward.1} parent=11 // pred_check
        %p292 = pneg %p79
      $region14: #{bottleneck_forward.1} parent=11 // pred_check_branch
        %294 = sbr.rel (%p292) target = $region16
      $region15: #{bottleneck_forward.1} parent=11 // pred_region
        _
      $region16: #{bottleneck_forward.1} parent=11 // pred_fallthru
        _
      // Predicated region
      $region17: #{bottleneck_forward.1} parent=11 // pred_check
        %p295 = pneg %p100
      $region18: #{bottleneck_forward.1} parent=11 // pred_check_branch
        %297 = sbr.rel (%p295) target = $region20
      $region19: #{bottleneck_forward.1} parent=11 // pred_region
        _
      $region20: #{bottleneck_forward.1} parent=11 // pred_fallthru
        _
      // Predicated region
      $region21: #{bottleneck_forward.1} parent=11 // pred_check
        %p298 = pneg %p121
      $region22: #{bottleneck_forward.1} parent=11 // pred_check_branch
        %300 = sbr.rel (%p298) target = $region24
      $region23: #{bottleneck_forward.1} parent=11 // pred_region
        _
      $region24: #{bottleneck_forward.1} parent=11 // pred_fallthru
        _
      // Predicated region
      $region25: #{bottleneck_forward.1} parent=11 // pred_check
        %p301 = pneg %p142
      $region26: #{bottleneck_forward.1} parent=11 // pred_check_branch
        %303 = sbr.rel (%p301) target = $region28
      $region27: #{bottleneck_forward.1} parent=11 // pred_region
        _
      $region28: #{bottleneck_forward.1} parent=11 // pred_fallthru
        _
      // Predicated region
      $region29: #{bottleneck_forward.1} parent=11 // pred_check
        %p304 = pneg %p163
      $region30: #{bottleneck_forward.1} parent=11 // pred_check_branch
        %306 = sbr.rel (%p304) target = $region32
      $region31: #{bottleneck_forward.1} parent=11 // pred_region
        _
      $region32: #{bottleneck_forward.1} parent=11 // pred_fallthru
        _
      // Predicated region
      $region33: #{bottleneck_forward.1} parent=11 // pred_check
        %p307 = pneg %p184
      $region34: #{bottleneck_forward.1} parent=11 // pred_check_branch
        %309 = sbr.rel (%p307) target = $region36
      $region35: #{bottleneck_forward.1} parent=11 // pred_region
        _
      $region36: #{bottleneck_forward.1} parent=11 // pred_fallthru
        _
      // Predicated region
      $region37: #{bottleneck_forward.1} parent=11 // pred_check
        %p310 = pneg %p205
      $region38: #{bottleneck_forward.1} parent=11 // pred_check_branch
        %312 = sbr.rel (%p310) target = $region40
      $region39: #{bottleneck_forward.1} parent=11 // pred_region
        _
      $region40: #{bottleneck_forward.1} parent=11 // pred_fallthru
        _
      // Predicated region
      $region41: #{bottleneck_forward.1} parent=11 // pred_check
        %p313 = pneg %p226
      $region42: #{bottleneck_forward.1} parent=11 // pred_check_branch
        %315 = sbr.rel (%p313) target = $region44
      $region43: #{bottleneck_forward.1} parent=11 // pred_region
        _
      $region44: #{bottleneck_forward.1} parent=11 // pred_fallthru
        _
      // Predicated region
      $region45: #{bottleneck_forward.1} parent=11 // pred_check
        %p316 = pneg %p247
      $region46: #{bottleneck_forward.1} parent=11 // pred_check_branch
        %318 = sbr.rel (%p316) target = $region48
      $region47: #{bottleneck_forward.1} parent=11 // pred_region
        _
      $region48: #{bottleneck_forward.1} parent=11 // pred_fallthru
        _
    $region12: #{bottleneck_forward.1} parent=5 // pred_fallthru
      _
    %p319 = scmp.lt.s32.totalorder %s16, 4
    // Predicated region
    $region49: #{bottleneck_forward.1} parent=5 // pred_check
      %p320 = pneg %p319
    $region50: #{bottleneck_forward.1} parent=5 // pred_check_branch
      %322 = sbr.rel (%p320) target = $region52
    $region51: #{bottleneck_forward.1} parent=5 // pred_region
      // Predicated region
      $region53: #{bottleneck_forward.1} parent=51 // pred_check
        %p323 = pneg %p52
      $region54: #{bottleneck_forward.1} parent=51 // pred_check_branch
        %325 = sbr.rel (%p323) target = $region56
      $region55: #{bottleneck_forward.1} parent=51 // pred_region
        %s326 = smul.u32 %s23, 2
        %s327 = sadd.s32 %s326, %s24
        %p328 = scmp.lt.s32.totalorder %s327, 3
        %s329 = scalar_select %p328, %s327, 3
        %s330 = smul.addr %s329, 20
        %s331 = smul.addr %s330, 8
        %s332 = scalar_lea.vmem %s0, %s331
        %s333 = smul.u32 %s23, 2
        %s334 = sadd.s32 %s333, %s24
      $region56: #{bottleneck_forward.1} parent=51 // pred_fallthru
        _
    $region52: #{bottleneck_forward.1} parent=5 // pred_fallthru
      _
    %p335 = scmp.le.s32.totalorder 1, %s16
    %p336 = scmp.lt.s32.totalorder %s16, 5
    %p337 = pnand %p335, %p336
    %p338 = pneg %p337
    // Predicated region
    $region57: #{bottleneck_forward.1} parent=5 // pred_check
      _
    $region58: #{bottleneck_forward.1} parent=5 // pred_check_branch
      %340 = sbr.rel (%p337) target = $region60
    $region59: #{bottleneck_forward.1} parent=5 // pred_region
      %s341 = ssub.s32 %s16, 1
      %s342 = smul.u32 %s25, 2
      %s343 = sadd.s32 %s342, %s26
      %p344 = scmp.lt.s32.totalorder %s343, 3
      %s345 = scalar_select %p344, %s343, 3
      %s346 = smul.addr %s345, 20
      %s347 = smul.addr %s346, 8
      %s348 = scalar_lea.vmem %s0, %s347
      %p349 = pneg %p58
      %p350 = pneg %p55
      %p351 = pneg %p79
      %p352 = pneg %p76
      %p353 = pneg %p100
      %p354 = pneg %p97
      %p355 = pneg %p121
      %p356 = pneg %p118
      %p357 = pneg %p142
      %p358 = pneg %p139
      %p359 = pneg %p163
      %p360 = pneg %p160
      %p361 = pneg %p184
      %p362 = pneg %p181
      %p363 = pneg %p205
      %p364 = pneg %p202
      %p365 = pneg %p226
      %p366 = pneg %p223
      %p367 = pneg %p247
      %p368 = pneg %p244
      %p369 = pneg %p277
      %p370 = pneg %p274
      %s371 = smul.u32 %s25, 2
      %s372 = sadd.s32 %s371, %s26
      %p373 = scmp.lt.s32.totalorder %s372, 3
      %s374 = scalar_select %p373, %s372, 3
      %s375 = smul.addr %s374, 16
      %s376 = smul.addr %s375, 8
      %s377 = scalar_lea.vmem %s10, %s376
      %s378 = smul.u32 %s25, 2
      %s379 = sadd.s32 %s378, %s26
      %p380 = scmp.lt.s32.totalorder %s379, 3
      %s381 = scalar_select %p380, %s379, 3
      %s382 = smul.addr %s381, 20
      %s383 = smul.addr %s382, 8
      %s384 = scalar_lea.vmem %s0, %s383
      %s385 = smul.u32 %s25, 2
      %s386 = sadd.s32 %s385, %s26
      %s387 = smul.u32 %s25, 2
      %s388 = sadd.s32 %s387, %s26
      %p389 = scmp.lt.s32.totalorder %s388, 3
      %s390 = scalar_select %p389, %s388, 3
      %s391 = smul.addr %s390, 16
      %s392 = smul.addr %s391, 8
      %s393 = scalar_lea.vmem %s10, %s392
      %s394 = smul.u32 %s25, 2
      %s395 = sadd.s32 %s394, %s26
      %v397 = vld [vmem:[%s384] sm:$0xff]
      %v398 = vld [vmem:[%s384 + $0x8] sm:$0xff]
      %v399 = vld [vmem:[%s384 + $0x10] sm:$0xff]
      %v400 = vld [vmem:[%s384 + $0x18] sm:$0xff]
      %v401 = vld [vmem:[%s384 + $0x20] sm:$0xff]
      %v402 = vld [vmem:[%s384 + $0x28] sm:$0xff]
      %v403 = vld [vmem:[%s384 + $0x30] sm:$0xff]
      %v404 = vld [vmem:[%s384 + $0x38] sm:$0xff]
      %v405 = vld [vmem:[%s384 + $0x40] sm:$0xff]
      %v406 = vld [vmem:[%s384 + $0x48] sm:$0xff]
      %v407 = vld [vmem:[%s384 + $0x50] sm:$0xff]
      %v408 = vld [vmem:[%s384 + $0x58] sm:$0xff]
      %v409 = vld [vmem:[%s384 + $0x60] sm:$0xff]
      %v410 = vld [vmem:[%s384 + $0x68] sm:$0xff]
      %v411 = vld [vmem:[%s384 + $0x70] sm:$0xff]
      %v412 = vld [vmem:[%s384 + $0x78] sm:$0xff]
      %v413 = vld [vmem:[%s384 + $0x80] sm:$0xff]
      %v414 = vld [vmem:[%s384 + $0x88] sm:$0xff]
      %v415 = vld [vmem:[%s384 + $0x90] sm:$0xff]
      %v416 = vld [vmem:[%s384 + $0x98] sm:$0xff]
      %v417 = vpack.c.bf16 %v398, %v397
      %v418 = vpack.c.bf16 %v400, %v399
      %v419 = vpack.c.bf16 %v402, %v401
      %v420 = vpack.c.bf16 %v404, %v403
      %v421 = vpack.c.bf16 %v406, %v405
      %v422 = vpack.c.bf16 %v408, %v407
      %v423 = vpack.c.bf16 %v410, %v409
      %v424 = vpack.c.bf16 %v412, %v411
      %v425 = vpack.c.bf16 %v414, %v413
      %v426 = vpack.c.bf16 %v416, %v415
      %v427 = vld [vmem:[%s1] sm:$0xf]
      %v428 = vld [vmem:[%s1 + $0x4] sm:$0xf]
      %v429 = vld [vmem:[%s1 + $0x8] sm:$0xf]
      %v430 = vld [vmem:[%s1 + $0xc] sm:$0xf]
      %v431 = vld [vmem:[%s1 + $0x10] sm:$0xf]
      %v432 = vld [vmem:[%s1 + $0x14] sm:$0xf]
      %v433 = vld [vmem:[%s1 + $0x18] sm:$0xf]
      %v434 = vld [vmem:[%s1 + $0x1c] sm:$0xf]
      %v435 = vld [vmem:[%s1 + $0x20] sm:$0xf]
      %v436 = vld [vmem:[%s1 + $0x24] sm:$0xf]
      %v437 = vld [vmem:[%s1 + $0x28] sm:$0xf]
      %v438 = vld [vmem:[%s1 + $0x2c] sm:$0xf]
      %v439 = vld [vmem:[%s1 + $0x30] sm:$0xf]
      %v440 = vld [vmem:[%s1 + $0x34] sm:$0xf]
      %v441 = vld [vmem:[%s1 + $0x38] sm:$0xf]
      %v442 = vld [vmem:[%s1 + $0x3c] sm:$0xf]
      %v459 = vunpack.c.l.b16 %v427
      %v460 = vunpack.c.l.b16 %v428
      %v461 = vunpack.c.l.b16 %v429
      %v462 = vunpack.c.l.b16 %v430
      %v463 = vunpack.c.l.b16 %v431
      %v464 = vunpack.c.l.b16 %v432
      %v465 = vunpack.c.l.b16 %v433
      %v466 = vunpack.c.l.b16 %v434
      %v467 = vunpack.c.l.b16 %v435
      %v468 = vunpack.c.l.b16 %v436
      %v469 = vunpack.c.l.b16 %v437
      %v470 = vunpack.c.l.b16 %v438
      %v471 = vunpack.c.l.b16 %v439
      %v472 = vunpack.c.l.b16 %v440
      %v473 = vunpack.c.l.b16 %v441
      %v474 = vunpack.c.l.b16 %v442
      %v475 = vpack.c.b16 %v460, %v459
      %v476 = vpack.c.b16 %v462, %v461
      %v477 = vpack.c.b16 %v464, %v463
      %v478 = vpack.c.b16 %v466, %v465
      %v479 = vpack.c.b16 %v468, %v467
      %v480 = vpack.c.b16 %v470, %v469
      %v481 = vpack.c.b16 %v472, %v471
      %v482 = vpack.c.b16 %v474, %v473
      %491 = vmatprep.subr.bf16.mxu0 0
      %492 = vmatpush1.bf16.msra.mxu0 %v475
      %493 = vmatprep.subr.bf16.mxu0 0
      %494 = vmatpush1.bf16.msra.mxu0 %v476
      %495 = vmatprep.subr.bf16.mxu0 0
      %496 = vmatpush1.bf16.msra.mxu0 %v477
      %497 = vmatprep.subr.bf16.mxu0 0
      %498 = vmatpush1.bf16.msra.mxu0 %v478
      %499 = vmatprep.subr.bf16.mxu0 0
      %500 = vmatpush1.bf16.msra.mxu0 %v479
      %501 = vmatprep.subr.bf16.mxu0 0
      %502 = vmatpush1.bf16.msra.mxu0 %v480
      %503 = vmatprep.subr.bf16.mxu0 0
      %504 = vmatpush1.bf16.msra.mxu0 %v481
      %505 = vmatprep.subr.bf16.mxu0 0
      %506 = vmatpush1.bf16.msra.mxu0 %v482
      %507 = vmatprep.subr.bf16.mxu0 0
      %508 = vmatpush1.bf16.msra.mxu0 0
      %509 = vmatprep.subr.bf16.mxu0 0
      %510 = vmatpush1.bf16.msra.mxu0 0
      %511 = vmatprep.subr.bf16.mxu0 0
      %512 = vmatpush1.bf16.msra.mxu0 0
      %513 = vmatprep.subr.bf16.mxu0 0
      %514 = vmatpush1.bf16.msra.mxu0 0
      %515 = vmatprep.subr.bf16.mxu0 0
      %516 = vmatpush1.bf16.msra.mxu0 0
      %517 = vmatprep.subr.bf16.mxu0 0
      %518 = vmatpush1.bf16.msra.mxu0 0
      %519 = vmatprep.subr.bf16.mxu0 0
      %520 = vmatpush1.bf16.msra.mxu0 0
      %521 = vmatprep.subr.bf16.mxu0 0
      %522 = vmatpush1.bf16.msra.mxu0 0
      %523 = vmatprep.mubr.bf16.mxu0 0
      %524 = vmatmul.mubr.bf16.gmra.mrb[0].mxu0 %v417
      %v525 = vpop.f32.mrb[0].mxu0
      %v526 = vadd.f32 0.0, %v525
      %v527 = vpop.f32.mrb[0].mxu0
      %v528 = vpop.f32.mrb[0].mxu0
      %v529 = vadd.f32 0.0, %v528
      %v530 = vpop.f32.mrb[0].mxu0
      %531 = vmatprep.mubr.bf16.mxu0 0
      %532 = vmatmul.mubr.bf16.gmra.mrb[0].mxu0 %v418
      %v533 = vpop.f32.mrb[0].mxu0
      %v534 = vadd.f32 0.0, %v533
      %v535 = vpop.f32.mrb[0].mxu0
      %v536 = vpop.f32.mrb[0].mxu0
      %v537 = vadd.f32 0.0, %v536
      %v538 = vpop.f32.mrb[0].mxu0
      %539 = vmatprep.mubr.bf16.mxu0 0
      %540 = vmatmul.mubr.bf16.gmra.mrb[0].mxu0 %v419
      %v541 = vpop.f32.mrb[0].mxu0
      %v542 = vadd.f32 0.0, %v541
      %v543 = vpop.f32.mrb[0].mxu0
      %v544 = vpop.f32.mrb[0].mxu0
      %v545 = vadd.f32 0.0, %v544
      %v546 = vpop.f32.mrb[0].mxu0
      %547 = vmatprep.mubr.bf16.mxu0 0
      %548 = vmatmul.mubr.bf16.gmra.mrb[0].mxu0 %v420
      %v549 = vpop.f32.mrb[0].mxu0
      %v550 = vadd.f32 0.0, %v549
      %v551 = vpop.f32.mrb[0].mxu0
      %v552 = vpop.f32.mrb[0].mxu0
      %v553 = vadd.f32 0.0, %v552
      %v554 = vpop.f32.mrb[0].mxu0
      %555 = vmatprep.mubr.bf16.mxu0 0
      %556 = vmatmul.mubr.bf16.gmra.mrb[0].mxu0 %v421
      %v557 = vpop.f32.mrb[0].mxu0
      %v558 = vadd.f32 0.0, %v557
      %v559 = vpop.f32.mrb[0].mxu0
      %v560 = vpop.f32.mrb[0].mxu0
      %v561 = vadd.f32 0.0, %v560
      %v562 = vpop.f32.mrb[0].mxu0
      %563 = vmatprep.mubr.bf16.mxu0 0
      %564 = vmatmul.mubr.bf16.gmra.mrb[0].mxu0 %v422
      %v565 = vpop.f32.mrb[0].mxu0
      %v566 = vadd.f32 0.0, %v565
      %v567 = vpop.f32.mrb[0].mxu0
      %v568 = vpop.f32.mrb[0].mxu0
      %v569 = vadd.f32 0.0, %v568
      %v570 = vpop.f32.mrb[0].mxu0
      %571 = vmatprep.mubr.bf16.mxu0 0
      %572 = vmatmul.mubr.bf16.gmra.mrb[0].mxu0 %v423
      %v573 = vpop.f32.mrb[0].mxu0
      %v574 = vadd.f32 0.0, %v573
      %v575 = vpop.f32.mrb[0].mxu0
      %v576 = vpop.f32.mrb[0].mxu0
      %v577 = vadd.f32 0.0, %v576
      %v578 = vpop.f32.mrb[0].mxu0
      %579 = vmatprep.mubr.bf16.mxu0 0
      %580 = vmatmul.mubr.bf16.gmra.mrb[0].mxu0 %v424
      %v581 = vpop.f32.mrb[0].mxu0
      %v582 = vadd.f32 0.0, %v581
      %v583 = vpop.f32.mrb[0].mxu0
      %v584 = vpop.f32.mrb[0].mxu0
      %v585 = vadd.f32 0.0, %v584
      %v586 = vpop.f32.mrb[0].mxu0
      %587 = vmatprep.mubr.bf16.mxu0 0
      %588 = vmatmul.mubr.bf16.gmra.mrb[0].mxu0 %v425
      %v589 = vpop.f32.mrb[0].mxu0
      %v590 = vadd.f32 0.0, %v589
      %v591 = vpop.f32.mrb[0].mxu0
      %v592 = vpop.f32.mrb[0].mxu0
      %v593 = vadd.f32 0.0, %v592
      %v594 = vpop.f32.mrb[0].mxu0
      %595 = vmatprep.mubr.bf16.mxu0 0
      %596 = vmatmul.mubr.bf16.gmra.mrb[0].mxu0 %v426
      %v597 = vpop.f32.mrb[0].mxu0
      %v598 = vadd.f32 0.0, %v597
      %v599 = vpop.f32.mrb[0].mxu0
      %v600 = vpop.f32.mrb[0].mxu0
      %v601 = vadd.f32 0.0, %v600
      %v602 = vpop.f32.mrb[0].mxu0
      %603 = vdwg.mxu0
      %v604 = vld [vmem:[%s2] sm:$0x1]
      %v606 = vlaneseq
      %v607 = vshrl.u32 %v606, 7
      %v608 = vsub.s32 0, %v607
      %v609 = vrot.slane %v604, %v608
      %v611 = vmul.f32 %v526, %v609
      %v612 = vmul.f32 %v529, %v609
      %v613 = vmul.f32 %v534, %v609
      %v614 = vmul.f32 %v537, %v609
      %v615 = vmul.f32 %v542, %v609
      %v616 = vmul.f32 %v545, %v609
      %v617 = vmul.f32 %v550, %v609
      %v618 = vmul.f32 %v553, %v609
      %v619 = vmul.f32 %v558, %v609
      %v620 = vmul.f32 %v561, %v609
      %v621 = vmul.f32 %v566, %v609
      %v622 = vmul.f32 %v569, %v609
      %v623 = vmul.f32 %v574, %v609
      %v624 = vmul.f32 %v577, %v609
      %v625 = vmul.f32 %v582, %v609
      %v626 = vmul.f32 %v585, %v609
      %v627 = vmul.f32 %v590, %v609
      %v628 = vmul.f32 %v593, %v609
      %v629 = vmul.f32 %v598, %v609
      %v630 = vmul.f32 %v601, %v609
      %v631 = vld [vmem:[%s3] sm:$0x1]
      %v633 = vlaneseq
      %v634 = vshrl.u32 %v633, 7
      %v635 = vsub.s32 0, %v634
      %v636 = vrot.slane %v631, %v635
      %v638 = vadd.f32 %v611, %v636
      %v639 = vadd.f32 %v612, %v636
      %v640 = vadd.f32 %v613, %v636
      %v641 = vadd.f32 %v614, %v636
      %v642 = vadd.f32 %v615, %v636
      %v643 = vadd.f32 %v616, %v636
      %v644 = vadd.f32 %v617, %v636
      %v645 = vadd.f32 %v618, %v636
      %v646 = vadd.f32 %v619, %v636
      %v647 = vadd.f32 %v620, %v636
      %v648 = vadd.f32 %v621, %v636
      %v649 = vadd.f32 %v622, %v636
      %v650 = vadd.f32 %v623, %v636
      %v651 = vadd.f32 %v624, %v636
      %v652 = vadd.f32 %v625, %v636
      %v653 = vadd.f32 %v626, %v636
      %v654 = vadd.f32 %v627, %v636
      %v655 = vadd.f32 %v628, %v636
      %v656 = vadd.f32 %v629, %v636
      %v657 = vadd.f32 %v630, %v636
      %v658 = vmax.f32 %v638, 0.0
      %v659 = vmax.f32 %v639, 0.0
      %v660 = vmax.f32 %v640, 0.0
      %v661 = vmax.f32 %v641, 0.0
      %v662 = vmax.f32 %v642, 0.0
      %v663 = vmax.f32 %v643, 0.0
      %v664 = vmax.f32 %v644, 0.0
      %v665 = vmax.f32 %v645, 0.0
      %v666 = vmax.f32 %v646, 0.0
      %v667 = vmax.f32 %v647, 0.0
      %v668 = vmax.f32 %v648, 0.0
      %v669 = vmax.f32 %v649, 0.0
      %v670 = vmax.f32 %v650, 0.0
      %v671 = vmax.f32 %v651, 0.0
      %v672 = vmax.f32 %v652, 0.0
      %v673 = vmax.f32 %v653, 0.0
      %v674 = vmax.f32 %v654, 0.0
      %v675 = vmax.f32 %v655, 0.0
      %v676 = vmax.f32 %v656, 0.0
      %v677 = vmax.f32 %v657, 0.0
      %s678 = smul.u32 %s26, 8
      %v679 = vstv %s678
      %v680 = vadd.s32 %v679, 1
      %v681 = vadd.s32 %v679, 2
      %v682 = vadd.s32 %v679, 3
      %v683 = vadd.s32 %v679, 4
      %v684 = vadd.s32 %v679, 5
      %v685 = vadd.s32 %v679, 6
      %v686 = vadd.s32 %v679, 7
      %v687 = vadd.s32 %v679, 8
      %v688 = vadd.s32 %v679, 9
      %vm689 = vcmp.ge.s32.totalorder %v679, 1
      %vm690 = vcmp.ge.s32.totalorder %v680, 1
      %vm691 = vcmp.ge.s32.totalorder %v681, 1
      %vm692 = vcmp.ge.s32.totalorder %v682, 1
      %vm693 = vcmp.ge.s32.totalorder %v683, 1
      %vm694 = vcmp.ge.s32.totalorder %v684, 1
      %vm695 = vcmp.ge.s32.totalorder %v685, 1
      %vm696 = vcmp.ge.s32.totalorder %v686, 1
      %vm697 = vcmp.ge.s32.totalorder %v687, 1
      %vm698 = vcmp.ge.s32.totalorder %v688, 1
      %vm699 = vcmp.le.s32.totalorder %v679, 16
      %vm700 = vcmp.le.s32.totalorder %v680, 16
      %vm701 = vcmp.le.s32.totalorder %v681, 16
      %vm702 = vcmp.le.s32.totalorder %v682, 16
      %vm703 = vcmp.le.s32.totalorder %v683, 16
      %vm704 = vcmp.le.s32.totalorder %v684, 16
      %vm705 = vcmp.le.s32.totalorder %v685, 16
      %vm706 = vcmp.le.s32.totalorder %v686, 16
      %vm707 = vcmp.le.s32.totalorder %v687, 16
      %vm708 = vcmp.le.s32.totalorder %v688, 16
      %vm709 = vmand %vm689, %vm699
      %vm710 = vmand %vm690, %vm700
      %vm711 = vmand %vm691, %vm701
      %vm712 = vmand %vm692, %vm702
      %vm713 = vmand %vm693, %vm703
      %vm714 = vmand %vm694, %vm704
      %vm715 = vmand %vm695, %vm705
      %vm716 = vmand %vm696, %vm706
      %vm717 = vmand %vm697, %vm707
      %vm718 = vmand %vm698, %vm708
      %v719 = vsel %vm709, 1, 0
      %v720 = vsel %vm710, 1, 0
      %v721 = vsel %vm711, 1, 0
      %v722 = vsel %vm712, 1, 0
      %v723 = vsel %vm713, 1, 0
      %v724 = vsel %vm714, 1, 0
      %v725 = vsel %vm715, 1, 0
      %v726 = vsel %vm716, 1, 0
      %v727 = vsel %vm717, 1, 0
      %v728 = vsel %vm718, 1, 0
      %vm729 = vcmp.eq.s32.totalorder %v719, 1
      %vm730 = vcmp.eq.s32.totalorder %v720, 1
      %vm731 = vcmp.eq.s32.totalorder %v721, 1
      %vm732 = vcmp.eq.s32.totalorder %v722, 1
      %vm733 = vcmp.eq.s32.totalorder %v723, 1
      %vm734 = vcmp.eq.s32.totalorder %v724, 1
      %vm735 = vcmp.eq.s32.totalorder %v725, 1
      %vm736 = vcmp.eq.s32.totalorder %v726, 1
      %vm737 = vcmp.eq.s32.totalorder %v727, 1
      %vm738 = vcmp.eq.s32.totalorder %v728, 1
      %v739 = vsel %vm729, %v658, 0.0
      %v740 = vsel %vm729, %v659, 0.0
      %v741 = vsel %vm730, %v660, 0.0
      %v742 = vsel %vm730, %v661, 0.0
      %v743 = vsel %vm731, %v662, 0.0
      %v744 = vsel %vm731, %v663, 0.0
      %v745 = vsel %vm732, %v664, 0.0
      %v746 = vsel %vm732, %v665, 0.0
      %v747 = vsel %vm733, %v666, 0.0
      %v748 = vsel %vm733, %v667, 0.0
      %v749 = vsel %vm734, %v668, 0.0
      %v750 = vsel %vm734, %v669, 0.0
      %v751 = vsel %vm735, %v670, 0.0
      %v752 = vsel %vm735, %v671, 0.0
      %v753 = vsel %vm736, %v672, 0.0
      %v754 = vsel %vm736, %v673, 0.0
      %v755 = vsel %vm737, %v674, 0.0
      %v756 = vsel %vm737, %v675, 0.0
      %v757 = vsel %vm738, %v676, 0.0
      %v758 = vsel %vm738, %v677, 0.0
      %vm759 = vcmask 1040384
      %vm760 = vsmask.f32 256
      %vm761 = vmand %vm759, %vm760
      %v762 = vld [vmem:[#allocation2] sm:$0x1]
      %v763 = vsel %vm761, 0, %v762
      %764 = vst [vmem:[#allocation2] sm:$0x1] %v763
      %v765 = vld [vmem:[#allocation2 + $0xc] sm:$0x1]
      %v766 = vsel %vm761, 0, %v765
      %767 = vst [vmem:[#allocation2 + $0xc] sm:$0x1] %v766
      %v768 = vld [vmem:[#allocation2 + $0x18] sm:$0x1]
      %v769 = vsel %vm761, 0, %v768
      %770 = vst [vmem:[#allocation2 + $0x18] sm:$0x1] %v769
      %v771 = vld [vmem:[#allocation2 + $0x24] sm:$0x1]
      %v772 = vsel %vm761, 0, %v771
      %773 = vst [vmem:[#allocation2 + $0x24] sm:$0x1] %v772
      %v774 = vld [vmem:[#allocation2 + $0x30] sm:$0x1]
      %v775 = vsel %vm761, 0, %v774
      %776 = vst [vmem:[#allocation2 + $0x30] sm:$0x1] %v775
      %v777 = vld [vmem:[#allocation2 + $0x3c] sm:$0x1]
      %v778 = vsel %vm761, 0, %v777
      %779 = vst [vmem:[#allocation2 + $0x3c] sm:$0x1] %v778
      %v780 = vld [vmem:[#allocation2 + $0x48] sm:$0x1]
      %v781 = vsel %vm761, 0, %v780
      %782 = vst [vmem:[#allocation2 + $0x48] sm:$0x1] %v781
      %v783 = vld [vmem:[#allocation2 + $0x54] sm:$0x1]
      %v784 = vsel %vm761, 0, %v783
      %785 = vst [vmem:[#allocation2 + $0x54] sm:$0x1] %v784
      %v786 = vld [vmem:[#allocation2 + $0x60] sm:$0x1]
      %v787 = vsel %vm761, 0, %v786
      %788 = vst [vmem:[#allocation2 + $0x60] sm:$0x1] %v787
      %v789 = vld [vmem:[#allocation2 + $0x6c] sm:$0x1]
      %v790 = vsel %vm761, 0, %v789
      %791 = vst [vmem:[#allocation2 + $0x6c] sm:$0x1] %v790
      %vm792 = vsmask.f32 7938
      %vm793 = vmand %vm759, %vm792
      %v794 = vld [vmem:[#allocation2 + $0x8] sm:$0x1]
      %v795 = vsel %vm793, 0, %v794
      %796 = vst [vmem:[#allocation2 + $0x8] sm:$0x1] %v795
      %v797 = vld [vmem:[#allocation2 + $0x14] sm:$0x1]
      %v798 = vsel %vm793, 0, %v797
      %799 = vst [vmem:[#allocation2 + $0x14] sm:$0x1] %v798
      %v800 = vld [vmem:[#allocation2 + $0x20] sm:$0x1]
      %v801 = vsel %vm793, 0, %v800
      %802 = vst [vmem:[#allocation2 + $0x20] sm:$0x1] %v801
      %v803 = vld [vmem:[#allocation2 + $0x2c] sm:$0x1]
      %v804 = vsel %vm793, 0, %v803
      %805 = vst [vmem:[#allocation2 + $0x2c] sm:$0x1] %v804
      %v806 = vld [vmem:[#allocation2 + $0x38] sm:$0x1]
      %v807 = vsel %vm793, 0, %v806
      %808 = vst [vmem:[#allocation2 + $0x38] sm:$0x1] %v807
      %v809 = vld [vmem:[#allocation2 + $0x44] sm:$0x1]
      %v810 = vsel %vm793, 0, %v809
      %811 = vst [vmem:[#allocation2 + $0x44] sm:$0x1] %v810
      %v812 = vld [vmem:[#allocation2 + $0x50] sm:$0x1]
      %v813 = vsel %vm793, 0, %v812
      %814 = vst [vmem:[#allocation2 + $0x50] sm:$0x1] %v813
      %v815 = vld [vmem:[#allocation2 + $0x5c] sm:$0x1]
      %v816 = vsel %vm793, 0, %v815
      %817 = vst [vmem:[#allocation2 + $0x5c] sm:$0x1] %v816
      %v818 = vld [vmem:[#allocation2 + $0x68] sm:$0x1]
      %v819 = vsel %vm793, 0, %v818
      %820 = vst [vmem:[#allocation2 + $0x68] sm:$0x1] %v819
      %v821 = vld [vmem:[#allocation2 + $0x74] sm:$0x1]
      %v822 = vsel %vm793, 0, %v821
      %823 = vst [vmem:[#allocation2 + $0x74] sm:$0x1] %v822
      %v824 = vpack.c.bf16 %v740, %v739
      %v825 = vpack.c.bf16 %v742, %v741
      %v826 = vpack.c.bf16 %v744, %v743
      %v827 = vpack.c.bf16 %v746, %v745
      %v828 = vpack.c.bf16 %v748, %v747
      %v829 = vpack.c.bf16 %v750, %v749
      %v830 = vpack.c.bf16 %v752, %v751
      %v831 = vpack.c.bf16 %v754, %v753
      %v832 = vpack.c.bf16 %v756, %v755
      %v833 = vpack.c.bf16 %v758, %v757
      %v844 = vunpack.c.l.b16 %v824
      %v845 = vunpack.c.h.b16 %v824
      %v846 = vunpack.c.l.b16 %v825
      %v847 = vunpack.c.h.b16 %v825
      %v848 = vunpack.c.l.b16 %v826
      %v849 = vunpack.c.h.b16 %v826
      %v850 = vunpack.c.l.b16 %v827
      %v851 = vunpack.c.h.b16 %v827
      %v852 = vunpack.c.l.b16 %v828
      %v853 = vunpack.c.h.b16 %v828
      %v854 = vunpack.c.l.b16 %v829
      %v855 = vunpack.c.h.b16 %v829
      %v856 = vunpack.c.l.b16 %v830
      %v857 = vunpack.c.h.b16 %v830
      %v858 = vunpack.c.l.b16 %v831
      %v859 = vunpack.c.h.b16 %v831
      %v860 = vunpack.c.l.b16 %v832
      %v861 = vunpack.c.h.b16 %v832
      %v862 = vunpack.c.l.b16 %v833
      %v863 = vunpack.c.h.b16 %v833
      %v864 = vpack.c.b16 %v844, %v844
      %v865 = vpack.c.b16 %v845, %v845
      %v866 = vpack.c.b16 %v846, %v846
      %v867 = vpack.c.b16 %v847, %v847
      %v868 = vpack.c.b16 %v848, %v848
      %v869 = vpack.c.b16 %v849, %v849
      %v870 = vpack.c.b16 %v850, %v850
      %v871 = vpack.c.b16 %v851, %v851
      %v872 = vpack.c.b16 %v852, %v852
      %v873 = vpack.c.b16 %v853, %v853
      %v874 = vpack.c.b16 %v854, %v854
      %v875 = vpack.c.b16 %v855, %v855
      %v876 = vpack.c.b16 %v856, %v856
      %v877 = vpack.c.b16 %v857, %v857
      %v878 = vpack.c.b16 %v858, %v858
      %v879 = vpack.c.b16 %v859, %v859
      %v880 = vpack.c.b16 %v860, %v860
      %v881 = vpack.c.b16 %v861, %v861
      %v882 = vpack.c.b16 %v862, %v862
      %v883 = vpack.c.b16 %v863, %v863
      %vm884 = vsmask.f32 4368
      %vm885 = vmor %vm760, %vm884
      %v887 = vshrl.u32 %v864, 16
      %v889 = vrot.slane %v887, 7
      %v890 = vshll.u32 %v864, 16
      %v892 = vor.u32 %v889, %v890
      %v893 = vrot.slane %v889, 4
      %v895 = vshrl.u32 %v865, 16
      %v897 = vrot.slane %v895, 7
      %v898 = vshll.u32 %v865, 16
      %v900 = vor.u32 %v897, %v898
      %v901 = vsel %vm885, %v893, %v900
      %v902 = vrot.slane %v897, 4
      %v904 = vshrl.u32 %v866, 16
      %v906 = vrot.slane %v904, 7
      %v907 = vshll.u32 %v866, 16
      %v909 = vor.u32 %v906, %v907
      %v910 = vrot.slane %v906, 4
      %v912 = vshrl.u32 %v867, 16
      %v914 = vrot.slane %v912, 7
      %v915 = vshll.u32 %v867, 16
      %v917 = vor.u32 %v914, %v915
      %v918 = vsel %vm885, %v910, %v917
      %v919 = vrot.slane %v914, 4
      %v921 = vshrl.u32 %v868, 16
      %v923 = vrot.slane %v921, 7
      %v924 = vshll.u32 %v868, 16
      %v926 = vor.u32 %v923, %v924
      %v927 = vrot.slane %v923, 4
      %v929 = vshrl.u32 %v869, 16
      %v931 = vrot.slane %v929, 7
      %v932 = vshll.u32 %v869, 16
      %v934 = vor.u32 %v931, %v932
      %v935 = vsel %vm885, %v927, %v934
      %v936 = vrot.slane %v931, 4
      %v938 = vshrl.u32 %v870, 16
      %v940 = vrot.slane %v938, 7
      %v941 = vshll.u32 %v870, 16
      %v943 = vor.u32 %v940, %v941
      %v944 = vrot.slane %v940, 4
      %v946 = vshrl.u32 %v871, 16
      %v948 = vrot.slane %v946, 7
      %v949 = vshll.u32 %v871, 16
      %v951 = vor.u32 %v948, %v949
      %v952 = vsel %vm885, %v944, %v951
      %v953 = vrot.slane %v948, 4
      %v955 = vshrl.u32 %v872, 16
      %v957 = vrot.slane %v955, 7
      %v958 = vshll.u32 %v872, 16
      %v960 = vor.u32 %v957, %v958
      %v961 = vrot.slane %v957, 4
      %v963 = vshrl.u32 %v873, 16
      %v965 = vrot.slane %v963, 7
      %v966 = vshll.u32 %v873, 16
      %v968 = vor.u32 %v965, %v966
      %v969 = vsel %vm885, %v961, %v968
      %v970 = vrot.slane %v965, 4
      %v972 = vshrl.u32 %v874, 16
      %v974 = vrot.slane %v972, 7
      %v975 = vshll.u32 %v874, 16
      %v977 = vor.u32 %v974, %v975
      %v978 = vrot.slane %v974, 4
      %v980 = vshrl.u32 %v875, 16
      %v982 = vrot.slane %v980, 7
      %v983 = vshll.u32 %v875, 16
      %v985 = vor.u32 %v982, %v983
      %v986 = vsel %vm885, %v978, %v985
      %v987 = vrot.slane %v982, 4
      %v989 = vshrl.u32 %v876, 16
      %v991 = vrot.slane %v989, 7
      %v992 = vshll.u32 %v876, 16
      %v994 = vor.u32 %v991, %v992
      %v995 = vrot.slane %v991, 4
      %v997 = vshrl.u32 %v877, 16
      %v999 = vrot.slane %v997, 7
      %v1000 = vshll.u32 %v877, 16
      %v1002 = vor.u32 %v999, %v1000
      %v1003 = vsel %vm885, %v995, %v1002
      %v1004 = vrot.slane %v999, 4
      %v1006 = vshrl.u32 %v878, 16
      %v1008 = vrot.slane %v1006, 7
      %v1009 = vshll.u32 %v878, 16
      %v1011 = vor.u32 %v1008, %v1009
      %v1012 = vrot.slane %v1008, 4
      %v1014 = vshrl.u32 %v879, 16
      %v1016 = vrot.slane %v1014, 7
      %v1017 = vshll.u32 %v879, 16
      %v1019 = vor.u32 %v1016, %v1017
      %v1020 = vsel %vm885, %v1012, %v1019
      %v1021 = vrot.slane %v1016, 4
      %v1023 = vshrl.u32 %v880, 16
      %v1025 = vrot.slane %v1023, 7
      %v1026 = vshll.u32 %v880, 16
      %v1028 = vor.u32 %v1025, %v1026
      %v1029 = vrot.slane %v1025, 4
      %v1031 = vshrl.u32 %v881, 16
      %v1033 = vrot.slane %v1031, 7
      %v1034 = vshll.u32 %v881, 16
      %v1036 = vor.u32 %v1033, %v1034
      %v1037 = vsel %vm885, %v1029, %v1036
      %v1038 = vrot.slane %v1033, 4
      %v1040 = vshrl.u32 %v882, 16
      %v1042 = vrot.slane %v1040, 7
      %v1043 = vshll.u32 %v882, 16
      %v1045 = vor.u32 %v1042, %v1043
      %v1046 = vrot.slane %v1042, 4
      %v1048 = vshrl.u32 %v883, 16
      %v1050 = vrot.slane %v1048, 7
      %v1051 = vshll.u32 %v883, 16
      %v1053 = vor.u32 %v1050, %v1051
      %v1054 = vsel %vm885, %v1046, %v1053
      %v1055 = vrot.slane %v1050, 4
      %vm1086 = vcmask 1043456
      %vm1087 = vmand %vm1086, %vm792
      %v1088 = vld [vmem:[#allocation2] sm:$0xf]
      %v1089 = vsel %vm1087, %v892, %v1088
      %1090 = vst [vmem:[#allocation2] sm:$0xf] %v1089
      %1091 = vst [vmem:[#allocation2 + $0x4] sm:$0xf] %v901
      %v1092 = vld [vmem:[#allocation2 + $0x8] sm:$0x1]
      %v1093 = vsel %vm761, %v902, %v1092
      %1094 = vst [vmem:[#allocation2 + $0x8] sm:$0x1] %v1093
      %v1095 = vld [vmem:[#allocation2 + $0xc] sm:$0xf]
      %v1096 = vsel %vm1087, %v909, %v1095
      %1097 = vst [vmem:[#allocation2 + $0xc] sm:$0xf] %v1096
      %1098 = vst [vmem:[#allocation2 + $0x10] sm:$0xf] %v918
      %v1099 = vld [vmem:[#allocation2 + $0x14] sm:$0x1]
      %v1100 = vsel %vm761, %v919, %v1099
      %1101 = vst [vmem:[#allocation2 + $0x14] sm:$0x1] %v1100
      %v1102 = vld [vmem:[#allocation2 + $0x18] sm:$0xf]
      %v1103 = vsel %vm1087, %v926, %v1102
      %1104 = vst [vmem:[#allocation2 + $0x18] sm:$0xf] %v1103
      %1105 = vst [vmem:[#allocation2 + $0x1c] sm:$0xf] %v935
      %v1106 = vld [vmem:[#allocation2 + $0x20] sm:$0x1]
      %v1107 = vsel %vm761, %v936, %v1106
      %1108 = vst [vmem:[#allocation2 + $0x20] sm:$0x1] %v1107
      %v1109 = vld [vmem:[#allocation2 + $0x24] sm:$0xf]
      %v1110 = vsel %vm1087, %v943, %v1109
      %1111 = vst [vmem:[#allocation2 + $0x24] sm:$0xf] %v1110
      %1112 = vst [vmem:[#allocation2 + $0x28] sm:$0xf] %v952
      %v1113 = vld [vmem:[#allocation2 + $0x2c] sm:$0x1]
      %v1114 = vsel %vm761, %v953, %v1113
      %1115 = vst [vmem:[#allocation2 + $0x2c] sm:$0x1] %v1114
      %v1116 = vld [vmem:[#allocation2 + $0x30] sm:$0xf]
      %v1117 = vsel %vm1087, %v960, %v1116
      %1118 = vst [vmem:[#allocation2 + $0x30] sm:$0xf] %v1117
      %1119 = vst [vmem:[#allocation2 + $0x34] sm:$0xf] %v969
      %v1120 = vld [vmem:[#allocation2 + $0x38] sm:$0x1]
      %v1121 = vsel %vm761, %v970, %v1120
      %1122 = vst [vmem:[#allocation2 + $0x38] sm:$0x1] %v1121
      %v1123 = vld [vmem:[#allocation2 + $0x3c] sm:$0xf]
      %v1124 = vsel %vm1087, %v977, %v1123
      %1125 = vst [vmem:[#allocation2 + $0x3c] sm:$0xf] %v1124
      %1126 = vst [vmem:[#allocation2 + $0x40] sm:$0xf] %v986
      %v1127 = vld [vmem:[#allocation2 + $0x44] sm:$0x1]
      %v1128 = vsel %vm761, %v987, %v1127
      %1129 = vst [vmem:[#allocation2 + $0x44] sm:$0x1] %v1128
      %v1130 = vld [vmem:[#allocation2 + $0x48] sm:$0xf]
      %v1131 = vsel %vm1087, %v994, %v1130
      %1132 = vst [vmem:[#allocation2 + $0x48] sm:$0xf] %v1131
      %1133 = vst [vmem:[#allocation2 + $0x4c] sm:$0xf] %v1003
      %v1134 = vld [vmem:[#allocation2 + $0x50] sm:$0x1]
      %v1135 = vsel %vm761, %v1004, %v1134
      %1136 = vst [vmem:[#allocation2 + $0x50] sm:$0x1] %v1135
      %v1137 = vld [vmem:[#allocation2 + $0x54] sm:$0xf]
      %v1138 = vsel %vm1087, %v1011, %v1137
      %1139 = vst [vmem:[#allocation2 + $0x54] sm:$0xf] %v1138
      %1140 = vst [vmem:[#allocation2 + $0x58] sm:$0xf] %v1020
      %v1141 = vld [vmem:[#allocation2 + $0x5c] sm:$0x1]
      %v1142 = vsel %vm761, %v1021, %v1141
      %1143 = vst [vmem:[#allocation2 + $0x5c] sm:$0x1] %v1142
      %v1144 = vld [vmem:[#allocation2 + $0x60] sm:$0xf]
      %v1145 = vsel %vm1087, %v1028, %v1144
      %1146 = vst [vmem:[#allocation2 + $0x60] sm:$0xf] %v1145
      %1147 = vst [vmem:[#allocation2 + $0x64] sm:$0xf] %v1037
      %v1148 = vld [vmem:[#allocation2 + $0x68] sm:$0x1]
      %v1149 = vsel %vm761, %v1038, %v1148
      %1150 = vst [vmem:[#allocation2 + $0x68] sm:$0x1] %v1149
      %v1151 = vld [vmem:[#allocation2 + $0x6c] sm:$0xf]
      %v1152 = vsel %vm1087, %v1045, %v1151
      %1153 = vst [vmem:[#allocation2 + $0x6c] sm:$0xf] %v1152
      %1154 = vst [vmem:[#allocation2 + $0x70] sm:$0xf] %v1054
      %v1155 = vld [vmem:[#allocation2 + $0x74] sm:$0x1]
      %v1156 = vsel %vm761, %v1055, %v1155
      %1157 = vst [vmem:[#allocation2 + $0x74] sm:$0x1] %v1156
      %v1158 = vld [vmem:[#allocation2] sm:$0xf]
      %v1159 = vld [vmem:[#allocation2 + $0x4] sm:$0xf]
      %v1160 = vld [vmem:[#allocation2 + $0xc] sm:$0xf]
      %v1161 = vld [vmem:[#allocation2 + $0x10] sm:$0xf]
      %v1162 = vld [vmem:[#allocation2 + $0x18] sm:$0xf]
      %v1163 = vld [vmem:[#allocation2 + $0x1c] sm:$0xf]
      %v1164 = vld [vmem:[#allocation2 + $0x24] sm:$0xf]
      %v1165 = vld [vmem:[#allocation2 + $0x28] sm:$0xf]
      %v1166 = vld [vmem:[#allocation2 + $0x30] sm:$0xf]
      %v1167 = vld [vmem:[#allocation2 + $0x34] sm:$0xf]
      %v1168 = vld [vmem:[#allocation2 + $0x3c] sm:$0xf]
      %v1169 = vld [vmem:[#allocation2 + $0x40] sm:$0xf]
      %v1170 = vld [vmem:[#allocation2 + $0x48] sm:$0xf]
      %v1171 = vld [vmem:[#allocation2 + $0x4c] sm:$0xf]
      %v1172 = vld [vmem:[#allocation2 + $0x54] sm:$0xf]
      %v1173 = vld [vmem:[#allocation2 + $0x58] sm:$0xf]
      %v1174 = vld [vmem:[%s4] sm:$0xf]
      %v1175 = vld [vmem:[%s4 + $0x4] sm:$0xf]
      %v1176 = vld [vmem:[%s4 + $0x8] sm:$0xf]
      %v1177 = vld [vmem:[%s4 + $0xc] sm:$0xf]
      %v1178 = vld [vmem:[%s4 + $0x10] sm:$0xf]
      %v1179 = vld [vmem:[%s4 + $0x14] sm:$0xf]
      %v1180 = vld [vmem:[%s4 + $0x18] sm:$0xf]
      %v1181 = vld [vmem:[%s4 + $0x1c] sm:$0xf]
      %v1182 = vld [vmem:[%s4 + $0x20] sm:$0xf]
      %v1183 = vld [vmem:[%s4 + $0x24] sm:$0xf]
      %v1184 = vld [vmem:[%s4 + $0x28] sm:$0xf]
      %v1185 = vld [vmem:[%s4 + $0x2c] sm:$0xf]
      %v1186 = vld [vmem:[%s4 + $0x30] sm:$0xf]
      %v1187 = vld [vmem:[%s4 + $0x34] sm:$0xf]
      %v1188 = vld [vmem:[%s4 + $0x38] sm:$0xf]
      %v1189 = vld [vmem:[%s4 + $0x3c] sm:$0xf]
      %v1190 = vld [vmem:[#allocation2 + $0x8] sm:$0x1]
      %v1191 = vld [vmem:[#allocation2 + $0x14] sm:$0x1]
      %v1192 = vld [vmem:[#allocation2 + $0x20] sm:$0x1]
      %v1193 = vld [vmem:[#allocation2 + $0x2c] sm:$0x1]
      %v1194 = vld [vmem:[#allocation2 + $0x38] sm:$0x1]
      %v1195 = vld [vmem:[#allocation2 + $0x44] sm:$0x1]
      %v1196 = vld [vmem:[#allocation2 + $0x50] sm:$0x1]
      %v1197 = vld [vmem:[#allocation2 + $0x5c] sm:$0x1]
      %vm1198 = vsmask.f32 3328
      %vm1199 = vsmask.f32 7440
      %vm1200 = vmor %vm1198, %vm1199
      %v1202 = vshrl.u32 %v1158, 16
      %v1204 = vrot.slane %v1202, 4
      %v1205 = vshll.u32 %v1158, 16
      %v1207 = vrot.slane %v1205, 5
      %v1208 = vor.u32 %v1204, %v1207
      %v1209 = vrot.slane %v1208, 4
      %v1211 = vshll.u32 %v1159, 16
      %v1213 = vrot.slane %v1211, 5
      %v1214 = vsel %vm1200, %v1209, %v1213
      %v1215 = vshrl.u32 %v1159, 16
      %v1217 = vrot.slane %v1215, 4
      %v1218 = vor.u32 %v1217, %v1213
      %v1219 = vrot.slane %v1218, 4
      %v1221 = vshll.u32 %v1190, 16
      %v1223 = vrot.slane %v1221, 5
      %v1224 = vsel %vm1200, %v1219, %v1223
      %v1226 = vshrl.u32 %v1160, 16
      %v1228 = vrot.slane %v1226, 4
      %v1229 = vshll.u32 %v1160, 16
      %v1231 = vrot.slane %v1229, 5
      %v1232 = vor.u32 %v1228, %v1231
      %v1233 = vrot.slane %v1232, 4
      %v1235 = vshll.u32 %v1161, 16
      %v1237 = vrot.slane %v1235, 5
      %v1238 = vsel %vm1200, %v1233, %v1237
      %v1239 = vshrl.u32 %v1161, 16
      %v1241 = vrot.slane %v1239, 4
      %v1242 = vor.u32 %v1241, %v1237
      %v1243 = vrot.slane %v1242, 4
      %v1245 = vshll.u32 %v1191, 16
      %v1247 = vrot.slane %v1245, 5
      %v1248 = vsel %vm1200, %v1243, %v1247
      %v1250 = vshrl.u32 %v1162, 16
      %v1252 = vrot.slane %v1250, 4
      %v1253 = vshll.u32 %v1162, 16
      %v1255 = vrot.slane %v1253, 5
      %v1256 = vor.u32 %v1252, %v1255
      %v1257 = vrot.slane %v1256, 4
      %v1259 = vshll.u32 %v1163, 16
      %v1261 = vrot.slane %v1259, 5
      %v1262 = vsel %vm1200, %v1257, %v1261
      %v1263 = vshrl.u32 %v1163, 16
      %v1265 = vrot.slane %v1263, 4
      %v1266 = vor.u32 %v1265, %v1261
      %v1267 = vrot.slane %v1266, 4
      %v1269 = vshll.u32 %v1192, 16
      %v1271 = vrot.slane %v1269, 5
      %v1272 = vsel %vm1200, %v1267, %v1271
      %v1274 = vshrl.u32 %v1164, 16
      %v1276 = vrot.slane %v1274, 4
      %v1277 = vshll.u32 %v1164, 16
      %v1279 = vrot.slane %v1277, 5
      %v1280 = vor.u32 %v1276, %v1279
      %v1281 = vrot.slane %v1280, 4
      %v1283 = vshll.u32 %v1165, 16
      %v1285 = vrot.slane %v1283, 5
      %v1286 = vsel %vm1200, %v1281, %v1285
      %v1287 = vshrl.u32 %v1165, 16
      %v1289 = vrot.slane %v1287, 4
      %v1290 = vor.u32 %v1289, %v1285
      %v1291 = vrot.slane %v1290, 4
      %v1293 = vshll.u32 %v1193, 16
      %v1295 = vrot.slane %v1293, 5
      %v1296 = vsel %vm1200, %v1291, %v1295
      %v1298 = vshrl.u32 %v1166, 16
      %v1300 = vrot.slane %v1298, 4
      %v1301 = vshll.u32 %v1166, 16
      %v1303 = vrot.slane %v1301, 5
      %v1304 = vor.u32 %v1300, %v1303
      %v1305 = vrot.slane %v1304, 4
      %v1307 = vshll.u32 %v1167, 16
      %v1309 = vrot.slane %v1307, 5
      %v1310 = vsel %vm1200, %v1305, %v1309
      %v1311 = vshrl.u32 %v1167, 16
      %v1313 = vrot.slane %v1311, 4
      %v1314 = vor.u32 %v1313, %v1309
      %v1315 = vrot.slane %v1314, 4
      %v1317 = vshll.u32 %v1194, 16
      %v1319 = vrot.slane %v1317, 5
      %v1320 = vsel %vm1200, %v1315, %v1319
      %v1322 = vshrl.u32 %v1168, 16
      %v1324 = vrot.slane %v1322, 4
      %v1325 = vshll.u32 %v1168, 16
      %v1327 = vrot.slane %v1325, 5
      %v1328 = vor.u32 %v1324, %v1327
      %v1329 = vrot.slane %v1328, 4
      %v1331 = vshll.u32 %v1169, 16
      %v1333 = vrot.slane %v1331, 5
      %v1334 = vsel %vm1200, %v1329, %v1333
      %v1335 = vshrl.u32 %v1169, 16
      %v1337 = vrot.slane %v1335, 4
      %v1338 = vor.u32 %v1337, %v1333
      %v1339 = vrot.slane %v1338, 4
      %v1341 = vshll.u32 %v1195, 16
      %v1343 = vrot.slane %v1341, 5
      %v1344 = vsel %vm1200, %v1339, %v1343
      %v1346 = vshrl.u32 %v1170, 16
      %v1348 = vrot.slane %v1346, 4
      %v1349 = vshll.u32 %v1170, 16
      %v1351 = vrot.slane %v1349, 5
      %v1352 = vor.u32 %v1348, %v1351
      %v1353 = vrot.slane %v1352, 4
      %v1355 = vshll.u32 %v1171, 16
      %v1357 = vrot.slane %v1355, 5
      %v1358 = vsel %vm1200, %v1353, %v1357
      %v1359 = vshrl.u32 %v1171, 16
      %v1361 = vrot.slane %v1359, 4
      %v1362 = vor.u32 %v1361, %v1357
      %v1363 = vrot.slane %v1362, 4
      %v1365 = vshll.u32 %v1196, 16
      %v1367 = vrot.slane %v1365, 5
      %v1368 = vsel %vm1200, %v1363, %v1367
      %v1370 = vshrl.u32 %v1172, 16
      %v1372 = vrot.slane %v1370, 4
      %v1373 = vshll.u32 %v1172, 16
      %v1375 = vrot.slane %v1373, 5
      %v1376 = vor.u32 %v1372, %v1375
      %v1377 = vrot.slane %v1376, 4
      %v1379 = vshll.u32 %v1173, 16
      %v1381 = vrot.slane %v1379, 5
      %v1382 = vsel %vm1200, %v1377, %v1381
      %v1383 = vshrl.u32 %v1173, 16
      %v1385 = vrot.slane %v1383, 4
      %v1386 = vor.u32 %v1385, %v1381
      %v1387 = vrot.slane %v1386, 4
      %v1389 = vshll.u32 %v1197, 16
      %v1391 = vrot.slane %v1389, 5
      %v1392 = vsel %vm1200, %v1387, %v1391
      %s1393 = scalar_lea.vmem %s4, 64
      %v1394 = vld [vmem:[%s1393] sm:$0xf]
      %v1395 = vld [vmem:[%s1393 + $0x4] sm:$0xf]
      %v1396 = vld [vmem:[%s1393 + $0x8] sm:$0xf]
      %v1397 = vld [vmem:[%s1393 + $0xc] sm:$0xf]
      %v1398 = vld [vmem:[%s1393 + $0x10] sm:$0xf]
      %v1399 = vld [vmem:[%s1393 + $0x14] sm:$0xf]
      %v1400 = vld [vmem:[%s1393 + $0x18] sm:$0xf]
      %v1401 = vld [vmem:[%s1393 + $0x1c] sm:$0xf]
      %v1402 = vld [vmem:[%s1393 + $0x20] sm:$0xf]
      %v1403 = vld [vmem:[%s1393 + $0x24] sm:$0xf]
      %v1404 = vld [vmem:[%s1393 + $0x28] sm:$0xf]
      %v1405 = vld [vmem:[%s1393 + $0x2c] sm:$0xf]
      %v1406 = vld [vmem:[%s1393 + $0x30] sm:$0xf]
      %v1407 = vld [vmem:[%s1393 + $0x34] sm:$0xf]
      %v1408 = vld [vmem:[%s1393 + $0x38] sm:$0xf]
      %v1409 = vld [vmem:[%s1393 + $0x3c] sm:$0xf]
      %v1410 = vunpack.c.l.b16 %v1214
      %v1411 = vunpack.c.l.b16 %v1224
      %v1412 = vunpack.c.l.b16 %v1238
      %v1413 = vunpack.c.l.b16 %v1248
      %v1414 = vunpack.c.l.b16 %v1262
      %v1415 = vunpack.c.l.b16 %v1272
      %v1416 = vunpack.c.l.b16 %v1286
      %v1417 = vunpack.c.l.b16 %v1296
      %v1418 = vunpack.c.l.b16 %v1310
      %v1419 = vunpack.c.l.b16 %v1320
      %v1420 = vunpack.c.l.b16 %v1334
      %v1421 = vunpack.c.l.b16 %v1344
      %v1422 = vunpack.c.l.b16 %v1358
      %v1423 = vunpack.c.l.b16 %v1368
      %v1424 = vunpack.c.l.b16 %v1382
      %v1425 = vunpack.c.l.b16 %v1392
      %v1426 = vpack.c.b16 %v1411, %v1410
      %v1427 = vpack.c.b16 %v1413, %v1412
      %v1428 = vpack.c.b16 %v1415, %v1414
      %v1429 = vpack.c.b16 %v1417, %v1416
      %v1430 = vpack.c.b16 %v1419, %v1418
      %v1431 = vpack.c.b16 %v1421, %v1420
      %v1432 = vpack.c.b16 %v1423, %v1422
      %v1433 = vpack.c.b16 %v1425, %v1424
      %v1458 = vunpack.c.l.b16 %v1394
      %v1459 = vunpack.c.l.b16 %v1395
      %v1460 = vunpack.c.l.b16 %v1396
      %v1461 = vunpack.c.l.b16 %v1397
      %v1462 = vunpack.c.l.b16 %v1398
      %v1463 = vunpack.c.l.b16 %v1399
      %v1464 = vunpack.c.l.b16 %v1400
      %v1465 = vunpack.c.l.b16 %v1401
      %v1466 = vunpack.c.l.b16 %v1402
      %v1467 = vunpack.c.l.b16 %v1403
      %v1468 = vunpack.c.l.b16 %v1404
      %v1469 = vunpack.c.l.b16 %v1405
      %v1470 = vunpack.c.l.b16 %v1406
      %v1471 = vunpack.c.l.b16 %v1407
      %v1472 = vunpack.c.l.b16 %v1408
      %v1473 = vunpack.c.l.b16 %v1409
      %v1474 = vpack.c.b16 %v1459, %v1458
      %v1475 = vpack.c.b16 %v1461, %v1460
      %v1476 = vpack.c.b16 %v1463, %v1462
      %v1477 = vpack.c.b16 %v1465, %v1464
      %v1478 = vpack.c.b16 %v1467, %v1466
      %v1479 = vpack.c.b16 %v1469, %v1468
      %v1480 = vpack.c.b16 %v1471, %v1470
      %v1481 = vpack.c.b16 %v1473, %v1472
      %1490 = vmatprep.subr.bf16.mxu0 0
      %1491 = vmatpush1.bf16.msra.mxu0 %v1474
      %1492 = vmatprep.subr.bf16.mxu0 0
      %1493 = vmatpush1.bf16.msra.mxu0 %v1475
      %1494 = vmatprep.subr.bf16.mxu0 0
      %1495 = vmatpush1.bf16.msra.mxu0 %v1476
      %1496 = vmatprep.subr.bf16.mxu0 0
      %1497 = vmatpush1.bf16.msra.mxu0 %v1477
      %1498 = vmatprep.subr.bf16.mxu0 0
      %1499 = vmatpush1.bf16.msra.mxu0 %v1478
      %1500 = vmatprep.subr.bf16.mxu0 0
      %1501 = vmatpush1.bf16.msra.mxu0 %v1479
      %1502 = vmatprep.subr.bf16.mxu0 0
      %1503 = vmatpush1.bf16.msra.mxu0 %v1480
      %1504 = vmatprep.subr.bf16.mxu0 0
      %1505 = vmatpush1.bf16.msra.mxu0 %v1481
      %1506 = vmatprep.subr.bf16.mxu0 0
      %1507 = vmatpush1.bf16.msra.mxu0 0
      %1508 = vmatprep.subr.bf16.mxu0 0
      %1509 = vmatpush1.bf16.msra.mxu0 0
      %1510 = vmatprep.subr.bf16.mxu0 0
      %1511 = vmatpush1.bf16.msra.mxu0 0
      %1512 = vmatprep.subr.bf16.mxu0 0
      %1513 = vmatpush1.bf16.msra.mxu0 0
      %1514 = vmatprep.subr.bf16.mxu0 0
      %1515 = vmatpush1.bf16.msra.mxu0 0
      %1516 = vmatprep.subr.bf16.mxu0 0
      %1517 = vmatpush1.bf16.msra.mxu0 0
      %1518 = vmatprep.subr.bf16.mxu0 0
      %1519 = vmatpush1.bf16.msra.mxu0 0
      %1520 = vmatprep.subr.bf16.mxu0 0
      %1521 = vmatpush1.bf16.msra.mxu0 0
      %1522 = vmatprep.mubr.bf16.mxu0 0
      %1523 = vmatmul.mubr.bf16.gmra.mrb[0].mxu0 %v1426
      %v1524 = vpop.f32.mrb[0].mxu0
      %v1525 = vadd.f32 0.0, %v1524
      %v1526 = vpop.f32.mrb[0].mxu0
      %v1527 = vpop.f32.mrb[0].mxu0
      %v1528 = vadd.f32 0.0, %v1527
      %v1529 = vpop.f32.mrb[0].mxu0
      %1530 = vmatprep.mubr.bf16.mxu0 0
      %1531 = vmatmul.mubr.bf16.gmra.mrb[0].mxu0 %v1427
      %v1532 = vpop.f32.mrb[0].mxu0
      %v1533 = vadd.f32 0.0, %v1532
      %v1534 = vpop.f32.mrb[0].mxu0
      %v1535 = vpop.f32.mrb[0].mxu0
      %v1536 = vadd.f32 0.0, %v1535
      %v1537 = vpop.f32.mrb[0].mxu0
      %1538 = vmatprep.mubr.bf16.mxu0 0
      %1539 = vmatmul.mubr.bf16.gmra.mrb[0].mxu0 %v1428
      %v1540 = vpop.f32.mrb[0].mxu0
      %v1541 = vadd.f32 0.0, %v1540
      %v1542 = vpop.f32.mrb[0].mxu0
      %v1543 = vpop.f32.mrb[0].mxu0
      %v1544 = vadd.f32 0.0, %v1543
      %v1545 = vpop.f32.mrb[0].mxu0
      %1546 = vmatprep.mubr.bf16.mxu0 0
      %1547 = vmatmul.mubr.bf16.gmra.mrb[0].mxu0 %v1429
      %v1548 = vpop.f32.mrb[0].mxu0
      %v1549 = vadd.f32 0.0, %v1548
      %v1550 = vpop.f32.mrb[0].mxu0
      %v1551 = vpop.f32.mrb[0].mxu0
      %v1552 = vadd.f32 0.0, %v1551
      %v1553 = vpop.f32.mrb[0].mxu0
      %1554 = vmatprep.mubr.bf16.mxu0 0
      %1555 = vmatmul.mubr.bf16.gmra.mrb[0].mxu0 %v1430
      %v1556 = vpop.f32.mrb[0].mxu0
      %v1557 = vadd.f32 0.0, %v1556
      %v1558 = vpop.f32.mrb[0].mxu0
      %v1559 = vpop.f32.mrb[0].mxu0
      %v1560 = vadd.f32 0.0, %v1559
      %v1561 = vpop.f32.mrb[0].mxu0
      %1562 = vmatprep.mubr.bf16.mxu0 0
      %1563 = vmatmul.mubr.bf16.gmra.mrb[0].mxu0 %v1431
      %v1564 = vpop.f32.mrb[0].mxu0
      %v1565 = vadd.f32 0.0, %v1564
      %v1566 = vpop.f32.mrb[0].mxu0
      %v1567 = vpop.f32.mrb[0].mxu0
      %v1568 = vadd.f32 0.0, %v1567
      %v1569 = vpop.f32.mrb[0].mxu0
      %1570 = vmatprep.mubr.bf16.mxu0 0
      %1571 = vmatmul.mubr.bf16.gmra.mrb[0].mxu0 %v1432
      %v1572 = vpop.f32.mrb[0].mxu0
      %v1573 = vadd.f32 0.0, %v1572
      %v1574 = vpop.f32.mrb[0].mxu0
      %v1575 = vpop.f32.mrb[0].mxu0
      %v1576 = vadd.f32 0.0, %v1575
      %v1577 = vpop.f32.mrb[0].mxu0
      %1578 = vmatprep.mubr.bf16.mxu0 0
      %1579 = vmatmul.mubr.bf16.gmra.mrb[0].mxu0 %v1433
      %v1580 = vpop.f32.mrb[0].mxu0
      %v1581 = vadd.f32 0.0, %v1580
      %v1582 = vpop.f32.mrb[0].mxu0
      %v1583 = vpop.f32.mrb[0].mxu0
      %v1584 = vadd.f32 0.0, %v1583
      %v1585 = vpop.f32.mrb[0].mxu0
      %1586 = vdwg.mxu0
      %v1603 = vunpack.c.l.b16 %v1158
      %v1604 = vunpack.c.l.b16 %v1159
      %v1605 = vunpack.c.l.b16 %v1160
      %v1606 = vunpack.c.l.b16 %v1161
      %v1607 = vunpack.c.l.b16 %v1162
      %v1608 = vunpack.c.l.b16 %v1163
      %v1609 = vunpack.c.l.b16 %v1164
      %v1610 = vunpack.c.l.b16 %v1165
      %v1611 = vunpack.c.l.b16 %v1166
      %v1612 = vunpack.c.l.b16 %v1167
      %v1613 = vunpack.c.l.b16 %v1168
      %v1614 = vunpack.c.l.b16 %v1169
      %v1615 = vunpack.c.l.b16 %v1170
      %v1616 = vunpack.c.l.b16 %v1171
      %v1617 = vunpack.c.l.b16 %v1172
      %v1618 = vunpack.c.l.b16 %v1173
      %v1619 = vpack.c.b16 %v1604, %v1603
      %v1620 = vpack.c.b16 %v1606, %v1605
      %v1621 = vpack.c.b16 %v1608, %v1607
      %v1622 = vpack.c.b16 %v1610, %v1609
      %v1623 = vpack.c.b16 %v1612, %v1611
      %v1624 = vpack.c.b16 %v1614, %v1613
      %v1625 = vpack.c.b16 %v1616, %v1615
      %v1626 = vpack.c.b16 %v1618, %v1617
      %v1651 = vunpack.c.l.b16 %v1174
      %v1652 = vunpack.c.l.b16 %v1175
      %v1653 = vunpack.c.l.b16 %v1176
      %v1654 = vunpack.c.l.b16 %v1177
      %v1655 = vunpack.c.l.b16 %v1178
      %v1656 = vunpack.c.l.b16 %v1179
      %v1657 = vunpack.c.l.b16 %v1180
      %v1658 = vunpack.c.l.b16 %v1181
      %v1659 = vunpack.c.l.b16 %v1182
      %v1660 = vunpack.c.l.b16 %v1183
      %v1661 = vunpack.c.l.b16 %v1184
      %v1662 = vunpack.c.l.b16 %v1185
      %v1663 = vunpack.c.l.b16 %v1186
      %v1664 = vunpack.c.l.b16 %v1187
      %v1665 = vunpack.c.l.b16 %v1188
      %v1666 = vunpack.c.l.b16 %v1189
      %v1667 = vpack.c.b16 %v1652, %v1651
      %v1668 = vpack.c.b16 %v1654, %v1653
      %v1669 = vpack.c.b16 %v1656, %v1655
      %v1670 = vpack.c.b16 %v1658, %v1657
      %v1671 = vpack.c.b16 %v1660, %v1659
      %v1672 = vpack.c.b16 %v1662, %v1661
      %v1673 = vpack.c.b16 %v1664, %v1663
      %v1674 = vpack.c.b16 %v1666, %v1665
      %1683 = vmatprep.subr.bf16.mxu0 0
      %1684 = vmatpush1.bf16.msra.mxu0 %v1667
      %1685 = vmatprep.subr.bf16.mxu0 0
      %1686 = vmatpush1.bf16.msra.mxu0 %v1668
      %1687 = vmatprep.subr.bf16.mxu0 0
      %1688 = vmatpush1.bf16.msra.mxu0 %v1669
      %1689 = vmatprep.subr.bf16.mxu0 0
      %1690 = vmatpush1.bf16.msra.mxu0 %v1670
      %1691 = vmatprep.subr.bf16.mxu0 0
      %1692 = vmatpush1.bf16.msra.mxu0 %v1671
      %1693 = vmatprep.subr.bf16.mxu0 0
      %1694 = vmatpush1.bf16.msra.mxu0 %v1672
      %1695 = vmatprep.subr.bf16.mxu0 0
      %1696 = vmatpush1.bf16.msra.mxu0 %v1673
      %1697 = vmatprep.subr.bf16.mxu0 0
      %1698 = vmatpush1.bf16.msra.mxu0 %v1674
      %1699 = vmatprep.subr.bf16.mxu0 0
      %1700 = vmatpush1.bf16.msra.mxu0 0
      %1701 = vmatprep.subr.bf16.mxu0 0
      %1702 = vmatpush1.bf16.msra.mxu0 0
      %1703 = vmatprep.subr.bf16.mxu0 0
      %1704 = vmatpush1.bf16.msra.mxu0 0
      %1705 = vmatprep.subr.bf16.mxu0 0
      %1706 = vmatpush1.bf16.msra.mxu0 0
      %1707 = vmatprep.subr.bf16.mxu0 0
      %1708 = vmatpush1.bf16.msra.mxu0 0
      %1709 = vmatprep.subr.bf16.mxu0 0
      %1710 = vmatpush1.bf16.msra.mxu0 0
      %1711 = vmatprep.subr.bf16.mxu0 0
      %1712 = vmatpush1.bf16.msra.mxu0 0
      %1713 = vmatprep.subr.bf16.mxu0 0
      %1714 = vmatpush1.bf16.msra.mxu0 0
      %1715 = vmatprep.mubr.bf16.mxu0 0
      %1716 = vmatmul.mubr.bf16.gmra.mrb[0].mxu0 %v1619
      %v1717 = vpop.f32.mrb[0].mxu0
      %v1718 = vadd.f32 %v1525, %v1717
      %v1719 = vpop.f32.mrb[0].mxu0
      %v1720 = vpop.f32.mrb[0].mxu0
      %v1721 = vadd.f32 %v1528, %v1720
      %v1722 = vpop.f32.mrb[0].mxu0
      %1723 = vmatprep.mubr.bf16.mxu0 0
      %1724 = vmatmul.mubr.bf16.gmra.mrb[0].mxu0 %v1620
      %v1725 = vpop.f32.mrb[0].mxu0
      %v1726 = vadd.f32 %v1533, %v1725
      %v1727 = vpop.f32.mrb[0].mxu0
      %v1728 = vpop.f32.mrb[0].mxu0
      %v1729 = vadd.f32 %v1536, %v1728
      %v1730 = vpop.f32.mrb[0].mxu0
      %1731 = vmatprep.mubr.bf16.mxu0 0
      %1732 = vmatmul.mubr.bf16.gmra.mrb[0].mxu0 %v1621
      %v1733 = vpop.f32.mrb[0].mxu0
      %v1734 = vadd.f32 %v1541, %v1733
      %v1735 = vpop.f32.mrb[0].mxu0
      %v1736 = vpop.f32.mrb[0].mxu0
      %v1737 = vadd.f32 %v1544, %v1736
      %v1738 = vpop.f32.mrb[0].mxu0
      %1739 = vmatprep.mubr.bf16.mxu0 0
      %1740 = vmatmul.mubr.bf16.gmra.mrb[0].mxu0 %v1622
      %v1741 = vpop.f32.mrb[0].mxu0
      %v1742 = vadd.f32 %v1549, %v1741
      %v1743 = vpop.f32.mrb[0].mxu0
      %v1744 = vpop.f32.mrb[0].mxu0
      %v1745 = vadd.f32 %v1552, %v1744
      %v1746 = vpop.f32.mrb[0].mxu0
      %1747 = vmatprep.mubr.bf16.mxu0 0
      %1748 = vmatmul.mubr.bf16.gmra.mrb[0].mxu0 %v1623
      %v1749 = vpop.f32.mrb[0].mxu0
      %v1750 = vadd.f32 %v1557, %v1749
      %v1751 = vpop.f32.mrb[0].mxu0
      %v1752 = vpop.f32.mrb[0].mxu0
      %v1753 = vadd.f32 %v1560, %v1752
      %v1754 = vpop.f32.mrb[0].mxu0
      %1755 = vmatprep.mubr.bf16.mxu0 0
      %1756 = vmatmul.mubr.bf16.gmra.mrb[0].mxu0 %v1624
      %v1757 = vpop.f32.mrb[0].mxu0
      %v1758 = vadd.f32 %v1565, %v1757
      %v1759 = vpop.f32.mrb[0].mxu0
      %v1760 = vpop.f32.mrb[0].mxu0
      %v1761 = vadd.f32 %v1568, %v1760
      %v1762 = vpop.f32.mrb[0].mxu0
      %1763 = vmatprep.mubr.bf16.mxu0 0
      %1764 = vmatmul.mubr.bf16.gmra.mrb[0].mxu0 %v1625
      %v1765 = vpop.f32.mrb[0].mxu0
      %v1766 = vadd.f32 %v1573, %v1765
      %v1767 = vpop.f32.mrb[0].mxu0
      %v1768 = vpop.f32.mrb[0].mxu0
      %v1769 = vadd.f32 %v1576, %v1768
      %v1770 = vpop.f32.mrb[0].mxu0
      %1771 = vmatprep.mubr.bf16.mxu0 0
      %1772 = vmatmul.mubr.bf16.gmra.mrb[0].mxu0 %v1626
      %v1773 = vpop.f32.mrb[0].mxu0
      %v1774 = vadd.f32 %v1581, %v1773
      %v1775 = vpop.f32.mrb[0].mxu0
      %v1776 = vpop.f32.mrb[0].mxu0
      %v1777 = vadd.f32 %v1584, %v1776
      %v1778 = vpop.f32.mrb[0].mxu0
      %1779 = vdwg.mxu0
      %v1780 = vld [vmem:[#allocation2] sm:$0xe]
      %v1781 = vld [vmem:[#allocation2 + $0xc] sm:$0xe]
      %v1782 = vld [vmem:[#allocation2 + $0x18] sm:$0xe]
      %v1783 = vld [vmem:[#allocation2 + $0x24] sm:$0xe]
      %v1784 = vld [vmem:[#allocation2 + $0x30] sm:$0xe]
      %v1785 = vld [vmem:[#allocation2 + $0x3c] sm:$0xe]
      %v1786 = vld [vmem:[#allocation2 + $0x48] sm:$0xe]
      %v1787 = vld [vmem:[#allocation2 + $0x54] sm:$0xe]
      %vm1804 = vcmask 1042432
      %vm1805 = vcmask 1046532
      %vm1806 = vmor %vm1804, %vm1805
      %v1807 = vrot.slane %v1780, 5
      %v1808 = vrot.slane %v1807, 4
      %v1809 = vrot.slane %v1159, 5
      %v1810 = vsel %vm1806, %v1808, %v1809
      %v1811 = vrot.slane %v1809, 4
      %v1812 = vrot.slane %v1190, 5
      %v1813 = vsel %vm1806, %v1811, %v1812
      %v1814 = vrot.slane %v1781, 5
      %v1815 = vrot.slane %v1814, 4
      %v1816 = vrot.slane %v1161, 5
      %v1817 = vsel %vm1806, %v1815, %v1816
      %v1818 = vrot.slane %v1816, 4
      %v1819 = vrot.slane %v1191, 5
      %v1820 = vsel %vm1806, %v1818, %v1819
      %v1821 = vrot.slane %v1782, 5
      %v1822 = vrot.slane %v1821, 4
      %v1823 = vrot.slane %v1163, 5
      %v1824 = vsel %vm1806, %v1822, %v1823
      %v1825 = vrot.slane %v1823, 4
      %v1826 = vrot.slane %v1192, 5
      %v1827 = vsel %vm1806, %v1825, %v1826
      %v1828 = vrot.slane %v1783, 5
      %v1829 = vrot.slane %v1828, 4
      %v1830 = vrot.slane %v1165, 5
      %v1831 = vsel %vm1806, %v1829, %v1830
      %v1832 = vrot.slane %v1830, 4
      %v1833 = vrot.slane %v1193, 5
      %v1834 = vsel %vm1806, %v1832, %v1833
      %v1835 = vrot.slane %v1784, 5
      %v1836 = vrot.slane %v1835, 4
      %v1837 = vrot.slane %v1167, 5
      %v1838 = vsel %vm1806, %v1836, %v1837
      %v1839 = vrot.slane %v1837, 4
      %v1840 = vrot.slane %v1194, 5
      %v1841 = vsel %vm1806, %v1839, %v1840
      %v1842 = vrot.slane %v1785, 5
      %v1843 = vrot.slane %v1842, 4
      %v1844 = vrot.slane %v1169, 5
      %v1845 = vsel %vm1806, %v1843, %v1844
      %v1846 = vrot.slane %v1844, 4
      %v1847 = vrot.slane %v1195, 5
      %v1848 = vsel %vm1806, %v1846, %v1847
      %v1849 = vrot.slane %v1786, 5
      %v1850 = vrot.slane %v1849, 4
      %v1851 = vrot.slane %v1171, 5
      %v1852 = vsel %vm1806, %v1850, %v1851
      %v1853 = vrot.slane %v1851, 4
      %v1854 = vrot.slane %v1196, 5
      %v1855 = vsel %vm1806, %v1853, %v1854
      %v1856 = vrot.slane %v1787, 5
      %v1857 = vrot.slane %v1856, 4
      %v1858 = vrot.slane %v1173, 5
      %v1859 = vsel %vm1806, %v1857, %v1858
      %v1860 = vrot.slane %v1858, 4
      %v1861 = vrot.slane %v1197, 5
      %v1862 = vsel %vm1806, %v1860, %v1861
      %s1863 = scalar_lea.vmem %s4, 128
      %v1864 = vld [vmem:[%s1863] sm:$0xf]
      %v1865 = vld [vmem:[%s1863 + $0x4] sm:$0xf]
      %v1866 = vld [vmem:[%s1863 + $0x8] sm:$0xf]
      %v1867 = vld [vmem:[%s1863 + $0xc] sm:$0xf]
      %v1868 = vld [vmem:[%s1863 + $0x10] sm:$0xf]
      %v1869 = vld [vmem:[%s1863 + $0x14] sm:$0xf]
      %v1870 = vld [vmem:[%s1863 + $0x18] sm:$0xf]
      %v1871 = vld [vmem:[%s1863 + $0x1c] sm:$0xf]
      %v1872 = vld [vmem:[%s1863 + $0x20] sm:$0xf]
      %v1873 = vld [vmem:[%s1863 + $0x24] sm:$0xf]
      %v1874 = vld [vmem:[%s1863 + $0x28] sm:$0xf]
      %v1875 = vld [vmem:[%s1863 + $0x2c] sm:$0xf]
      %v1876 = vld [vmem:[%s1863 + $0x30] sm:$0xf]
      %v1877 = vld [vmem:[%s1863 + $0x34] sm:$0xf]
      %v1878 = vld [vmem:[%s1863 + $0x38] sm:$0xf]
      %v1879 = vld [vmem:[%s1863 + $0x3c] sm:$0xf]
      %v1880 = vunpack.c.l.b16 %v1810
      %v1881 = vunpack.c.l.b16 %v1813
      %v1882 = vunpack.c.l.b16 %v1817
      %v1883 = vunpack.c.l.b16 %v1820
      %v1884 = vunpack.c.l.b16 %v1824
      %v1885 = vunpack.c.l.b16 %v1827
      %v1886 = vunpack.c.l.b16 %v1831
      %v1887 = vunpack.c.l.b16 %v1834
      %v1888 = vunpack.c.l.b16 %v1838
      %v1889 = vunpack.c.l.b16 %v1841
      %v1890 = vunpack.c.l.b16 %v1845
      %v1891 = vunpack.c.l.b16 %v1848
      %v1892 = vunpack.c.l.b16 %v1852
      %v1893 = vunpack.c.l.b16 %v1855
      %v1894 = vunpack.c.l.b16 %v1859
      %v1895 = vunpack.c.l.b16 %v1862
      %v1896 = vpack.c.b16 %v1881, %v1880
      %v1897 = vpack.c.b16 %v1883, %v1882
      %v1898 = vpack.c.b16 %v1885, %v1884
      %v1899 = vpack.c.b16 %v1887, %v1886
      %v1900 = vpack.c.b16 %v1889, %v1888
      %v1901 = vpack.c.b16 %v1891, %v1890
      %v1902 = vpack.c.b16 %v1893, %v1892
      %v1903 = vpack.c.b16 %v1895, %v1894
      %v1928 = vunpack.c.l.b16 %v1864
      %v1929 = vunpack.c.l.b16 %v1865
      %v1930 = vunpack.c.l.b16 %v1866
      %v1931 = vunpack.c.l.b16 %v1867
      %v1932 = vunpack.c.l.b16 %v1868
      %v1933 = vunpack.c.l.b16 %v1869
      %v1934 = vunpack.c.l.b16 %v1870
      %v1935 = vunpack.c.l.b16 %v1871
      %v1936 = vunpack.c.l.b16 %v1872
      %v1937 = vunpack.c.l.b16 %v1873
      %v1938 = vunpack.c.l.b16 %v1874
      %v1939 = vunpack.c.l.b16 %v1875
      %v1940 = vunpack.c.l.b16 %v1876
      %v1941 = vunpack.c.l.b16 %v1877
      %v1942 = vunpack.c.l.b16 %v1878
      %v1943 = vunpack.c.l.b16 %v1879
      %v1944 = vpack.c.b16 %v1929, %v1928
      %v1945 = vpack.c.b16 %v1931, %v1930
      %v1946 = vpack.c.b16 %v1933, %v1932
      %v1947 = vpack.c.b16 %v1935, %v1934
      %v1948 = vpack.c.b16 %v1937, %v1936
      %v1949 = vpack.c.b16 %v1939, %v1938
      %v1950 = vpack.c.b16 %v1941, %v1940
      %v1951 = vpack.c.b16 %v1943, %v1942
      %1960 = vmatprep.subr.bf16.mxu0 0
      %1961 = vmatpush1.bf16.msra.mxu0 %v1944
      %1962 = vmatprep.subr.bf16.mxu0 0
      %1963 = vmatpush1.bf16.msra.mxu0 %v1945
      %1964 = vmatprep.subr.bf16.mxu0 0
      %1965 = vmatpush1.bf16.msra.mxu0 %v1946
      %1966 = vmatprep.subr.bf16.mxu0 0
      %1967 = vmatpush1.bf16.msra.mxu0 %v1947
      %1968 = vmatprep.subr.bf16.mxu0 0
      %1969 = vmatpush1.bf16.msra.mxu0 %v1948
      %1970 = vmatprep.subr.bf16.mxu0 0
      %1971 = vmatpush1.bf16.msra.mxu0 %v1949
      %1972 = vmatprep.subr.bf16.mxu0 0
      %1973 = vmatpush1.bf16.msra.mxu0 %v1950
      %1974 = vmatprep.subr.bf16.mxu0 0
      %1975 = vmatpush1.bf16.msra.mxu0 %v1951
      %1976 = vmatprep.subr.bf16.mxu0 0
      %1977 = vmatpush1.bf16.msra.mxu0 0
      %1978 = vmatprep.subr.bf16.mxu0 0
      %1979 = vmatpush1.bf16.msra.mxu0 0
      %1980 = vmatprep.subr.bf16.mxu0 0
      %1981 = vmatpush1.bf16.msra.mxu0 0
      %1982 = vmatprep.subr.bf16.mxu0 0
      %1983 = vmatpush1.bf16.msra.mxu0 0
      %1984 = vmatprep.subr.bf16.mxu0 0
      %1985 = vmatpush1.bf16.msra.mxu0 0
      %1986 = vmatprep.subr.bf16.mxu0 0
      %1987 = vmatpush1.bf16.msra.mxu0 0
      %1988 = vmatprep.subr.bf16.mxu0 0
      %1989 = vmatpush1.bf16.msra.mxu0 0
      %1990 = vmatprep.subr.bf16.mxu0 0
      %1991 = vmatpush1.bf16.msra.mxu0 0
      %1992 = vmatprep.mubr.bf16.mxu0 0
      %1993 = vmatmul.mubr.bf16.gmra.mrb[0].mxu0 %v1896
      %v1994 = vpop.f32.mrb[0].mxu0
      %v1995 = vadd.f32 0.0, %v1994
      %v1996 = vpop.f32.mrb[0].mxu0
      %v1997 = vpop.f32.mrb[0].mxu0
      %v1998 = vadd.f32 0.0, %v1997
      %v1999 = vpop.f32.mrb[0].mxu0
      %2000 = vmatprep.mubr.bf16.mxu0 0
      %2001 = vmatmul.mubr.bf16.gmra.mrb[0].mxu0 %v1897
      %v2002 = vpop.f32.mrb[0].mxu0
      %v2003 = vadd.f32 0.0, %v2002
      %v2004 = vpop.f32.mrb[0].mxu0
      %v2005 = vpop.f32.mrb[0].mxu0
      %v2006 = vadd.f32 0.0, %v2005
      %v2007 = vpop.f32.mrb[0].mxu0
      %2008 = vmatprep.mubr.bf16.mxu0 0
      %2009 = vmatmul.mubr.bf16.gmra.mrb[0].mxu0 %v1898
      %v2010 = vpop.f32.mrb[0].mxu0
      %v2011 = vadd.f32 0.0, %v2010
      %v2012 = vpop.f32.mrb[0].mxu0
      %v2013 = vpop.f32.mrb[0].mxu0
      %v2014 = vadd.f32 0.0, %v2013
      %v2015 = vpop.f32.mrb[0].mxu0
      %2016 = vmatprep.mubr.bf16.mxu0 0
      %2017 = vmatmul.mubr.bf16.gmra.mrb[0].mxu0 %v1899
      %v2018 = vpop.f32.mrb[0].mxu0
      %v2019 = vadd.f32 0.0, %v2018
      %v2020 = vpop.f32.mrb[0].mxu0
      %v2021 = vpop.f32.mrb[0].mxu0
      %v2022 = vadd.f32 0.0, %v2021
      %v2023 = vpop.f32.mrb[0].mxu0
      %2024 = vmatprep.mubr.bf16.mxu0 0
      %2025 = vmatmul.mubr.bf16.gmra.mrb[0].mxu0 %v1900
      %v2026 = vpop.f32.mrb[0].mxu0
      %v2027 = vadd.f32 0.0, %v2026
      %v2028 = vpop.f32.mrb[0].mxu0
      %v2029 = vpop.f32.mrb[0].mxu0
      %v2030 = vadd.f32 0.0, %v2029
      %v2031 = vpop.f32.mrb[0].mxu0
      %2032 = vmatprep.mubr.bf16.mxu0 0
      %2033 = vmatmul.mubr.bf16.gmra.mrb[0].mxu0 %v1901
      %v2034 = vpop.f32.mrb[0].mxu0
      %v2035 = vadd.f32 0.0, %v2034
      %v2036 = vpop.f32.mrb[0].mxu0
      %v2037 = vpop.f32.mrb[0].mxu0
      %v2038 = vadd.f32 0.0, %v2037
      %v2039 = vpop.f32.mrb[0].mxu0
      %2040 = vmatprep.mubr.bf16.mxu0 0
      %2041 = vmatmul.mubr.bf16.gmra.mrb[0].mxu0 %v1902
      %v2042 = vpop.f32.mrb[0].mxu0
      %v2043 = vadd.f32 0.0, %v2042
      %v2044 = vpop.f32.mrb[0].mxu0
      %v2045 = vpop.f32.mrb[0].mxu0
      %v2046 = vadd.f32 0.0, %v2045
      %v2047 = vpop.f32.mrb[0].mxu0
      %2048 = vmatprep.mubr.bf16.mxu0 0
      %2049 = vmatmul.mubr.bf16.gmra.mrb[0].mxu0 %v1903
      %v2050 = vpop.f32.mrb[0].mxu0
      %v2051 = vadd.f32 0.0, %v2050
      %v2052 = vpop.f32.mrb[0].mxu0
      %v2053 = vpop.f32.mrb[0].mxu0
      %v2054 = vadd.f32 0.0, %v2053
      %v2055 = vpop.f32.mrb[0].mxu0
      %2056 = vdwg.mxu0
      %v2057 = vadd.f32 %v1718, %v1995
      %v2058 = vadd.f32 %v1721, %v1998
      %v2059 = vadd.f32 %v1726, %v2003
      %v2060 = vadd.f32 %v1729, %v2006
      %v2061 = vadd.f32 %v1734, %v2011
      %v2062 = vadd.f32 %v1737, %v2014
      %v2063 = vadd.f32 %v1742, %v2019
      %v2064 = vadd.f32 %v1745, %v2022
      %v2065 = vadd.f32 %v1750, %v2027
      %v2066 = vadd.f32 %v1753, %v2030
      %v2067 = vadd.f32 %v1758, %v2035
      %v2068 = vadd.f32 %v1761, %v2038
      %v2069 = vadd.f32 %v1766, %v2043
      %v2070 = vadd.f32 %v1769, %v2046
      %v2071 = vadd.f32 %v1774, %v2051
      %v2072 = vadd.f32 %v1777, %v2054
      %s2073 = scalar_lea.vmem [#allocation2], 12
      %v2074 = vld [vmem:[%s2073] sm:$0xf]
      %v2075 = vld [vmem:[%s2073 + $0x4] sm:$0xf]
      %v2076 = vld [vmem:[%s2073 + $0xc] sm:$0xf]
      %v2077 = vld [vmem:[%s2073 + $0x10] sm:$0xf]
      %v2078 = vld [vmem:[%s2073 + $0x18] sm:$0xf]
      %v2079 = vld [vmem:[%s2073 + $0x1c] sm:$0xf]
      %v2080 = vld [vmem:[%s2073 + $0x24] sm:$0xf]
      %v2081 = vld [vmem:[%s2073 + $0x28] sm:$0xf]
      %v2082 = vld [vmem:[%s2073 + $0x30] sm:$0xf]
      %v2083 = vld [vmem:[%s2073 + $0x34] sm:$0xf]
      %v2084 = vld [vmem:[%s2073 + $0x3c] sm:$0xf]
      %v2085 = vld [vmem:[%s2073 + $0x40] sm:$0xf]
      %v2086 = vld [vmem:[%s2073 + $0x48] sm:$0xf]
      %v2087 = vld [vmem:[%s2073 + $0x4c] sm:$0xf]
      %v2088 = vld [vmem:[%s2073 + $0x54] sm:$0xf]
      %v2089 = vld [vmem:[%s2073 + $0x58] sm:$0xf]
      %s2090 = scalar_lea.vmem %s4, 192
      %v2091 = vld [vmem:[%s2090] sm:$0xf]
      %v2092 = vld [vmem:[%s2090 + $0x4] sm:$0xf]
      %v2093 = vld [vmem:[%s2090 + $0x8] sm:$0xf]
      %v2094 = vld [vmem:[%s2090 + $0xc] sm:$0xf]
      %v2095 = vld [vmem:[%s2090 + $0x10] sm:$0xf]
      %v2096 = vld [vmem:[%s2090 + $0x14] sm:$0xf]
      %v2097 = vld [vmem:[%s2090 + $0x18] sm:$0xf]
      %v2098 = vld [vmem:[%s2090 + $0x1c] sm:$0xf]
      %v2099 = vld [vmem:[%s2090 + $0x20] sm:$0xf]
      %v2100 = vld [vmem:[%s2090 + $0x24] sm:$0xf]
      %v2101 = vld [vmem:[%s2090 + $0x28] sm:$0xf]
      %v2102 = vld [vmem:[%s2090 + $0x2c] sm:$0xf]
      %v2103 = vld [vmem:[%s2090 + $0x30] sm:$0xf]
      %v2104 = vld [vmem:[%s2090 + $0x34] sm:$0xf]
      %v2105 = vld [vmem:[%s2090 + $0x38] sm:$0xf]
      %v2106 = vld [vmem:[%s2090 + $0x3c] sm:$0xf]
      %v2123 = vunpack.c.l.b16 %v2074
      %v2124 = vunpack.c.l.b16 %v2075
      %v2125 = vunpack.c.l.b16 %v2076
      %v2126 = vunpack.c.l.b16 %v2077
      %v2127 = vunpack.c.l.b16 %v2078
      %v2128 = vunpack.c.l.b16 %v2079
      %v2129 = vunpack.c.l.b16 %v2080
      %v2130 = vunpack.c.l.b16 %v2081
      %v2131 = vunpack.c.l.b16 %v2082
      %v2132 = vunpack.c.l.b16 %v2083
      %v2133 = vunpack.c.l.b16 %v2084
      %v2134 = vunpack.c.l.b16 %v2085
      %v2135 = vunpack.c.l.b16 %v2086
      %v2136 = vunpack.c.l.b16 %v2087
      %v2137 = vunpack.c.l.b16 %v2088
      %v2138 = vunpack.c.l.b16 %v2089
      %v2139 = vpack.c.b16 %v2124, %v2123
      %v2140 = vpack.c.b16 %v2126, %v2125
      %v2141 = vpack.c.b16 %v2128, %v2127
      %v2142 = vpack.c.b16 %v2130, %v2129
      %v2143 = vpack.c.b16 %v2132, %v2131
      %v2144 = vpack.c.b16 %v2134, %v2133
      %v2145 = vpack.c.b16 %v2136, %v2135
      %v2146 = vpack.c.b16 %v2138, %v2137
      %v2171 = vunpack.c.l.b16 %v2091
      %v2172 = vunpack.c.l.b16 %v2092
      %v2173 = vunpack.c.l.b16 %v2093
      %v2174 = vunpack.c.l.b16 %v2094
      %v2175 = vunpack.c.l.b16 %v2095
      %v2176 = vunpack.c.l.b16 %v2096
      %v2177 = vunpack.c.l.b16 %v2097
      %v2178 = vunpack.c.l.b16 %v2098
      %v2179 = vunpack.c.l.b16 %v2099
      %v2180 = vunpack.c.l.b16 %v2100
      %v2181 = vunpack.c.l.b16 %v2101
      %v2182 = vunpack.c.l.b16 %v2102
      %v2183 = vunpack.c.l.b16 %v2103
      %v2184 = vunpack.c.l.b16 %v2104
      %v2185 = vunpack.c.l.b16 %v2105
      %v2186 = vunpack.c.l.b16 %v2106
      %v2187 = vpack.c.b16 %v2172, %v2171
      %v2188 = vpack.c.b16 %v2174, %v2173
      %v2189 = vpack.c.b16 %v2176, %v2175
      %v2190 = vpack.c.b16 %v2178, %v2177
      %v2191 = vpack.c.b16 %v2180, %v2179
      %v2192 = vpack.c.b16 %v2182, %v2181
      %v2193 = vpack.c.b16 %v2184, %v2183
      %v2194 = vpack.c.b16 %v2186, %v2185
      %2203 = vmatprep.subr.bf16.mxu0 0
      %2204 = vmatpush1.bf16.msra.mxu0 %v2187
      %2205 = vmatprep.subr.bf16.mxu0 0
      %2206 = vmatpush1.bf16.msra.mxu0 %v2188
      %2207 = vmatprep.subr.bf16.mxu0 0
      %2208 = vmatpush1.bf16.msra.mxu0 %v2189
      %2209 = vmatprep.subr.bf16.mxu0 0
      %2210 = vmatpush1.bf16.msra.mxu0 %v2190
      %2211 = vmatprep.subr.bf16.mxu0 0
      %2212 = vmatpush1.bf16.msra.mxu0 %v2191
      %2213 = vmatprep.subr.bf16.mxu0 0
      %2214 = vmatpush1.bf16.msra.mxu0 %v2192
      %2215 = vmatprep.subr.bf16.mxu0 0
      %2216 = vmatpush1.bf16.msra.mxu0 %v2193
      %2217 = vmatprep.subr.bf16.mxu0 0
      %2218 = vmatpush1.bf16.msra.mxu0 %v2194
      %2219 = vmatprep.subr.bf16.mxu0 0
      %2220 = vmatpush1.bf16.msra.mxu0 0
      %2221 = vmatprep.subr.bf16.mxu0 0
      %2222 = vmatpush1.bf16.msra.mxu0 0
      %2223 = vmatprep.subr.bf16.mxu0 0
      %2224 = vmatpush1.bf16.msra.mxu0 0
      %2225 = vmatprep.subr.bf16.mxu0 0
      %2226 = vmatpush1.bf16.msra.mxu0 0
      %2227 = vmatprep.subr.bf16.mxu0 0
      %2228 = vmatpush1.bf16.msra.mxu0 0
      %2229 = vmatprep.subr.bf16.mxu0 0
      %2230 = vmatpush1.bf16.msra.mxu0 0
      %2231 = vmatprep.subr.bf16.mxu0 0
      %2232 = vmatpush1.bf16.msra.mxu0 0
      %2233 = vmatprep.subr.bf16.mxu0 0
      %2234 = vmatpush1.bf16.msra.mxu0 0
      %2235 = vmatprep.mubr.bf16.mxu0 0
      %2236 = vmatmul.mubr.bf16.gmra.mrb[0].mxu0 %v2139
      %v2237 = vpop.f32.mrb[0].mxu0
      %v2238 = vadd.f32 0.0, %v2237
      %v2239 = vpop.f32.mrb[0].mxu0
      %v2240 = vpop.f32.mrb[0].mxu0
      %v2241 = vadd.f32 0.0, %v2240
      %v2242 = vpop.f32.mrb[0].mxu0
      %2243 = vmatprep.mubr.bf16.mxu0 0
      %2244 = vmatmul.mubr.bf16.gmra.mrb[0].mxu0 %v2140
      %v2245 = vpop.f32.mrb[0].mxu0
      %v2246 = vadd.f32 0.0, %v2245
      %v2247 = vpop.f32.mrb[0].mxu0
      %v2248 = vpop.f32.mrb[0].mxu0
      %v2249 = vadd.f32 0.0, %v2248
      %v2250 = vpop.f32.mrb[0].mxu0
      %2251 = vmatprep.mubr.bf16.mxu0 0
      %2252 = vmatmul.mubr.bf16.gmra.mrb[0].mxu0 %v2141
      %v2253 = vpop.f32.mrb[0].mxu0
      %v2254 = vadd.f32 0.0, %v2253
      %v2255 = vpop.f32.mrb[0].mxu0
      %v2256 = vpop.f32.mrb[0].mxu0
      %v2257 = vadd.f32 0.0, %v2256
      %v2258 = vpop.f32.mrb[0].mxu0
      %2259 = vmatprep.mubr.bf16.mxu0 0
      %2260 = vmatmul.mubr.bf16.gmra.mrb[0].mxu0 %v2142
      %v2261 = vpop.f32.mrb[0].mxu0
      %v2262 = vadd.f32 0.0, %v2261
      %v2263 = vpop.f32.mrb[0].mxu0
      %v2264 = vpop.f32.mrb[0].mxu0
      %v2265 = vadd.f32 0.0, %v2264
      %v2266 = vpop.f32.mrb[0].mxu0
      %2267 = vmatprep.mubr.bf16.mxu0 0
      %2268 = vmatmul.mubr.bf16.gmra.mrb[0].mxu0 %v2143
      %v2269 = vpop.f32.mrb[0].mxu0
      %v2270 = vadd.f32 0.0, %v2269
      %v2271 = vpop.f32.mrb[0].mxu0
      %v2272 = vpop.f32.mrb[0].mxu0
      %v2273 = vadd.f32 0.0, %v2272
      %v2274 = vpop.f32.mrb[0].mxu0
      %2275 = vmatprep.mubr.bf16.mxu0 0
      %2276 = vmatmul.mubr.bf16.gmra.mrb[0].mxu0 %v2144
      %v2277 = vpop.f32.mrb[0].mxu0
      %v2278 = vadd.f32 0.0, %v2277
      %v2279 = vpop.f32.mrb[0].mxu0
      %v2280 = vpop.f32.mrb[0].mxu0
      %v2281 = vadd.f32 0.0, %v2280
      %v2282 = vpop.f32.mrb[0].mxu0
      %2283 = vmatprep.mubr.bf16.mxu0 0
      %2284 = vmatmul.mubr.bf16.gmra.mrb[0].mxu0 %v2145
      %v2285 = vpop.f32.mrb[0].mxu0
      %v2286 = vadd.f32 0.0, %v2285
      %v2287 = vpop.f32.mrb[0].mxu0
      %v2288 = vpop.f32.mrb[0].mxu0
      %v2289 = vadd.f32 0.0, %v2288
      %v2290 = vpop.f32.mrb[0].mxu0
      %2291 = vmatprep.mubr.bf16.mxu0 0
      %2292 = vmatmul.mubr.bf16.gmra.mrb[0].mxu0 %v2146
      %v2293 = vpop.f32.mrb[0].mxu0
      %v2294 = vadd.f32 0.0, %v2293
      %v2295 = vpop.f32.mrb[0].mxu0
      %v2296 = vpop.f32.mrb[0].mxu0
      %v2297 = vadd.f32 0.0, %v2296
      %v2298 = vpop.f32.mrb[0].mxu0
      %2299 = vdwg.mxu0
      %v2300 = vadd.f32 %v2057, %v2238
      %v2301 = vadd.f32 %v2058, %v2241
      %v2302 = vadd.f32 %v2059, %v2246
      %v2303 = vadd.f32 %v2060, %v2249
      %v2304 = vadd.f32 %v2061, %v2254
      %v2305 = vadd.f32 %v2062, %v2257
      %v2306 = vadd.f32 %v2063, %v2262
      %v2307 = vadd.f32 %v2064, %v2265
      %v2308 = vadd.f32 %v2065, %v2270
      %v2309 = vadd.f32 %v2066, %v2273
      %v2310 = vadd.f32 %v2067, %v2278
      %v2311 = vadd.f32 %v2068, %v2281
      %v2312 = vadd.f32 %v2069, %v2286
      %v2313 = vadd.f32 %v2070, %v2289
      %v2314 = vadd.f32 %v2071, %v2294
      %v2315 = vadd.f32 %v2072, %v2297
      %v2316 = vld [vmem:[%s2073] sm:$0xf]
      %v2317 = vld [vmem:[%s2073 + $0x4] sm:$0xf]
      %v2318 = vld [vmem:[%s2073 + $0x8] sm:$0x1]
      %v2319 = vld [vmem:[%s2073 + $0xc] sm:$0xf]
      %v2320 = vld [vmem:[%s2073 + $0x10] sm:$0xf]
      %v2321 = vld [vmem:[%s2073 + $0x14] sm:$0x1]
      %v2322 = vld [vmem:[%s2073 + $0x18] sm:$0xf]
      %v2323 = vld [vmem:[%s2073 + $0x1c] sm:$0xf]
      %v2324 = vld [vmem:[%s2073 + $0x20] sm:$0x1]
      %v2325 = vld [vmem:[%s2073 + $0x24] sm:$0xf]
      %v2326 = vld [vmem:[%s2073 + $0x28] sm:$0xf]
      %v2327 = vld [vmem:[%s2073 + $0x2c] sm:$0x1]
      %v2328 = vld [vmem:[%s2073 + $0x30] sm:$0xf]
      %v2329 = vld [vmem:[%s2073 + $0x34] sm:$0xf]
      %v2330 = vld [vmem:[%s2073 + $0x38] sm:$0x1]
      %v2331 = vld [vmem:[%s2073 + $0x3c] sm:$0xf]
      %v2332 = vld [vmem:[%s2073 + $0x40] sm:$0xf]
      %v2333 = vld [vmem:[%s2073 + $0x44] sm:$0x1]
      %v2334 = vld [vmem:[%s2073 + $0x48] sm:$0xf]
      %v2335 = vld [vmem:[%s2073 + $0x4c] sm:$0xf]
      %v2336 = vld [vmem:[%s2073 + $0x50] sm:$0x1]
      %v2337 = vld [vmem:[%s2073 + $0x54] sm:$0xf]
      %v2338 = vld [vmem:[%s2073 + $0x58] sm:$0xf]
      %v2339 = vld [vmem:[%s2073 + $0x5c] sm:$0x1]
      %v2341 = vshrl.u32 %v2316, 16
      %v2343 = vrot.slane %v2341, 4
      %v2344 = vshll.u32 %v2316, 16
      %v2346 = vrot.slane %v2344, 5
      %v2347 = vor.u32 %v2343, %v2346
      %v2348 = vrot.slane %v2347, 4
      %v2350 = vshll.u32 %v2317, 16
      %v2352 = vrot.slane %v2350, 5
      %v2353 = vsel %vm1200, %v2348, %v2352
      %v2354 = vshrl.u32 %v2317, 16
      %v2356 = vrot.slane %v2354, 4
      %v2357 = vor.u32 %v2356, %v2352
      %v2358 = vrot.slane %v2357, 4
      %v2360 = vshll.u32 %v2318, 16
      %v2362 = vrot.slane %v2360, 5
      %v2363 = vsel %vm1200, %v2358, %v2362
      %v2365 = vshrl.u32 %v2319, 16
      %v2367 = vrot.slane %v2365, 4
      %v2368 = vshll.u32 %v2319, 16
      %v2370 = vrot.slane %v2368, 5
      %v2371 = vor.u32 %v2367, %v2370
      %v2372 = vrot.slane %v2371, 4
      %v2374 = vshll.u32 %v2320, 16
      %v2376 = vrot.slane %v2374, 5
      %v2377 = vsel %vm1200, %v2372, %v2376
      %v2378 = vshrl.u32 %v2320, 16
      %v2380 = vrot.slane %v2378, 4
      %v2381 = vor.u32 %v2380, %v2376
      %v2382 = vrot.slane %v2381, 4
      %v2384 = vshll.u32 %v2321, 16
      %v2386 = vrot.slane %v2384, 5
      %v2387 = vsel %vm1200, %v2382, %v2386
      %v2389 = vshrl.u32 %v2322, 16
      %v2391 = vrot.slane %v2389, 4
      %v2392 = vshll.u32 %v2322, 16
      %v2394 = vrot.slane %v2392, 5
      %v2395 = vor.u32 %v2391, %v2394
      %v2396 = vrot.slane %v2395, 4
      %v2398 = vshll.u32 %v2323, 16
      %v2400 = vrot.slane %v2398, 5
      %v2401 = vsel %vm1200, %v2396, %v2400
      %v2402 = vshrl.u32 %v2323, 16
      %v2404 = vrot.slane %v2402, 4
      %v2405 = vor.u32 %v2404, %v2400
      %v2406 = vrot.slane %v2405, 4
      %v2408 = vshll.u32 %v2324, 16
      %v2410 = vrot.slane %v2408, 5
      %v2411 = vsel %vm1200, %v2406, %v2410
      %v2413 = vshrl.u32 %v2325, 16
      %v2415 = vrot.slane %v2413, 4
      %v2416 = vshll.u32 %v2325, 16
      %v2418 = vrot.slane %v2416, 5
      %v2419 = vor.u32 %v2415, %v2418
      %v2420 = vrot.slane %v2419, 4
      %v2422 = vshll.u32 %v2326, 16
      %v2424 = vrot.slane %v2422, 5
      %v2425 = vsel %vm1200, %v2420, %v2424
      %v2426 = vshrl.u32 %v2326, 16
      %v2428 = vrot.slane %v2426, 4
      %v2429 = vor.u32 %v2428, %v2424
      %v2430 = vrot.slane %v2429, 4
      %v2432 = vshll.u32 %v2327, 16
      %v2434 = vrot.slane %v2432, 5
      %v2435 = vsel %vm1200, %v2430, %v2434
      %v2437 = vshrl.u32 %v2328, 16
      %v2439 = vrot.slane %v2437, 4
      %v2440 = vshll.u32 %v2328, 16
      %v2442 = vrot.slane %v2440, 5
      %v2443 = vor.u32 %v2439, %v2442
      %v2444 = vrot.slane %v2443, 4
      %v2446 = vshll.u32 %v2329, 16
      %v2448 = vrot.slane %v2446, 5
      %v2449 = vsel %vm1200, %v2444, %v2448
      %v2450 = vshrl.u32 %v2329, 16
      %v2452 = vrot.slane %v2450, 4
      %v2453 = vor.u32 %v2452, %v2448
      %v2454 = vrot.slane %v2453, 4
      %v2456 = vshll.u32 %v2330, 16
      %v2458 = vrot.slane %v2456, 5
      %v2459 = vsel %vm1200, %v2454, %v2458
      %v2461 = vshrl.u32 %v2331, 16
      %v2463 = vrot.slane %v2461, 4
      %v2464 = vshll.u32 %v2331, 16
      %v2466 = vrot.slane %v2464, 5
      %v2467 = vor.u32 %v2463, %v2466
      %v2468 = vrot.slane %v2467, 4
      %v2470 = vshll.u32 %v2332, 16
      %v2472 = vrot.slane %v2470, 5
      %v2473 = vsel %vm1200, %v2468, %v2472
      %v2474 = vshrl.u32 %v2332, 16
      %v2476 = vrot.slane %v2474, 4
      %v2477 = vor.u32 %v2476, %v2472
      %v2478 = vrot.slane %v2477, 4
      %v2480 = vshll.u32 %v2333, 16
      %v2482 = vrot.slane %v2480, 5
      %v2483 = vsel %vm1200, %v2478, %v2482
      %v2485 = vshrl.u32 %v2334, 16
      %v2487 = vrot.slane %v2485, 4
      %v2488 = vshll.u32 %v2334, 16
      %v2490 = vrot.slane %v2488, 5
      %v2491 = vor.u32 %v2487, %v2490
      %v2492 = vrot.slane %v2491, 4
      %v2494 = vshll.u32 %v2335, 16
      %v2496 = vrot.slane %v2494, 5
      %v2497 = vsel %vm1200, %v2492, %v2496
      %v2498 = vshrl.u32 %v2335, 16
      %v2500 = vrot.slane %v2498, 4
      %v2501 = vor.u32 %v2500, %v2496
      %v2502 = vrot.slane %v2501, 4
      %v2504 = vshll.u32 %v2336, 16
      %v2506 = vrot.slane %v2504, 5
      %v2507 = vsel %vm1200, %v2502, %v2506
      %v2509 = vshrl.u32 %v2337, 16
      %v2511 = vrot.slane %v2509, 4
      %v2512 = vshll.u32 %v2337, 16
      %v2514 = vrot.slane %v2512, 5
      %v2515 = vor.u32 %v2511, %v2514
      %v2516 = vrot.slane %v2515, 4
      %v2518 = vshll.u32 %v2338, 16
      %v2520 = vrot.slane %v2518, 5
      %v2521 = vsel %vm1200, %v2516, %v2520
      %v2522 = vshrl.u32 %v2338, 16
      %v2524 = vrot.slane %v2522, 4
      %v2525 = vor.u32 %v2524, %v2520
      %v2526 = vrot.slane %v2525, 4
      %v2528 = vshll.u32 %v2339, 16
      %v2530 = vrot.slane %v2528, 5
      %v2531 = vsel %vm1200, %v2526, %v2530
      %s2532 = scalar_lea.vmem %s4, 256
      %v2533 = vld [vmem:[%s2532] sm:$0xf]
      %v2534 = vld [vmem:[%s2532 + $0x4] sm:$0xf]
      %v2535 = vld [vmem:[%s2532 + $0x8] sm:$0xf]
      %v2536 = vld [vmem:[%s2532 + $0xc] sm:$0xf]
      %v2537 = vld [vmem:[%s2532 + $0x10] sm:$0xf]
      %v2538 = vld [vmem:[%s2532 + $0x14] sm:$0xf]
      %v2539 = vld [vmem:[%s2532 + $0x18] sm:$0xf]
      %v2540 = vld [vmem:[%s2532 + $0x1c] sm:$0xf]
      %v2541 = vld [vmem:[%s2532 + $0x20] sm:$0xf]
      %v2542 = vld [vmem:[%s2532 + $0x24] sm:$0xf]
      %v2543 = vld [vmem:[%s2532 + $0x28] sm:$0xf]
      %v2544 = vld [vmem:[%s2532 + $0x2c] sm:$0xf]
      %v2545 = vld [vmem:[%s2532 + $0x30] sm:$0xf]
      %v2546 = vld [vmem:[%s2532 + $0x34] sm:$0xf]
      %v2547 = vld [vmem:[%s2532 + $0x38] sm:$0xf]
      %v2548 = vld [vmem:[%s2532 + $0x3c] sm:$0xf]
      %v2549 = vunpack.c.l.b16 %v2353
      %v2550 = vunpack.c.l.b16 %v2363
      %v2551 = vunpack.c.l.b16 %v2377
      %v2552 = vunpack.c.l.b16 %v2387
      %v2553 = vunpack.c.l.b16 %v2401
      %v2554 = vunpack.c.l.b16 %v2411
      %v2555 = vunpack.c.l.b16 %v2425
      %v2556 = vunpack.c.l.b16 %v2435
      %v2557 = vunpack.c.l.b16 %v2449
      %v2558 = vunpack.c.l.b16 %v2459
      %v2559 = vunpack.c.l.b16 %v2473
      %v2560 = vunpack.c.l.b16 %v2483
      %v2561 = vunpack.c.l.b16 %v2497
      %v2562 = vunpack.c.l.b16 %v2507
      %v2563 = vunpack.c.l.b16 %v2521
      %v2564 = vunpack.c.l.b16 %v2531
      %v2565 = vpack.c.b16 %v2550, %v2549
      %v2566 = vpack.c.b16 %v2552, %v2551
      %v2567 = vpack.c.b16 %v2554, %v2553
      %v2568 = vpack.c.b16 %v2556, %v2555
      %v2569 = vpack.c.b16 %v2558, %v2557
      %v2570 = vpack.c.b16 %v2560, %v2559
      %v2571 = vpack.c.b16 %v2562, %v2561
      %v2572 = vpack.c.b16 %v2564, %v2563
      %v2597 = vunpack.c.l.b16 %v2533
      %v2598 = vunpack.c.l.b16 %v2534
      %v2599 = vunpack.c.l.b16 %v2535
      %v2600 = vunpack.c.l.b16 %v2536
      %v2601 = vunpack.c.l.b16 %v2537
      %v2602 = vunpack.c.l.b16 %v2538
      %v2603 = vunpack.c.l.b16 %v2539
      %v2604 = vunpack.c.l.b16 %v2540
      %v2605 = vunpack.c.l.b16 %v2541
      %v2606 = vunpack.c.l.b16 %v2542
      %v2607 = vunpack.c.l.b16 %v2543
      %v2608 = vunpack.c.l.b16 %v2544
      %v2609 = vunpack.c.l.b16 %v2545
      %v2610 = vunpack.c.l.b16 %v2546
      %v2611 = vunpack.c.l.b16 %v2547
      %v2612 = vunpack.c.l.b16 %v2548
      %v2613 = vpack.c.b16 %v2598, %v2597
      %v2614 = vpack.c.b16 %v2600, %v2599
      %v2615 = vpack.c.b16 %v2602, %v2601
      %v2616 = vpack.c.b16 %v2604, %v2603
      %v2617 = vpack.c.b16 %v2606, %v2605
      %v2618 = vpack.c.b16 %v2608, %v2607
      %v2619 = vpack.c.b16 %v2610, %v2609
      %v2620 = vpack.c.b16 %v2612, %v2611
      %2629 = vmatprep.subr.bf16.mxu0 0
      %2630 = vmatpush1.bf16.msra.mxu0 %v2613
      %2631 = vmatprep.subr.bf16.mxu0 0
      %2632 = vmatpush1.bf16.msra.mxu0 %v2614
      %2633 = vmatprep.subr.bf16.mxu0 0
      %2634 = vmatpush1.bf16.msra.mxu0 %v2615
      %2635 = vmatprep.subr.bf16.mxu0 0
      %2636 = vmatpush1.bf16.msra.mxu0 %v2616
      %2637 = vmatprep.subr.bf16.mxu0 0
      %2638 = vmatpush1.bf16.msra.mxu0 %v2617
      %2639 = vmatprep.subr.bf16.mxu0 0
      %2640 = vmatpush1.bf16.msra.mxu0 %v2618
      %2641 = vmatprep.subr.bf16.mxu0 0
      %2642 = vmatpush1.bf16.msra.mxu0 %v2619
      %2643 = vmatprep.subr.bf16.mxu0 0
      %2644 = vmatpush1.bf16.msra.mxu0 %v2620
      %2645 = vmatprep.subr.bf16.mxu0 0
      %2646 = vmatpush1.bf16.msra.mxu0 0
      %2647 = vmatprep.subr.bf16.mxu0 0
      %2648 = vmatpush1.bf16.msra.mxu0 0
      %2649 = vmatprep.subr.bf16.mxu0 0
      %2650 = vmatpush1.bf16.msra.mxu0 0
      %2651 = vmatprep.subr.bf16.mxu0 0
      %2652 = vmatpush1.bf16.msra.mxu0 0
      %2653 = vmatprep.subr.bf16.mxu0 0
      %2654 = vmatpush1.bf16.msra.mxu0 0
      %2655 = vmatprep.subr.bf16.mxu0 0
      %2656 = vmatpush1.bf16.msra.mxu0 0
      %2657 = vmatprep.subr.bf16.mxu0 0
      %2658 = vmatpush1.bf16.msra.mxu0 0
      %2659 = vmatprep.subr.bf16.mxu0 0
      %2660 = vmatpush1.bf16.msra.mxu0 0
      %2661 = vmatprep.mubr.bf16.mxu0 0
      %2662 = vmatmul.mubr.bf16.gmra.mrb[0].mxu0 %v2565
      %v2663 = vpop.f32.mrb[0].mxu0
      %v2664 = vadd.f32 0.0, %v2663
      %v2665 = vpop.f32.mrb[0].mxu0
      %v2666 = vpop.f32.mrb[0].mxu0
      %v2667 = vadd.f32 0.0, %v2666
      %v2668 = vpop.f32.mrb[0].mxu0
      %2669 = vmatprep.mubr.bf16.mxu0 0
      %2670 = vmatmul.mubr.bf16.gmra.mrb[0].mxu0 %v2566
      %v2671 = vpop.f32.mrb[0].mxu0
      %v2672 = vadd.f32 0.0, %v2671
      %v2673 = vpop.f32.mrb[0].mxu0
      %v2674 = vpop.f32.mrb[0].mxu0
      %v2675 = vadd.f32 0.0, %v2674
      %v2676 = vpop.f32.mrb[0].mxu0
      %2677 = vmatprep.mubr.bf16.mxu0 0
      %2678 = vmatmul.mubr.bf16.gmra.mrb[0].mxu0 %v2567
      %v2679 = vpop.f32.mrb[0].mxu0
      %v2680 = vadd.f32 0.0, %v2679
      %v2681 = vpop.f32.mrb[0].mxu0
      %v2682 = vpop.f32.mrb[0].mxu0
      %v2683 = vadd.f32 0.0, %v2682
      %v2684 = vpop.f32.mrb[0].mxu0
      %2685 = vmatprep.mubr.bf16.mxu0 0
      %2686 = vmatmul.mubr.bf16.gmra.mrb[0].mxu0 %v2568
      %v2687 = vpop.f32.mrb[0].mxu0
      %v2688 = vadd.f32 0.0, %v2687
      %v2689 = vpop.f32.mrb[0].mxu0
      %v2690 = vpop.f32.mrb[0].mxu0
      %v2691 = vadd.f32 0.0, %v2690
      %v2692 = vpop.f32.mrb[0].mxu0
      %2693 = vmatprep.mubr.bf16.mxu0 0
      %2694 = vmatmul.mubr.bf16.gmra.mrb[0].mxu0 %v2569
      %v2695 = vpop.f32.mrb[0].mxu0
      %v2696 = vadd.f32 0.0, %v2695
      %v2697 = vpop.f32.mrb[0].mxu0
      %v2698 = vpop.f32.mrb[0].mxu0
      %v2699 = vadd.f32 0.0, %v2698
      %v2700 = vpop.f32.mrb[0].mxu0
      %2701 = vmatprep.mubr.bf16.mxu0 0
      %2702 = vmatmul.mubr.bf16.gmra.mrb[0].mxu0 %v2570
      %v2703 = vpop.f32.mrb[0].mxu0
      %v2704 = vadd.f32 0.0, %v2703
      %v2705 = vpop.f32.mrb[0].mxu0
      %v2706 = vpop.f32.mrb[0].mxu0
      %v2707 = vadd.f32 0.0, %v2706
      %v2708 = vpop.f32.mrb[0].mxu0
      %2709 = vmatprep.mubr.bf16.mxu0 0
      %2710 = vmatmul.mubr.bf16.gmra.mrb[0].mxu0 %v2571
      %v2711 = vpop.f32.mrb[0].mxu0
      %v2712 = vadd.f32 0.0, %v2711
      %v2713 = vpop.f32.mrb[0].mxu0
      %v2714 = vpop.f32.mrb[0].mxu0
      %v2715 = vadd.f32 0.0, %v2714
      %v2716 = vpop.f32.mrb[0].mxu0
      %2717 = vmatprep.mubr.bf16.mxu0 0
      %2718 = vmatmul.mubr.bf16.gmra.mrb[0].mxu0 %v2572
      %v2719 = vpop.f32.mrb[0].mxu0
      %v2720 = vadd.f32 0.0, %v2719
      %v2721 = vpop.f32.mrb[0].mxu0
      %v2722 = vpop.f32.mrb[0].mxu0
      %v2723 = vadd.f32 0.0, %v2722
      %v2724 = vpop.f32.mrb[0].mxu0
      %2725 = vdwg.mxu0
      %v2726 = vadd.f32 %v2300, %v2664
      %v2727 = vadd.f32 %v2301, %v2667
      %v2728 = vadd.f32 %v2302, %v2672
      %v2729 = vadd.f32 %v2303, %v2675
      %v2730 = vadd.f32 %v2304, %v2680
      %v2731 = vadd.f32 %v2305, %v2683
      %v2732 = vadd.f32 %v2306, %v2688
      %v2733 = vadd.f32 %v2307, %v2691
      %v2734 = vadd.f32 %v2308, %v2696
      %v2735 = vadd.f32 %v2309, %v2699
      %v2736 = vadd.f32 %v2310, %v2704
      %v2737 = vadd.f32 %v2311, %v2707
      %v2738 = vadd.f32 %v2312, %v2712
      %v2739 = vadd.f32 %v2313, %v2715
      %v2740 = vadd.f32 %v2314, %v2720
      %v2741 = vadd.f32 %v2315, %v2723
      %v2742 = vld [vmem:[%s2073] sm:$0xe]
      %v2743 = vld [vmem:[%s2073 + $0xc] sm:$0xe]
      %v2744 = vld [vmem:[%s2073 + $0x18] sm:$0xe]
      %v2745 = vld [vmem:[%s2073 + $0x24] sm:$0xe]
      %v2746 = vld [vmem:[%s2073 + $0x30] sm:$0xe]
      %v2747 = vld [vmem:[%s2073 + $0x3c] sm:$0xe]
      %v2748 = vld [vmem:[%s2073 + $0x48] sm:$0xe]
      %v2749 = vld [vmem:[%s2073 + $0x54] sm:$0xe]
      %v2774 = vrot.slane %v2742, 5
      %v2775 = vrot.slane %v2774, 4
      %v2776 = vrot.slane %v2317, 5
      %v2777 = vsel %vm1806, %v2775, %v2776
      %v2778 = vrot.slane %v2776, 4
      %v2779 = vrot.slane %v2318, 5
      %v2780 = vsel %vm1806, %v2778, %v2779
      %v2781 = vrot.slane %v2743, 5
      %v2782 = vrot.slane %v2781, 4
      %v2783 = vrot.slane %v2320, 5
      %v2784 = vsel %vm1806, %v2782, %v2783
      %v2785 = vrot.slane %v2783, 4
      %v2786 = vrot.slane %v2321, 5
      %v2787 = vsel %vm1806, %v2785, %v2786
      %v2788 = vrot.slane %v2744, 5
      %v2789 = vrot.slane %v2788, 4
      %v2790 = vrot.slane %v2323, 5
      %v2791 = vsel %vm1806, %v2789, %v2790
      %v2792 = vrot.slane %v2790, 4
      %v2793 = vrot.slane %v2324, 5
      %v2794 = vsel %vm1806, %v2792, %v2793
      %v2795 = vrot.slane %v2745, 5
      %v2796 = vrot.slane %v2795, 4
      %v2797 = vrot.slane %v2326, 5
      %v2798 = vsel %vm1806, %v2796, %v2797
      %v2799 = vrot.slane %v2797, 4
      %v2800 = vrot.slane %v2327, 5
      %v2801 = vsel %vm1806, %v2799, %v2800
      %v2802 = vrot.slane %v2746, 5
      %v2803 = vrot.slane %v2802, 4
      %v2804 = vrot.slane %v2329, 5
      %v2805 = vsel %vm1806, %v2803, %v2804
      %v2806 = vrot.slane %v2804, 4
      %v2807 = vrot.slane %v2330, 5
      %v2808 = vsel %vm1806, %v2806, %v2807
      %v2809 = vrot.slane %v2747, 5
      %v2810 = vrot.slane %v2809, 4
      %v2811 = vrot.slane %v2332, 5
      %v2812 = vsel %vm1806, %v2810, %v2811
      %v2813 = vrot.slane %v2811, 4
      %v2814 = vrot.slane %v2333, 5
      %v2815 = vsel %vm1806, %v2813, %v2814
      %v2816 = vrot.slane %v2748, 5
      %v2817 = vrot.slane %v2816, 4
      %v2818 = vrot.slane %v2335, 5
      %v2819 = vsel %vm1806, %v2817, %v2818
      %v2820 = vrot.slane %v2818, 4
      %v2821 = vrot.slane %v2336, 5
      %v2822 = vsel %vm1806, %v2820, %v2821
      %v2823 = vrot.slane %v2749, 5
      %v2824 = vrot.slane %v2823, 4
      %v2825 = vrot.slane %v2338, 5
      %v2826 = vsel %vm1806, %v2824, %v2825
      %v2827 = vrot.slane %v2825, 4
      %v2828 = vrot.slane %v2339, 5
      %v2829 = vsel %vm1806, %v2827, %v2828
      %s2830 = scalar_lea.vmem %s4, 320
      %v2831 = vld [vmem:[%s2830] sm:$0xf]
      %v2832 = vld [vmem:[%s2830 + $0x4] sm:$0xf]
      %v2833 = vld [vmem:[%s2830 + $0x8] sm:$0xf]
      %v2834 = vld [vmem:[%s2830 + $0xc] sm:$0xf]
      %v2835 = vld [vmem:[%s2830 + $0x10] sm:$0xf]
      %v2836 = vld [vmem:[%s2830 + $0x14] sm:$0xf]
      %v2837 = vld [vmem:[%s2830 + $0x18] sm:$0xf]
      %v2838 = vld [vmem:[%s2830 + $0x1c] sm:$0xf]
      %v2839 = vld [vmem:[%s2830 + $0x20] sm:$0xf]
      %v2840 = vld [vmem:[%s2830 + $0x24] sm:$0xf]
      %v2841 = vld [vmem:[%s2830 + $0x28] sm:$0xf]
      %v2842 = vld [vmem:[%s2830 + $0x2c] sm:$0xf]
      %v2843 = vld [vmem:[%s2830 + $0x30] sm:$0xf]
      %v2844 = vld [vmem:[%s2830 + $0x34] sm:$0xf]
      %v2845 = vld [vmem:[%s2830 + $0x38] sm:$0xf]
      %v2846 = vld [vmem:[%s2830 + $0x3c] sm:$0xf]
      %v2847 = vunpack.c.l.b16 %v2777
      %v2848 = vunpack.c.l.b16 %v2780
      %v2849 = vunpack.c.l.b16 %v2784
      %v2850 = vunpack.c.l.b16 %v2787
      %v2851 = vunpack.c.l.b16 %v2791
      %v2852 = vunpack.c.l.b16 %v2794
      %v2853 = vunpack.c.l.b16 %v2798
      %v2854 = vunpack.c.l.b16 %v2801
      %v2855 = vunpack.c.l.b16 %v2805
      %v2856 = vunpack.c.l.b16 %v2808
      %v2857 = vunpack.c.l.b16 %v2812
      %v2858 = vunpack.c.l.b16 %v2815
      %v2859 = vunpack.c.l.b16 %v2819
      %v2860 = vunpack.c.l.b16 %v2822
      %v2861 = vunpack.c.l.b16 %v2826
      %v2862 = vunpack.c.l.b16 %v2829
      %v2863 = vpack.c.b16 %v2848, %v2847
      %v2864 = vpack.c.b16 %v2850, %v2849
      %v2865 = vpack.c.b16 %v2852, %v2851
      %v2866 = vpack.c.b16 %v2854, %v2853
      %v2867 = vpack.c.b16 %v2856, %v2855
      %v2868 = vpack.c.b16 %v2858, %v2857
      %v2869 = vpack.c.b16 %v2860, %v2859
      %v2870 = vpack.c.b16 %v2862, %v2861
      %v2895 = vunpack.c.l.b16 %v2831
      %v2896 = vunpack.c.l.b16 %v2832
      %v2897 = vunpack.c.l.b16 %v2833
      %v2898 = vunpack.c.l.b16 %v2834
      %v2899 = vunpack.c.l.b16 %v2835
      %v2900 = vunpack.c.l.b16 %v2836
      %v2901 = vunpack.c.l.b16 %v2837
      %v2902 = vunpack.c.l.b16 %v2838
      %v2903 = vunpack.c.l.b16 %v2839
      %v2904 = vunpack.c.l.b16 %v2840
      %v2905 = vunpack.c.l.b16 %v2841
      %v2906 = vunpack.c.l.b16 %v2842
      %v2907 = vunpack.c.l.b16 %v2843
      %v2908 = vunpack.c.l.b16 %v2844
      %v2909 = vunpack.c.l.b16 %v2845
      %v2910 = vunpack.c.l.b16 %v2846
      %v2911 = vpack.c.b16 %v2896, %v2895
      %v2912 = vpack.c.b16 %v2898, %v2897
      %v2913 = vpack.c.b16 %v2900, %v2899
      %v2914 = vpack.c.b16 %v2902, %v2901
      %v2915 = vpack.c.b16 %v2904, %v2903
      %v2916 = vpack.c.b16 %v2906, %v2905
      %v2917 = vpack.c.b16 %v2908, %v2907
      %v2918 = vpack.c.b16 %v2910, %v2909
      %2927 = vmatprep.subr.bf16.mxu0 0
      %2928 = vmatpush1.bf16.msra.mxu0 %v2911
      %2929 = vmatprep.subr.bf16.mxu0 0
      %2930 = vmatpush1.bf16.msra.mxu0 %v2912
      %2931 = vmatprep.subr.bf16.mxu0 0
      %2932 = vmatpush1.bf16.msra.mxu0 %v2913
      %2933 = vmatprep.subr.bf16.mxu0 0
      %2934 = vmatpush1.bf16.msra.mxu0 %v2914
      %2935 = vmatprep.subr.bf16.mxu0 0
      %2936 = vmatpush1.bf16.msra.mxu0 %v2915
      %2937 = vmatprep.subr.bf16.mxu0 0
      %2938 = vmatpush1.bf16.msra.mxu0 %v2916
      %2939 = vmatprep.subr.bf16.mxu0 0
      %2940 = vmatpush1.bf16.msra.mxu0 %v2917
      %2941 = vmatprep.subr.bf16.mxu0 0
      %2942 = vmatpush1.bf16.msra.mxu0 %v2918
      %2943 = vmatprep.subr.bf16.mxu0 0
      %2944 = vmatpush1.bf16.msra.mxu0 0
      %2945 = vmatprep.subr.bf16.mxu0 0
      %2946 = vmatpush1.bf16.msra.mxu0 0
      %2947 = vmatprep.subr.bf16.mxu0 0
      %2948 = vmatpush1.bf16.msra.mxu0 0
      %2949 = vmatprep.subr.bf16.mxu0 0
      %2950 = vmatpush1.bf16.msra.mxu0 0
      %2951 = vmatprep.subr.bf16.mxu0 0
      %2952 = vmatpush1.bf16.msra.mxu0 0
      %2953 = vmatprep.subr.bf16.mxu0 0
      %2954 = vmatpush1.bf16.msra.mxu0 0
      %2955 = vmatprep.subr.bf16.mxu0 0
      %2956 = vmatpush1.bf16.msra.mxu0 0
      %2957 = vmatprep.subr.bf16.mxu0 0
      %2958 = vmatpush1.bf16.msra.mxu0 0
      %2959 = vmatprep.mubr.bf16.mxu0 0
      %2960 = vmatmul.mubr.bf16.gmra.mrb[0].mxu0 %v2863
      %v2961 = vpop.f32.mrb[0].mxu0
      %v2962 = vadd.f32 0.0, %v2961
      %v2963 = vpop.f32.mrb[0].mxu0
      %v2964 = vpop.f32.mrb[0].mxu0
      %v2965 = vadd.f32 0.0, %v2964
      %v2966 = vpop.f32.mrb[0].mxu0
      %2967 = vmatprep.mubr.bf16.mxu0 0
      %2968 = vmatmul.mubr.bf16.gmra.mrb[0].mxu0 %v2864
      %v2969 = vpop.f32.mrb[0].mxu0
      %v2970 = vadd.f32 0.0, %v2969
      %v2971 = vpop.f32.mrb[0].mxu0
      %v2972 = vpop.f32.mrb[0].mxu0
      %v2973 = vadd.f32 0.0, %v2972
      %v2974 = vpop.f32.mrb[0].mxu0
      %2975 = vmatprep.mubr.bf16.mxu0 0
      %2976 = vmatmul.mubr.bf16.gmra.mrb[0].mxu0 %v2865
      %v2977 = vpop.f32.mrb[0].mxu0
      %v2978 = vadd.f32 0.0, %v2977
      %v2979 = vpop.f32.mrb[0].mxu0
      %v2980 = vpop.f32.mrb[0].mxu0
      %v2981 = vadd.f32 0.0, %v2980
      %v2982 = vpop.f32.mrb[0].mxu0
      %2983 = vmatprep.mubr.bf16.mxu0 0
      %2984 = vmatmul.mubr.bf16.gmra.mrb[0].mxu0 %v2866
      %v2985 = vpop.f32.mrb[0].mxu0
      %v2986 = vadd.f32 0.0, %v2985
      %v2987 = vpop.f32.mrb[0].mxu0
      %v2988 = vpop.f32.mrb[0].mxu0
      %v2989 = vadd.f32 0.0, %v2988
      %v2990 = vpop.f32.mrb[0].mxu0
      %2991 = vmatprep.mubr.bf16.mxu0 0
      %2992 = vmatmul.mubr.bf16.gmra.mrb[0].mxu0 %v2867
      %v2993 = vpop.f32.mrb[0].mxu0
      %v2994 = vadd.f32 0.0, %v2993
      %v2995 = vpop.f32.mrb[0].mxu0
      %v2996 = vpop.f32.mrb[0].mxu0
      %v2997 = vadd.f32 0.0, %v2996
      %v2998 = vpop.f32.mrb[0].mxu0
      %2999 = vmatprep.mubr.bf16.mxu0 0
      %3000 = vmatmul.mubr.bf16.gmra.mrb[0].mxu0 %v2868
      %v3001 = vpop.f32.mrb[0].mxu0
      %v3002 = vadd.f32 0.0, %v3001
      %v3003 = vpop.f32.mrb[0].mxu0
      %v3004 = vpop.f32.mrb[0].mxu0
      %v3005 = vadd.f32 0.0, %v3004
      %v3006 = vpop.f32.mrb[0].mxu0
      %3007 = vmatprep.mubr.bf16.mxu0 0
      %3008 = vmatmul.mubr.bf16.gmra.mrb[0].mxu0 %v2869
      %v3009 = vpop.f32.mrb[0].mxu0
      %v3010 = vadd.f32 0.0, %v3009
      %v3011 = vpop.f32.mrb[0].mxu0
      %v3012 = vpop.f32.mrb[0].mxu0
      %v3013 = vadd.f32 0.0, %v3012
      %v3014 = vpop.f32.mrb[0].mxu0
      %3015 = vmatprep.mubr.bf16.mxu0 0
      %3016 = vmatmul.mubr.bf16.gmra.mrb[0].mxu0 %v2870
      %v3017 = vpop.f32.mrb[0].mxu0
      %v3018 = vadd.f32 0.0, %v3017
      %v3019 = vpop.f32.mrb[0].mxu0
      %v3020 = vpop.f32.mrb[0].mxu0
      %v3021 = vadd.f32 0.0, %v3020
      %v3022 = vpop.f32.mrb[0].mxu0
      %3023 = vdwg.mxu0
      %v3024 = vadd.f32 %v2726, %v2962
      %v3025 = vadd.f32 %v2727, %v2965
      %v3026 = vadd.f32 %v2728, %v2970
      %v3027 = vadd.f32 %v2729, %v2973
      %v3028 = vadd.f32 %v2730, %v2978
      %v3029 = vadd.f32 %v2731, %v2981
      %v3030 = vadd.f32 %v2732, %v2986
      %v3031 = vadd.f32 %v2733, %v2989
      %v3032 = vadd.f32 %v2734, %v2994
      %v3033 = vadd.f32 %v2735, %v2997
      %v3034 = vadd.f32 %v2736, %v3002
      %v3035 = vadd.f32 %v2737, %v3005
      %v3036 = vadd.f32 %v2738, %v3010
      %v3037 = vadd.f32 %v2739, %v3013
      %v3038 = vadd.f32 %v2740, %v3018
      %v3039 = vadd.f32 %v2741, %v3021
      %s3040 = scalar_lea.vmem [#allocation2], 24
      %v3041 = vld [vmem:[%s3040] sm:$0xf]
      %v3042 = vld [vmem:[%s3040 + $0x4] sm:$0xf]
      %v3043 = vld [vmem:[%s3040 + $0xc] sm:$0xf]
      %v3044 = vld [vmem:[%s3040 + $0x10] sm:$0xf]
      %v3045 = vld [vmem:[%s3040 + $0x18] sm:$0xf]
      %v3046 = vld [vmem:[%s3040 + $0x1c] sm:$0xf]
      %v3047 = vld [vmem:[%s3040 + $0x24] sm:$0xf]
      %v3048 = vld [vmem:[%s3040 + $0x28] sm:$0xf]
      %v3049 = vld [vmem:[%s3040 + $0x30] sm:$0xf]
      %v3050 = vld [vmem:[%s3040 + $0x34] sm:$0xf]
      %v3051 = vld [vmem:[%s3040 + $0x3c] sm:$0xf]
      %v3052 = vld [vmem:[%s3040 + $0x40] sm:$0xf]
      %v3053 = vld [vmem:[%s3040 + $0x48] sm:$0xf]
      %v3054 = vld [vmem:[%s3040 + $0x4c] sm:$0xf]
      %v3055 = vld [vmem:[%s3040 + $0x54] sm:$0xf]
      %v3056 = vld [vmem:[%s3040 + $0x58] sm:$0xf]
      %s3057 = scalar_lea.vmem %s4, 384
      %v3058 = vld [vmem:[%s3057] sm:$0xf]
      %v3059 = vld [vmem:[%s3057 + $0x4] sm:$0xf]
      %v3060 = vld [vmem:[%s3057 + $0x8] sm:$0xf]
      %v3061 = vld [vmem:[%s3057 + $0xc] sm:$0xf]
      %v3062 = vld [vmem:[%s3057 + $0x10] sm:$0xf]
      %v3063 = vld [vmem:[%s3057 + $0x14] sm:$0xf]
      %v3064 = vld [vmem:[%s3057 + $0x18] sm:$0xf]
      %v3065 = vld [vmem:[%s3057 + $0x1c] sm:$0xf]
      %v3066 = vld [vmem:[%s3057 + $0x20] sm:$0xf]
      %v3067 = vld [vmem:[%s3057 + $0x24] sm:$0xf]
      %v3068 = vld [vmem:[%s3057 + $0x28] sm:$0xf]
      %v3069 = vld [vmem:[%s3057 + $0x2c] sm:$0xf]
      %v3070 = vld [vmem:[%s3057 + $0x30] sm:$0xf]
      %v3071 = vld [vmem:[%s3057 + $0x34] sm:$0xf]
      %v3072 = vld [vmem:[%s3057 + $0x38] sm:$0xf]
      %v3073 = vld [vmem:[%s3057 + $0x3c] sm:$0xf]
      %v3090 = vunpack.c.l.b16 %v3041
      %v3091 = vunpack.c.l.b16 %v3042
      %v3092 = vunpack.c.l.b16 %v3043
      %v3093 = vunpack.c.l.b16 %v3044
      %v3094 = vunpack.c.l.b16 %v3045
      %v3095 = vunpack.c.l.b16 %v3046
      %v3096 = vunpack.c.l.b16 %v3047
      %v3097 = vunpack.c.l.b16 %v3048
      %v3098 = vunpack.c.l.b16 %v3049
      %v3099 = vunpack.c.l.b16 %v3050
      %v3100 = vunpack.c.l.b16 %v3051
      %v3101 = vunpack.c.l.b16 %v3052
      %v3102 = vunpack.c.l.b16 %v3053
      %v3103 = vunpack.c.l.b16 %v3054
      %v3104 = vunpack.c.l.b16 %v3055
      %v3105 = vunpack.c.l.b16 %v3056
      %v3106 = vpack.c.b16 %v3091, %v3090
      %v3107 = vpack.c.b16 %v3093, %v3092
      %v3108 = vpack.c.b16 %v3095, %v3094
      %v3109 = vpack.c.b16 %v3097, %v3096
      %v3110 = vpack.c.b16 %v3099, %v3098
      %v3111 = vpack.c.b16 %v3101, %v3100
      %v3112 = vpack.c.b16 %v3103, %v3102
      %v3113 = vpack.c.b16 %v3105, %v3104
      %v3138 = vunpack.c.l.b16 %v3058
      %v3139 = vunpack.c.l.b16 %v3059
      %v3140 = vunpack.c.l.b16 %v3060
      %v3141 = vunpack.c.l.b16 %v3061
      %v3142 = vunpack.c.l.b16 %v3062
      %v3143 = vunpack.c.l.b16 %v3063
      %v3144 = vunpack.c.l.b16 %v3064
      %v3145 = vunpack.c.l.b16 %v3065
      %v3146 = vunpack.c.l.b16 %v3066
      %v3147 = vunpack.c.l.b16 %v3067
      %v3148 = vunpack.c.l.b16 %v3068
      %v3149 = vunpack.c.l.b16 %v3069
      %v3150 = vunpack.c.l.b16 %v3070
      %v3151 = vunpack.c.l.b16 %v3071
      %v3152 = vunpack.c.l.b16 %v3072
      %v3153 = vunpack.c.l.b16 %v3073
      %v3154 = vpack.c.b16 %v3139, %v3138
      %v3155 = vpack.c.b16 %v3141, %v3140
      %v3156 = vpack.c.b16 %v3143, %v3142
      %v3157 = vpack.c.b16 %v3145, %v3144
      %v3158 = vpack.c.b16 %v3147, %v3146
      %v3159 = vpack.c.b16 %v3149, %v3148
      %v3160 = vpack.c.b16 %v3151, %v3150
      %v3161 = vpack.c.b16 %v3153, %v3152
      %3170 = vmatprep.subr.bf16.mxu0 0
      %3171 = vmatpush1.bf16.msra.mxu0 %v3154
      %3172 = vmatprep.subr.bf16.mxu0 0
      %3173 = vmatpush1.bf16.msra.mxu0 %v3155
      %3174 = vmatprep.subr.bf16.mxu0 0
      %3175 = vmatpush1.bf16.msra.mxu0 %v3156
      %3176 = vmatprep.subr.bf16.mxu0 0
      %3177 = vmatpush1.bf16.msra.mxu0 %v3157
      %3178 = vmatprep.subr.bf16.mxu0 0
      %3179 = vmatpush1.bf16.msra.mxu0 %v3158
      %3180 = vmatprep.subr.bf16.mxu0 0
      %3181 = vmatpush1.bf16.msra.mxu0 %v3159
      %3182 = vmatprep.subr.bf16.mxu0 0
      %3183 = vmatpush1.bf16.msra.mxu0 %v3160
      %3184 = vmatprep.subr.bf16.mxu0 0
      %3185 = vmatpush1.bf16.msra.mxu0 %v3161
      %3186 = vmatprep.subr.bf16.mxu0 0
      %3187 = vmatpush1.bf16.msra.mxu0 0
      %3188 = vmatprep.subr.bf16.mxu0 0
      %3189 = vmatpush1.bf16.msra.mxu0 0
      %3190 = vmatprep.subr.bf16.mxu0 0
      %3191 = vmatpush1.bf16.msra.mxu0 0
      %3192 = vmatprep.subr.bf16.mxu0 0
      %3193 = vmatpush1.bf16.msra.mxu0 0
      %3194 = vmatprep.subr.bf16.mxu0 0
      %3195 = vmatpush1.bf16.msra.mxu0 0
      %3196 = vmatprep.subr.bf16.mxu0 0
      %3197 = vmatpush1.bf16.msra.mxu0 0
      %3198 = vmatprep.subr.bf16.mxu0 0
      %3199 = vmatpush1.bf16.msra.mxu0 0
      %3200 = vmatprep.subr.bf16.mxu0 0
      %3201 = vmatpush1.bf16.msra.mxu0 0
      %3202 = vmatprep.mubr.bf16.mxu0 0
      %3203 = vmatmul.mubr.bf16.gmra.mrb[0].mxu0 %v3106
      %v3204 = vpop.f32.mrb[0].mxu0
      %v3205 = vadd.f32 0.0, %v3204
      %v3206 = vpop.f32.mrb[0].mxu0
      %v3207 = vpop.f32.mrb[0].mxu0
      %v3208 = vadd.f32 0.0, %v3207
      %v3209 = vpop.f32.mrb[0].mxu0
      %3210 = vmatprep.mubr.bf16.mxu0 0
      %3211 = vmatmul.mubr.bf16.gmra.mrb[0].mxu0 %v3107
      %v3212 = vpop.f32.mrb[0].mxu0
      %v3213 = vadd.f32 0.0, %v3212
      %v3214 = vpop.f32.mrb[0].mxu0
      %v3215 = vpop.f32.mrb[0].mxu0
      %v3216 = vadd.f32 0.0, %v3215
      %v3217 = vpop.f32.mrb[0].mxu0
      %3218 = vmatprep.mubr.bf16.mxu0 0
      %3219 = vmatmul.mubr.bf16.gmra.mrb[0].mxu0 %v3108
      %v3220 = vpop.f32.mrb[0].mxu0
      %v3221 = vadd.f32 0.0, %v3220
      %v3222 = vpop.f32.mrb[0].mxu0
      %v3223 = vpop.f32.mrb[0].mxu0
      %v3224 = vadd.f32 0.0, %v3223
      %v3225 = vpop.f32.mrb[0].mxu0
      %3226 = vmatprep.mubr.bf16.mxu0 0
      %3227 = vmatmul.mubr.bf16.gmra.mrb[0].mxu0 %v3109
      %v3228 = vpop.f32.mrb[0].mxu0
      %v3229 = vadd.f32 0.0, %v3228
      %v3230 = vpop.f32.mrb[0].mxu0
      %v3231 = vpop.f32.mrb[0].mxu0
      %v3232 = vadd.f32 0.0, %v3231
      %v3233 = vpop.f32.mrb[0].mxu0
      %3234 = vmatprep.mubr.bf16.mxu0 0
      %3235 = vmatmul.mubr.bf16.gmra.mrb[0].mxu0 %v3110
      %v3236 = vpop.f32.mrb[0].mxu0
      %v3237 = vadd.f32 0.0, %v3236
      %v3238 = vpop.f32.mrb[0].mxu0
      %v3239 = vpop.f32.mrb[0].mxu0
      %v3240 = vadd.f32 0.0, %v3239
      %v3241 = vpop.f32.mrb[0].mxu0
      %3242 = vmatprep.mubr.bf16.mxu0 0
      %3243 = vmatmul.mubr.bf16.gmra.mrb[0].mxu0 %v3111
      %v3244 = vpop.f32.mrb[0].mxu0
      %v3245 = vadd.f32 0.0, %v3244
      %v3246 = vpop.f32.mrb[0].mxu0
      %v3247 = vpop.f32.mrb[0].mxu0
      %v3248 = vadd.f32 0.0, %v3247
      %v3249 = vpop.f32.mrb[0].mxu0
      %3250 = vmatprep.mubr.bf16.mxu0 0
      %3251 = vmatmul.mubr.bf16.gmra.mrb[0].mxu0 %v3112
      %v3252 = vpop.f32.mrb[0].mxu0
      %v3253 = vadd.f32 0.0, %v3252
      %v3254 = vpop.f32.mrb[0].mxu0
      %v3255 = vpop.f32.mrb[0].mxu0
      %v3256 = vadd.f32 0.0, %v3255
      %v3257 = vpop.f32.mrb[0].mxu0
      %3258 = vmatprep.mubr.bf16.mxu0 0
      %3259 = vmatmul.mubr.bf16.gmra.mrb[0].mxu0 %v3113
      %v3260 = vpop.f32.mrb[0].mxu0
      %v3261 = vadd.f32 0.0, %v3260
      %v3262 = vpop.f32.mrb[0].mxu0
      %v3263 = vpop.f32.mrb[0].mxu0
      %v3264 = vadd.f32 0.0, %v3263
      %v3265 = vpop.f32.mrb[0].mxu0
      %3266 = vdwg.mxu0
      %v3267 = vadd.f32 %v3024, %v3205
      %v3268 = vadd.f32 %v3025, %v3208
      %v3269 = vadd.f32 %v3026, %v3213
      %v3270 = vadd.f32 %v3027, %v3216
      %v3271 = vadd.f32 %v3028, %v3221
      %v3272 = vadd.f32 %v3029, %v3224
      %v3273 = vadd.f32 %v3030, %v3229
      %v3274 = vadd.f32 %v3031, %v3232
      %v3275 = vadd.f32 %v3032, %v3237
      %v3276 = vadd.f32 %v3033, %v3240
      %v3277 = vadd.f32 %v3034, %v3245
      %v3278 = vadd.f32 %v3035, %v3248
      %v3279 = vadd.f32 %v3036, %v3253
      %v3280 = vadd.f32 %v3037, %v3256
      %v3281 = vadd.f32 %v3038, %v3261
      %v3282 = vadd.f32 %v3039, %v3264
      %v3283 = vld [vmem:[%s3040] sm:$0xf]
      %v3284 = vld [vmem:[%s3040 + $0x4] sm:$0xf]
      %v3285 = vld [vmem:[%s3040 + $0x8] sm:$0x1]
      %v3286 = vld [vmem:[%s3040 + $0xc] sm:$0xf]
      %v3287 = vld [vmem:[%s3040 + $0x10] sm:$0xf]
      %v3288 = vld [vmem:[%s3040 + $0x14] sm:$0x1]
      %v3289 = vld [vmem:[%s3040 + $0x18] sm:$0xf]
      %v3290 = vld [vmem:[%s3040 + $0x1c] sm:$0xf]
      %v3291 = vld [vmem:[%s3040 + $0x20] sm:$0x1]
      %v3292 = vld [vmem:[%s3040 + $0x24] sm:$0xf]
      %v3293 = vld [vmem:[%s3040 + $0x28] sm:$0xf]
      %v3294 = vld [vmem:[%s3040 + $0x2c] sm:$0x1]
      %v3295 = vld [vmem:[%s3040 + $0x30] sm:$0xf]
      %v3296 = vld [vmem:[%s3040 + $0x34] sm:$0xf]
      %v3297 = vld [vmem:[%s3040 + $0x38] sm:$0x1]
      %v3298 = vld [vmem:[%s3040 + $0x3c] sm:$0xf]
      %v3299 = vld [vmem:[%s3040 + $0x40] sm:$0xf]
      %v3300 = vld [vmem:[%s3040 + $0x44] sm:$0x1]
      %v3301 = vld [vmem:[%s3040 + $0x48] sm:$0xf]
      %v3302 = vld [vmem:[%s3040 + $0x4c] sm:$0xf]
      %v3303 = vld [vmem:[%s3040 + $0x50] sm:$0x1]
      %v3304 = vld [vmem:[%s3040 + $0x54] sm:$0xf]
      %v3305 = vld [vmem:[%s3040 + $0x58] sm:$0xf]
      %v3306 = vld [vmem:[%s3040 + $0x5c] sm:$0x1]
      %v3308 = vshrl.u32 %v3283, 16
      %v3310 = vrot.slane %v3308, 4
      %v3311 = vshll.u32 %v3283, 16
      %v3313 = vrot.slane %v3311, 5
      %v3314 = vor.u32 %v3310, %v3313
      %v3315 = vrot.slane %v3314, 4
      %v3317 = vshll.u32 %v3284, 16
      %v3319 = vrot.slane %v3317, 5
      %v3320 = vsel %vm1200, %v3315, %v3319
      %v3321 = vshrl.u32 %v3284, 16
      %v3323 = vrot.slane %v3321, 4
      %v3324 = vor.u32 %v3323, %v3319
      %v3325 = vrot.slane %v3324, 4
      %v3327 = vshll.u32 %v3285, 16
      %v3329 = vrot.slane %v3327, 5
      %v3330 = vsel %vm1200, %v3325, %v3329
      %v3332 = vshrl.u32 %v3286, 16
      %v3334 = vrot.slane %v3332, 4
      %v3335 = vshll.u32 %v3286, 16
      %v3337 = vrot.slane %v3335, 5
      %v3338 = vor.u32 %v3334, %v3337
      %v3339 = vrot.slane %v3338, 4
      %v3341 = vshll.u32 %v3287, 16
      %v3343 = vrot.slane %v3341, 5
      %v3344 = vsel %vm1200, %v3339, %v3343
      %v3345 = vshrl.u32 %v3287, 16
      %v3347 = vrot.slane %v3345, 4
      %v3348 = vor.u32 %v3347, %v3343
      %v3349 = vrot.slane %v3348, 4
      %v3351 = vshll.u32 %v3288, 16
      %v3353 = vrot.slane %v3351, 5
      %v3354 = vsel %vm1200, %v3349, %v3353
      %v3356 = vshrl.u32 %v3289, 16
      %v3358 = vrot.slane %v3356, 4
      %v3359 = vshll.u32 %v3289, 16
      %v3361 = vrot.slane %v3359, 5
      %v3362 = vor.u32 %v3358, %v3361
      %v3363 = vrot.slane %v3362, 4
      %v3365 = vshll.u32 %v3290, 16
      %v3367 = vrot.slane %v3365, 5
      %v3368 = vsel %vm1200, %v3363, %v3367
      %v3369 = vshrl.u32 %v3290, 16
      %v3371 = vrot.slane %v3369, 4
      %v3372 = vor.u32 %v3371, %v3367
      %v3373 = vrot.slane %v3372, 4
      %v3375 = vshll.u32 %v3291, 16
      %v3377 = vrot.slane %v3375, 5
      %v3378 = vsel %vm1200, %v3373, %v3377
      %v3380 = vshrl.u32 %v3292, 16
      %v3382 = vrot.slane %v3380, 4
      %v3383 = vshll.u32 %v3292, 16
      %v3385 = vrot.slane %v3383, 5
      %v3386 = vor.u32 %v3382, %v3385
      %v3387 = vrot.slane %v3386, 4
      %v3389 = vshll.u32 %v3293, 16
      %v3391 = vrot.slane %v3389, 5
      %v3392 = vsel %vm1200, %v3387, %v3391
      %v3393 = vshrl.u32 %v3293, 16
      %v3395 = vrot.slane %v3393, 4
      %v3396 = vor.u32 %v3395, %v3391
      %v3397 = vrot.slane %v3396, 4
      %v3399 = vshll.u32 %v3294, 16
      %v3401 = vrot.slane %v3399, 5
      %v3402 = vsel %vm1200, %v3397, %v3401
      %v3404 = vshrl.u32 %v3295, 16
      %v3406 = vrot.slane %v3404, 4
      %v3407 = vshll.u32 %v3295, 16
      %v3409 = vrot.slane %v3407, 5
      %v3410 = vor.u32 %v3406, %v3409
      %v3411 = vrot.slane %v3410, 4
      %v3413 = vshll.u32 %v3296, 16
      %v3415 = vrot.slane %v3413, 5
      %v3416 = vsel %vm1200, %v3411, %v3415
      %v3417 = vshrl.u32 %v3296, 16
      %v3419 = vrot.slane %v3417, 4
      %v3420 = vor.u32 %v3419, %v3415
      %v3421 = vrot.slane %v3420, 4
      %v3423 = vshll.u32 %v3297, 16
      %v3425 = vrot.slane %v3423, 5
      %v3426 = vsel %vm1200, %v3421, %v3425
      %v3428 = vshrl.u32 %v3298, 16
      %v3430 = vrot.slane %v3428, 4
      %v3431 = vshll.u32 %v3298, 16
      %v3433 = vrot.slane %v3431, 5
      %v3434 = vor.u32 %v3430, %v3433
      %v3435 = vrot.slane %v3434, 4
      %v3437 = vshll.u32 %v3299, 16
      %v3439 = vrot.slane %v3437, 5
      %v3440 = vsel %vm1200, %v3435, %v3439
      %v3441 = vshrl.u32 %v3299, 16
      %v3443 = vrot.slane %v3441, 4
      %v3444 = vor.u32 %v3443, %v3439
      %v3445 = vrot.slane %v3444, 4
      %v3447 = vshll.u32 %v3300, 16
      %v3449 = vrot.slane %v3447, 5
      %v3450 = vsel %vm1200, %v3445, %v3449
      %v3452 = vshrl.u32 %v3301, 16
      %v3454 = vrot.slane %v3452, 4
      %v3455 = vshll.u32 %v3301, 16
      %v3457 = vrot.slane %v3455, 5
      %v3458 = vor.u32 %v3454, %v3457
      %v3459 = vrot.slane %v3458, 4
      %v3461 = vshll.u32 %v3302, 16
      %v3463 = vrot.slane %v3461, 5
      %v3464 = vsel %vm1200, %v3459, %v3463
      %v3465 = vshrl.u32 %v3302, 16
      %v3467 = vrot.slane %v3465, 4
      %v3468 = vor.u32 %v3467, %v3463
      %v3469 = vrot.slane %v3468, 4
      %v3471 = vshll.u32 %v3303, 16
      %v3473 = vrot.slane %v3471, 5
      %v3474 = vsel %vm1200, %v3469, %v3473
      %v3476 = vshrl.u32 %v3304, 16
      %v3478 = vrot.slane %v3476, 4
      %v3479 = vshll.u32 %v3304, 16
      %v3481 = vrot.slane %v3479, 5
      %v3482 = vor.u32 %v3478, %v3481
      %v3483 = vrot.slane %v3482, 4
      %v3485 = vshll.u32 %v3305, 16
      %v3487 = vrot.slane %v3485, 5
      %v3488 = vsel %vm1200, %v3483, %v3487
      %v3489 = vshrl.u32 %v3305, 16
      %v3491 = vrot.slane %v3489, 4
      %v3492 = vor.u32 %v3491, %v3487
      %v3493 = vrot.slane %v3492, 4
      %v3495 = vshll.u32 %v3306, 16
      %v3497 = vrot.slane %v3495, 5
      %v3498 = vsel %vm1200, %v3493, %v3497
      %s3499 = scalar_lea.vmem %s4, 448
      %v3500 = vld [vmem:[%s3499] sm:$0xf]
      %v3501 = vld [vmem:[%s3499 + $0x4] sm:$0xf]
      %v3502 = vld [vmem:[%s3499 + $0x8] sm:$0xf]
      %v3503 = vld [vmem:[%s3499 + $0xc] sm:$0xf]
      %v3504 = vld [vmem:[%s3499 + $0x10] sm:$0xf]
      %v3505 = vld [vmem:[%s3499 + $0x14] sm:$0xf]
      %v3506 = vld [vmem:[%s3499 + $0x18] sm:$0xf]
      %v3507 = vld [vmem:[%s3499 + $0x1c] sm:$0xf]
      %v3508 = vld [vmem:[%s3499 + $0x20] sm:$0xf]
      %v3509 = vld [vmem:[%s3499 + $0x24] sm:$0xf]
      %v3510 = vld [vmem:[%s3499 + $0x28] sm:$0xf]
      %v3511 = vld [vmem:[%s3499 + $0x2c] sm:$0xf]
      %v3512 = vld [vmem:[%s3499 + $0x30] sm:$0xf]
      %v3513 = vld [vmem:[%s3499 + $0x34] sm:$0xf]
      %v3514 = vld [vmem:[%s3499 + $0x38] sm:$0xf]
      %v3515 = vld [vmem:[%s3499 + $0x3c] sm:$0xf]
      %v3516 = vunpack.c.l.b16 %v3320
      %v3517 = vunpack.c.l.b16 %v3330
      %v3518 = vunpack.c.l.b16 %v3344
      %v3519 = vunpack.c.l.b16 %v3354
      %v3520 = vunpack.c.l.b16 %v3368
      %v3521 = vunpack.c.l.b16 %v3378
      %v3522 = vunpack.c.l.b16 %v3392
      %v3523 = vunpack.c.l.b16 %v3402
      %v3524 = vunpack.c.l.b16 %v3416
      %v3525 = vunpack.c.l.b16 %v3426
      %v3526 = vunpack.c.l.b16 %v3440
      %v3527 = vunpack.c.l.b16 %v3450
      %v3528 = vunpack.c.l.b16 %v3464
      %v3529 = vunpack.c.l.b16 %v3474
      %v3530 = vunpack.c.l.b16 %v3488
      %v3531 = vunpack.c.l.b16 %v3498
      %v3532 = vpack.c.b16 %v3517, %v3516
      %v3533 = vpack.c.b16 %v3519, %v3518
      %v3534 = vpack.c.b16 %v3521, %v3520
      %v3535 = vpack.c.b16 %v3523, %v3522
      %v3536 = vpack.c.b16 %v3525, %v3524
      %v3537 = vpack.c.b16 %v3527, %v3526
      %v3538 = vpack.c.b16 %v3529, %v3528
      %v3539 = vpack.c.b16 %v3531, %v3530
      %v3564 = vunpack.c.l.b16 %v3500
      %v3565 = vunpack.c.l.b16 %v3501
      %v3566 = vunpack.c.l.b16 %v3502
      %v3567 = vunpack.c.l.b16 %v3503
      %v3568 = vunpack.c.l.b16 %v3504
      %v3569 = vunpack.c.l.b16 %v3505
      %v3570 = vunpack.c.l.b16 %v3506
      %v3571 = vunpack.c.l.b16 %v3507
      %v3572 = vunpack.c.l.b16 %v3508
      %v3573 = vunpack.c.l.b16 %v3509
      %v3574 = vunpack.c.l.b16 %v3510
      %v3575 = vunpack.c.l.b16 %v3511
      %v3576 = vunpack.c.l.b16 %v3512
      %v3577 = vunpack.c.l.b16 %v3513
      %v3578 = vunpack.c.l.b16 %v3514
      %v3579 = vunpack.c.l.b16 %v3515
      %v3580 = vpack.c.b16 %v3565, %v3564
      %v3581 = vpack.c.b16 %v3567, %v3566
      %v3582 = vpack.c.b16 %v3569, %v3568
      %v3583 = vpack.c.b16 %v3571, %v3570
      %v3584 = vpack.c.b16 %v3573, %v3572
      %v3585 = vpack.c.b16 %v3575, %v3574
      %v3586 = vpack.c.b16 %v3577, %v3576
      %v3587 = vpack.c.b16 %v3579, %v3578
      %3596 = vmatprep.subr.bf16.mxu0 0
      %3597 = vmatpush1.bf16.msra.mxu0 %v3580
      %3598 = vmatprep.subr.bf16.mxu0 0
      %3599 = vmatpush1.bf16.msra.mxu0 %v3581
      %3600 = vmatprep.subr.bf16.mxu0 0
      %3601 = vmatpush1.bf16.msra.mxu0 %v3582
      %3602 = vmatprep.subr.bf16.mxu0 0
      %3603 = vmatpush1.bf16.msra.mxu0 %v3583
      %3604 = vmatprep.subr.bf16.mxu0 0
      %3605 = vmatpush1.bf16.msra.mxu0 %v3584
      %3606 = vmatprep.subr.bf16.mxu0 0
      %3607 = vmatpush1.bf16.msra.mxu0 %v3585
      %3608 = vmatprep.subr.bf16.mxu0 0
      %3609 = vmatpush1.bf16.msra.mxu0 %v3586
      %3610 = vmatprep.subr.bf16.mxu0 0
      %3611 = vmatpush1.bf16.msra.mxu0 %v3587
      %3612 = vmatprep.subr.bf16.mxu0 0
      %3613 = vmatpush1.bf16.msra.mxu0 0
      %3614 = vmatprep.subr.bf16.mxu0 0
      %3615 = vmatpush1.bf16.msra.mxu0 0
      %3616 = vmatprep.subr.bf16.mxu0 0
      %3617 = vmatpush1.bf16.msra.mxu0 0
      %3618 = vmatprep.subr.bf16.mxu0 0
      %3619 = vmatpush1.bf16.msra.mxu0 0
      %3620 = vmatprep.subr.bf16.mxu0 0
      %3621 = vmatpush1.bf16.msra.mxu0 0
      %3622 = vmatprep.subr.bf16.mxu0 0
      %3623 = vmatpush1.bf16.msra.mxu0 0
      %3624 = vmatprep.subr.bf16.mxu0 0
      %3625 = vmatpush1.bf16.msra.mxu0 0
      %3626 = vmatprep.subr.bf16.mxu0 0
      %3627 = vmatpush1.bf16.msra.mxu0 0
      %3628 = vmatprep.mubr.bf16.mxu0 0
      %3629 = vmatmul.mubr.bf16.gmra.mrb[0].mxu0 %v3532
      %v3630 = vpop.f32.mrb[0].mxu0
      %v3631 = vadd.f32 0.0, %v3630
      %v3632 = vpop.f32.mrb[0].mxu0
      %v3633 = vpop.f32.mrb[0].mxu0
      %v3634 = vadd.f32 0.0, %v3633
      %v3635 = vpop.f32.mrb[0].mxu0
      %3636 = vmatprep.mubr.bf16.mxu0 0
      %3637 = vmatmul.mubr.bf16.gmra.mrb[0].mxu0 %v3533
      %v3638 = vpop.f32.mrb[0].mxu0
      %v3639 = vadd.f32 0.0, %v3638
      %v3640 = vpop.f32.mrb[0].mxu0
      %v3641 = vpop.f32.mrb[0].mxu0
      %v3642 = vadd.f32 0.0, %v3641
      %v3643 = vpop.f32.mrb[0].mxu0
      %3644 = vmatprep.mubr.bf16.mxu0 0
      %3645 = vmatmul.mubr.bf16.gmra.mrb[0].mxu0 %v3534
      %v3646 = vpop.f32.mrb[0].mxu0
      %v3647 = vadd.f32 0.0, %v3646
      %v3648 = vpop.f32.mrb[0].mxu0
      %v3649 = vpop.f32.mrb[0].mxu0
      %v3650 = vadd.f32 0.0, %v3649
      %v3651 = vpop.f32.mrb[0].mxu0
      %3652 = vmatprep.mubr.bf16.mxu0 0
      %3653 = vmatmul.mubr.bf16.gmra.mrb[0].mxu0 %v3535
      %v3654 = vpop.f32.mrb[0].mxu0
      %v3655 = vadd.f32 0.0, %v3654
      %v3656 = vpop.f32.mrb[0].mxu0
      %v3657 = vpop.f32.mrb[0].mxu0
      %v3658 = vadd.f32 0.0, %v3657
      %v3659 = vpop.f32.mrb[0].mxu0
      %3660 = vmatprep.mubr.bf16.mxu0 0
      %3661 = vmatmul.mubr.bf16.gmra.mrb[0].mxu0 %v3536
      %v3662 = vpop.f32.mrb[0].mxu0
      %v3663 = vadd.f32 0.0, %v3662
      %v3664 = vpop.f32.mrb[0].mxu0
      %v3665 = vpop.f32.mrb[0].mxu0
      %v3666 = vadd.f32 0.0, %v3665
      %v3667 = vpop.f32.mrb[0].mxu0
      %3668 = vmatprep.mubr.bf16.mxu0 0
      %3669 = vmatmul.mubr.bf16.gmra.mrb[0].mxu0 %v3537
      %v3670 = vpop.f32.mrb[0].mxu0
      %v3671 = vadd.f32 0.0, %v3670
      %v3672 = vpop.f32.mrb[0].mxu0
      %v3673 = vpop.f32.mrb[0].mxu0
      %v3674 = vadd.f32 0.0, %v3673
      %v3675 = vpop.f32.mrb[0].mxu0
      %3676 = vmatprep.mubr.bf16.mxu0 0
      %3677 = vmatmul.mubr.bf16.gmra.mrb[0].mxu0 %v3538
      %v3678 = vpop.f32.mrb[0].mxu0
      %v3679 = vadd.f32 0.0, %v3678
      %v3680 = vpop.f32.mrb[0].mxu0
      %v3681 = vpop.f32.mrb[0].mxu0
      %v3682 = vadd.f32 0.0, %v3681
      %v3683 = vpop.f32.mrb[0].mxu0
      %3684 = vmatprep.mubr.bf16.mxu0 0
      %3685 = vmatmul.mubr.bf16.gmra.mrb[0].mxu0 %v3539
      %v3686 = vpop.f32.mrb[0].mxu0
      %v3687 = vadd.f32 0.0, %v3686
      %v3688 = vpop.f32.mrb[0].mxu0
      %v3689 = vpop.f32.mrb[0].mxu0
      %v3690 = vadd.f32 0.0, %v3689
      %v3691 = vpop.f32.mrb[0].mxu0
      %3692 = vdwg.mxu0
      %v3693 = vadd.f32 %v3267, %v3631
      %v3694 = vadd.f32 %v3268, %v3634
      %v3695 = vadd.f32 %v3269, %v3639
      %v3696 = vadd.f32 %v3270, %v3642
      %v3697 = vadd.f32 %v3271, %v3647
      %v3698 = vadd.f32 %v3272, %v3650
      %v3699 = vadd.f32 %v3273, %v3655
      %v3700 = vadd.f32 %v3274, %v3658
      %v3701 = vadd.f32 %v3275, %v3663
      %v3702 = vadd.f32 %v3276, %v3666
      %v3703 = vadd.f32 %v3277, %v3671
      %v3704 = vadd.f32 %v3278, %v3674
      %v3705 = vadd.f32 %v3279, %v3679
      %v3706 = vadd.f32 %v3280, %v3682
      %v3707 = vadd.f32 %v3281, %v3687
      %v3708 = vadd.f32 %v3282, %v3690
      %v3709 = vld [vmem:[%s3040] sm:$0xe]
      %v3710 = vld [vmem:[%s3040 + $0xc] sm:$0xe]
      %v3711 = vld [vmem:[%s3040 + $0x18] sm:$0xe]
      %v3712 = vld [vmem:[%s3040 + $0x24] sm:$0xe]
      %v3713 = vld [vmem:[%s3040 + $0x30] sm:$0xe]
      %v3714 = vld [vmem:[%s3040 + $0x3c] sm:$0xe]
      %v3715 = vld [vmem:[%s3040 + $0x48] sm:$0xe]
      %v3716 = vld [vmem:[%s3040 + $0x54] sm:$0xe]
      %v3741 = vrot.slane %v3709, 5
      %v3742 = vrot.slane %v3741, 4
      %v3743 = vrot.slane %v3284, 5
      %v3744 = vsel %vm1806, %v3742, %v3743
      %v3745 = vrot.slane %v3743, 4
      %v3746 = vrot.slane %v3285, 5
      %v3747 = vsel %vm1806, %v3745, %v3746
      %v3748 = vrot.slane %v3710, 5
      %v3749 = vrot.slane %v3748, 4
      %v3750 = vrot.slane %v3287, 5
      %v3751 = vsel %vm1806, %v3749, %v3750
      %v3752 = vrot.slane %v3750, 4
      %v3753 = vrot.slane %v3288, 5
      %v3754 = vsel %vm1806, %v3752, %v3753
      %v3755 = vrot.slane %v3711, 5
      %v3756 = vrot.slane %v3755, 4
      %v3757 = vrot.slane %v3290, 5
      %v3758 = vsel %vm1806, %v3756, %v3757
      %v3759 = vrot.slane %v3757, 4
      %v3760 = vrot.slane %v3291, 5
      %v3761 = vsel %vm1806, %v3759, %v3760
      %v3762 = vrot.slane %v3712, 5
      %v3763 = vrot.slane %v3762, 4
      %v3764 = vrot.slane %v3293, 5
      %v3765 = vsel %vm1806, %v3763, %v3764
      %v3766 = vrot.slane %v3764, 4
      %v3767 = vrot.slane %v3294, 5
      %v3768 = vsel %vm1806, %v3766, %v3767
      %v3769 = vrot.slane %v3713, 5
      %v3770 = vrot.slane %v3769, 4
      %v3771 = vrot.slane %v3296, 5
      %v3772 = vsel %vm1806, %v3770, %v3771
      %v3773 = vrot.slane %v3771, 4
      %v3774 = vrot.slane %v3297, 5
      %v3775 = vsel %vm1806, %v3773, %v3774
      %v3776 = vrot.slane %v3714, 5
      %v3777 = vrot.slane %v3776, 4
      %v3778 = vrot.slane %v3299, 5
      %v3779 = vsel %vm1806, %v3777, %v3778
      %v3780 = vrot.slane %v3778, 4
      %v3781 = vrot.slane %v3300, 5
      %v3782 = vsel %vm1806, %v3780, %v3781
      %v3783 = vrot.slane %v3715, 5
      %v3784 = vrot.slane %v3783, 4
      %v3785 = vrot.slane %v3302, 5
      %v3786 = vsel %vm1806, %v3784, %v3785
      %v3787 = vrot.slane %v3785, 4
      %v3788 = vrot.slane %v3303, 5
      %v3789 = vsel %vm1806, %v3787, %v3788
      %v3790 = vrot.slane %v3716, 5
      %v3791 = vrot.slane %v3790, 4
      %v3792 = vrot.slane %v3305, 5
      %v3793 = vsel %vm1806, %v3791, %v3792
      %v3794 = vrot.slane %v3792, 4
      %v3795 = vrot.slane %v3306, 5
      %v3796 = vsel %vm1806, %v3794, %v3795
      %s3797 = scalar_lea.vmem %s4, 512
      %v3798 = vld [vmem:[%s3797] sm:$0xf]
      %v3799 = vld [vmem:[%s3797 + $0x4] sm:$0xf]
      %v3800 = vld [vmem:[%s3797 + $0x8] sm:$0xf]
      %v3801 = vld [vmem:[%s3797 + $0xc] sm:$0xf]
      %v3802 = vld [vmem:[%s3797 + $0x10] sm:$0xf]
      %v3803 = vld [vmem:[%s3797 + $0x14] sm:$0xf]
      %v3804 = vld [vmem:[%s3797 + $0x18] sm:$0xf]
      %v3805 = vld [vmem:[%s3797 + $0x1c] sm:$0xf]
      %v3806 = vld [vmem:[%s3797 + $0x20] sm:$0xf]
      %v3807 = vld [vmem:[%s3797 + $0x24] sm:$0xf]
      %v3808 = vld [vmem:[%s3797 + $0x28] sm:$0xf]
      %v3809 = vld [vmem:[%s3797 + $0x2c] sm:$0xf]
      %v3810 = vld [vmem:[%s3797 + $0x30] sm:$0xf]
      %v3811 = vld [vmem:[%s3797 + $0x34] sm:$0xf]
      %v3812 = vld [vmem:[%s3797 + $0x38] sm:$0xf]
      %v3813 = vld [vmem:[%s3797 + $0x3c] sm:$0xf]
      %v3814 = vunpack.c.l.b16 %v3744
      %v3815 = vunpack.c.l.b16 %v3747
      %v3816 = vunpack.c.l.b16 %v3751
      %v3817 = vunpack.c.l.b16 %v3754
      %v3818 = vunpack.c.l.b16 %v3758
      %v3819 = vunpack.c.l.b16 %v3761
      %v3820 = vunpack.c.l.b16 %v3765
      %v3821 = vunpack.c.l.b16 %v3768
      %v3822 = vunpack.c.l.b16 %v3772
      %v3823 = vunpack.c.l.b16 %v3775
      %v3824 = vunpack.c.l.b16 %v3779
      %v3825 = vunpack.c.l.b16 %v3782
      %v3826 = vunpack.c.l.b16 %v3786
      %v3827 = vunpack.c.l.b16 %v3789
      %v3828 = vunpack.c.l.b16 %v3793
      %v3829 = vunpack.c.l.b16 %v3796
      %v3830 = vpack.c.b16 %v3815, %v3814
      %v3831 = vpack.c.b16 %v3817, %v3816
      %v3832 = vpack.c.b16 %v3819, %v3818
      %v3833 = vpack.c.b16 %v3821, %v3820
      %v3834 = vpack.c.b16 %v3823, %v3822
      %v3835 = vpack.c.b16 %v3825, %v3824
      %v3836 = vpack.c.b16 %v3827, %v3826
      %v3837 = vpack.c.b16 %v3829, %v3828
      %v3862 = vunpack.c.l.b16 %v3798
      %v3863 = vunpack.c.l.b16 %v3799
      %v3864 = vunpack.c.l.b16 %v3800
      %v3865 = vunpack.c.l.b16 %v3801
      %v3866 = vunpack.c.l.b16 %v3802
      %v3867 = vunpack.c.l.b16 %v3803
      %v3868 = vunpack.c.l.b16 %v3804
      %v3869 = vunpack.c.l.b16 %v3805
      %v3870 = vunpack.c.l.b16 %v3806
      %v3871 = vunpack.c.l.b16 %v3807
      %v3872 = vunpack.c.l.b16 %v3808
      %v3873 = vunpack.c.l.b16 %v3809
      %v3874 = vunpack.c.l.b16 %v3810
      %v3875 = vunpack.c.l.b16 %v3811
      %v3876 = vunpack.c.l.b16 %v3812
      %v3877 = vunpack.c.l.b16 %v3813
      %v3878 = vpack.c.b16 %v3863, %v3862
      %v3879 = vpack.c.b16 %v3865, %v3864
      %v3880 = vpack.c.b16 %v3867, %v3866
      %v3881 = vpack.c.b16 %v3869, %v3868
      %v3882 = vpack.c.b16 %v3871, %v3870
      %v3883 = vpack.c.b16 %v3873, %v3872
      %v3884 = vpack.c.b16 %v3875, %v3874
      %v3885 = vpack.c.b16 %v3877, %v3876
      %3894 = vmatprep.subr.bf16.mxu0 0
      %3895 = vmatpush1.bf16.msra.mxu0 %v3878
      %3896 = vmatprep.subr.bf16.mxu0 0
      %3897 = vmatpush1.bf16.msra.mxu0 %v3879
      %3898 = vmatprep.subr.bf16.mxu0 0
      %3899 = vmatpush1.bf16.msra.mxu0 %v3880
      %3900 = vmatprep.subr.bf16.mxu0 0
      %3901 = vmatpush1.bf16.msra.mxu0 %v3881
      %3902 = vmatprep.subr.bf16.mxu0 0
      %3903 = vmatpush1.bf16.msra.mxu0 %v3882
      %3904 = vmatprep.subr.bf16.mxu0 0
      %3905 = vmatpush1.bf16.msra.mxu0 %v3883
      %3906 = vmatprep.subr.bf16.mxu0 0
      %3907 = vmatpush1.bf16.msra.mxu0 %v3884
      %3908 = vmatprep.subr.bf16.mxu0 0
      %3909 = vmatpush1.bf16.msra.mxu0 %v3885
      %3910 = vmatprep.subr.bf16.mxu0 0
      %3911 = vmatpush1.bf16.msra.mxu0 0
      %3912 = vmatprep.subr.bf16.mxu0 0
      %3913 = vmatpush1.bf16.msra.mxu0 0
      %3914 = vmatprep.subr.bf16.mxu0 0
      %3915 = vmatpush1.bf16.msra.mxu0 0
      %3916 = vmatprep.subr.bf16.mxu0 0
      %3917 = vmatpush1.bf16.msra.mxu0 0
      %3918 = vmatprep.subr.bf16.mxu0 0
      %3919 = vmatpush1.bf16.msra.mxu0 0
      %3920 = vmatprep.subr.bf16.mxu0 0
      %3921 = vmatpush1.bf16.msra.mxu0 0
      %3922 = vmatprep.subr.bf16.mxu0 0
      %3923 = vmatpush1.bf16.msra.mxu0 0
      %3924 = vmatprep.subr.bf16.mxu0 0
      %3925 = vmatpush1.bf16.msra.mxu0 0
      %3926 = vmatprep.mubr.bf16.mxu0 0
      %3927 = vmatmul.mubr.bf16.gmra.mrb[0].mxu0 %v3830
      %v3928 = vpop.f32.mrb[0].mxu0
      %v3929 = vadd.f32 0.0, %v3928
      %v3930 = vpop.f32.mrb[0].mxu0
      %v3931 = vpop.f32.mrb[0].mxu0
      %v3932 = vadd.f32 0.0, %v3931
      %v3933 = vpop.f32.mrb[0].mxu0
      %3934 = vmatprep.mubr.bf16.mxu0 0
      %3935 = vmatmul.mubr.bf16.gmra.mrb[0].mxu0 %v3831
      %v3936 = vpop.f32.mrb[0].mxu0
      %v3937 = vadd.f32 0.0, %v3936
      %v3938 = vpop.f32.mrb[0].mxu0
      %v3939 = vpop.f32.mrb[0].mxu0
      %v3940 = vadd.f32 0.0, %v3939
      %v3941 = vpop.f32.mrb[0].mxu0
      %3942 = vmatprep.mubr.bf16.mxu0 0
      %3943 = vmatmul.mubr.bf16.gmra.mrb[0].mxu0 %v3832
      %v3944 = vpop.f32.mrb[0].mxu0
      %v3945 = vadd.f32 0.0, %v3944
      %v3946 = vpop.f32.mrb[0].mxu0
      %v3947 = vpop.f32.mrb[0].mxu0
      %v3948 = vadd.f32 0.0, %v3947
      %v3949 = vpop.f32.mrb[0].mxu0
      %3950 = vmatprep.mubr.bf16.mxu0 0
      %3951 = vmatmul.mubr.bf16.gmra.mrb[0].mxu0 %v3833
      %v3952 = vpop.f32.mrb[0].mxu0
      %v3953 = vadd.f32 0.0, %v3952
      %v3954 = vpop.f32.mrb[0].mxu0
      %v3955 = vpop.f32.mrb[0].mxu0
      %v3956 = vadd.f32 0.0, %v3955
      %v3957 = vpop.f32.mrb[0].mxu0
      %3958 = vmatprep.mubr.bf16.mxu0 0
      %3959 = vmatmul.mubr.bf16.gmra.mrb[0].mxu0 %v3834
      %v3960 = vpop.f32.mrb[0].mxu0
      %v3961 = vadd.f32 0.0, %v3960
      %v3962 = vpop.f32.mrb[0].mxu0
      %v3963 = vpop.f32.mrb[0].mxu0
      %v3964 = vadd.f32 0.0, %v3963
      %v3965 = vpop.f32.mrb[0].mxu0
      %3966 = vmatprep.mubr.bf16.mxu0 0
      %3967 = vmatmul.mubr.bf16.gmra.mrb[0].mxu0 %v3835
      %v3968 = vpop.f32.mrb[0].mxu0
      %v3969 = vadd.f32 0.0, %v3968
      %v3970 = vpop.f32.mrb[0].mxu0
      %v3971 = vpop.f32.mrb[0].mxu0
      %v3972 = vadd.f32 0.0, %v3971
      %v3973 = vpop.f32.mrb[0].mxu0
      %3974 = vmatprep.mubr.bf16.mxu0 0
      %3975 = vmatmul.mubr.bf16.gmra.mrb[0].mxu0 %v3836
      %v3976 = vpop.f32.mrb[0].mxu0
      %v3977 = vadd.f32 0.0, %v3976
      %v3978 = vpop.f32.mrb[0].mxu0
      %v3979 = vpop.f32.mrb[0].mxu0
      %v3980 = vadd.f32 0.0, %v3979
      %v3981 = vpop.f32.mrb[0].mxu0
      %3982 = vmatprep.mubr.bf16.mxu0 0
      %3983 = vmatmul.mubr.bf16.gmra.mrb[0].mxu0 %v3837
      %v3984 = vpop.f32.mrb[0].mxu0
      %v3985 = vadd.f32 0.0, %v3984
      %v3986 = vpop.f32.mrb[0].mxu0
      %v3987 = vpop.f32.mrb[0].mxu0
      %v3988 = vadd.f32 0.0, %v3987
      %v3989 = vpop.f32.mrb[0].mxu0
      %3990 = vdwg.mxu0
      %v3991 = vadd.f32 %v3693, %v3929
      %v3992 = vadd.f32 %v3694, %v3932
      %v3993 = vadd.f32 %v3695, %v3937
      %v3994 = vadd.f32 %v3696, %v3940
      %v3995 = vadd.f32 %v3697, %v3945
      %v3996 = vadd.f32 %v3698, %v3948
      %v3997 = vadd.f32 %v3699, %v3953
      %v3998 = vadd.f32 %v3700, %v3956
      %v3999 = vadd.f32 %v3701, %v3961
      %v4000 = vadd.f32 %v3702, %v3964
      %v4001 = vadd.f32 %v3703, %v3969
      %v4002 = vadd.f32 %v3704, %v3972
      %v4003 = vadd.f32 %v3705, %v3977
      %v4004 = vadd.f32 %v3706, %v3980
      %v4005 = vadd.f32 %v3707, %v3985
      %v4006 = vadd.f32 %v3708, %v3988
      %v4007 = vld [vmem:[%s5] sm:$0x1]
      %v4009 = vlaneseq
      %v4010 = vshrl.u32 %v4009, 7
      %v4011 = vsub.s32 0, %v4010
      %v4012 = vrot.slane %v4007, %v4011
      %v4014 = vmul.f32 %v3991, %v4012
      %v4015 = vmul.f32 %v3992, %v4012
      %v4016 = vmul.f32 %v3993, %v4012
      %v4017 = vmul.f32 %v3994, %v4012
      %v4018 = vmul.f32 %v3995, %v4012
      %v4019 = vmul.f32 %v3996, %v4012
      %v4020 = vmul.f32 %v3997, %v4012
      %v4021 = vmul.f32 %v3998, %v4012
      %v4022 = vmul.f32 %v3999, %v4012
      %v4023 = vmul.f32 %v4000, %v4012
      %v4024 = vmul.f32 %v4001, %v4012
      %v4025 = vmul.f32 %v4002, %v4012
      %v4026 = vmul.f32 %v4003, %v4012
      %v4027 = vmul.f32 %v4004, %v4012
      %v4028 = vmul.f32 %v4005, %v4012
      %v4029 = vmul.f32 %v4006, %v4012
      %v4030 = vld [vmem:[%s6] sm:$0x1]
      %v4032 = vlaneseq
      %v4033 = vshrl.u32 %v4032, 7
      %v4034 = vsub.s32 0, %v4033
      %v4035 = vrot.slane %v4030, %v4034
      %v4037 = vadd.f32 %v4014, %v4035
      %v4038 = vadd.f32 %v4015, %v4035
      %v4039 = vadd.f32 %v4016, %v4035
      %v4040 = vadd.f32 %v4017, %v4035
      %v4041 = vadd.f32 %v4018, %v4035
      %v4042 = vadd.f32 %v4019, %v4035
      %v4043 = vadd.f32 %v4020, %v4035
      %v4044 = vadd.f32 %v4021, %v4035
      %v4045 = vadd.f32 %v4022, %v4035
      %v4046 = vadd.f32 %v4023, %v4035
      %v4047 = vadd.f32 %v4024, %v4035
      %v4048 = vadd.f32 %v4025, %v4035
      %v4049 = vadd.f32 %v4026, %v4035
      %v4050 = vadd.f32 %v4027, %v4035
      %v4051 = vadd.f32 %v4028, %v4035
      %v4052 = vadd.f32 %v4029, %v4035
      %v4053 = vmax.f32 %v4037, 0.0
      %v4054 = vmax.f32 %v4038, 0.0
      %v4055 = vmax.f32 %v4039, 0.0
      %v4056 = vmax.f32 %v4040, 0.0
      %v4057 = vmax.f32 %v4041, 0.0
      %v4058 = vmax.f32 %v4042, 0.0
      %v4059 = vmax.f32 %v4043, 0.0
      %v4060 = vmax.f32 %v4044, 0.0
      %v4061 = vmax.f32 %v4045, 0.0
      %v4062 = vmax.f32 %v4046, 0.0
      %v4063 = vmax.f32 %v4047, 0.0
      %v4064 = vmax.f32 %v4048, 0.0
      %v4065 = vmax.f32 %v4049, 0.0
      %v4066 = vmax.f32 %v4050, 0.0
      %v4067 = vmax.f32 %v4051, 0.0
      %v4068 = vmax.f32 %v4052, 0.0
      %v4069 = vpack.c.bf16 %v4054, %v4053
      %v4070 = vpack.c.bf16 %v4056, %v4055
      %v4071 = vpack.c.bf16 %v4058, %v4057
      %v4072 = vpack.c.bf16 %v4060, %v4059
      %v4073 = vpack.c.bf16 %v4062, %v4061
      %v4074 = vpack.c.bf16 %v4064, %v4063
      %v4075 = vpack.c.bf16 %v4066, %v4065
      %v4076 = vpack.c.bf16 %v4068, %v4067
      %v4077 = vld [vmem:[%s7] sm:$0xf]
      %v4078 = vld [vmem:[%s7 + $0x4] sm:$0xf]
      %v4079 = vld [vmem:[%s7 + $0x8] sm:$0xf]
      %v4080 = vld [vmem:[%s7 + $0xc] sm:$0xf]
      %v4081 = vld [vmem:[%s7 + $0x10] sm:$0xf]
      %v4082 = vld [vmem:[%s7 + $0x14] sm:$0xf]
      %v4083 = vld [vmem:[%s7 + $0x18] sm:$0xf]
      %v4084 = vld [vmem:[%s7 + $0x1c] sm:$0xf]
      %v4085 = vld [vmem:[%s7 + $0x20] sm:$0xf]
      %v4086 = vld [vmem:[%s7 + $0x24] sm:$0xf]
      %v4087 = vld [vmem:[%s7 + $0x28] sm:$0xf]
      %v4088 = vld [vmem:[%s7 + $0x2c] sm:$0xf]
      %v4089 = vld [vmem:[%s7 + $0x30] sm:$0xf]
      %v4090 = vld [vmem:[%s7 + $0x34] sm:$0xf]
      %v4091 = vld [vmem:[%s7 + $0x38] sm:$0xf]
      %v4092 = vld [vmem:[%s7 + $0x3c] sm:$0xf]
      %v4109 = vunpack.c.l.b16 %v4077
      %v4110 = vunpack.c.l.b16 %v4078
      %v4111 = vunpack.c.l.b16 %v4079
      %v4112 = vunpack.c.l.b16 %v4080
      %v4113 = vunpack.c.l.b16 %v4081
      %v4114 = vunpack.c.l.b16 %v4082
      %v4115 = vunpack.c.l.b16 %v4083
      %v4116 = vunpack.c.l.b16 %v4084
      %v4117 = vunpack.c.l.b16 %v4085
      %v4118 = vunpack.c.l.b16 %v4086
      %v4119 = vunpack.c.l.b16 %v4087
      %v4120 = vunpack.c.l.b16 %v4088
      %v4121 = vunpack.c.l.b16 %v4089
      %v4122 = vunpack.c.l.b16 %v4090
      %v4123 = vunpack.c.l.b16 %v4091
      %v4124 = vunpack.c.l.b16 %v4092
      %v4125 = vpack.c.b16 %v4110, %v4109
      %v4126 = vpack.c.b16 %v4112, %v4111
      %v4127 = vpack.c.b16 %v4114, %v4113
      %v4128 = vpack.c.b16 %v4116, %v4115
      %v4129 = vpack.c.b16 %v4118, %v4117
      %v4130 = vpack.c.b16 %v4120, %v4119
      %v4131 = vpack.c.b16 %v4122, %v4121
      %v4132 = vpack.c.b16 %v4124, %v4123
      %4141 = vmatprep.subr.bf16.mxu0 0
      %4142 = vmatpush1.bf16.msra.mxu0 %v4125
      %4143 = vmatprep.subr.bf16.mxu0 0
      %4144 = vmatpush1.bf16.msra.mxu0 %v4126
      %4145 = vmatprep.subr.bf16.mxu0 0
      %4146 = vmatpush1.bf16.msra.mxu0 %v4127
      %4147 = vmatprep.subr.bf16.mxu0 0
      %4148 = vmatpush1.bf16.msra.mxu0 %v4128
      %4149 = vmatprep.subr.bf16.mxu0 0
      %4150 = vmatpush1.bf16.msra.mxu0 %v4129
      %4151 = vmatprep.subr.bf16.mxu0 0
      %4152 = vmatpush1.bf16.msra.mxu0 %v4130
      %4153 = vmatprep.subr.bf16.mxu0 0
      %4154 = vmatpush1.bf16.msra.mxu0 %v4131
      %4155 = vmatprep.subr.bf16.mxu0 0
      %4156 = vmatpush1.bf16.msra.mxu0 %v4132
      %4157 = vmatprep.subr.bf16.mxu0 0
      %4158 = vmatpush1.bf16.msra.mxu0 0
      %4159 = vmatprep.subr.bf16.mxu0 0
      %4160 = vmatpush1.bf16.msra.mxu0 0
      %4161 = vmatprep.subr.bf16.mxu0 0
      %4162 = vmatpush1.bf16.msra.mxu0 0
      %4163 = vmatprep.subr.bf16.mxu0 0
      %4164 = vmatpush1.bf16.msra.mxu0 0
      %4165 = vmatprep.subr.bf16.mxu0 0
      %4166 = vmatpush1.bf16.msra.mxu0 0
      %4167 = vmatprep.subr.bf16.mxu0 0
      %4168 = vmatpush1.bf16.msra.mxu0 0
      %4169 = vmatprep.subr.bf16.mxu0 0
      %4170 = vmatpush1.bf16.msra.mxu0 0
      %4171 = vmatprep.subr.bf16.mxu0 0
      %4172 = vmatpush1.bf16.msra.mxu0 0
      %4173 = vmatprep.mubr.bf16.mxu0 0
      %4174 = vmatmul.mubr.bf16.gmra.mrb[0].mxu0 %v4069
      %v4175 = vpop.f32.mrb[0].mxu0
      %v4176 = vadd.f32 0.0, %v4175
      %v4177 = vpop.f32.mrb[0].mxu0
      %v4178 = vpop.f32.mrb[0].mxu0
      %v4179 = vadd.f32 0.0, %v4178
      %v4180 = vpop.f32.mrb[0].mxu0
      %4181 = vmatprep.mubr.bf16.mxu0 0
      %4182 = vmatmul.mubr.bf16.gmra.mrb[0].mxu0 %v4070
      %v4183 = vpop.f32.mrb[0].mxu0
      %v4184 = vadd.f32 0.0, %v4183
      %v4185 = vpop.f32.mrb[0].mxu0
      %v4186 = vpop.f32.mrb[0].mxu0
      %v4187 = vadd.f32 0.0, %v4186
      %v4188 = vpop.f32.mrb[0].mxu0
      %4189 = vmatprep.mubr.bf16.mxu0 0
      %4190 = vmatmul.mubr.bf16.gmra.mrb[0].mxu0 %v4071
      %v4191 = vpop.f32.mrb[0].mxu0
      %v4192 = vadd.f32 0.0, %v4191
      %v4193 = vpop.f32.mrb[0].mxu0
      %v4194 = vpop.f32.mrb[0].mxu0
      %v4195 = vadd.f32 0.0, %v4194
      %v4196 = vpop.f32.mrb[0].mxu0
      %4197 = vmatprep.mubr.bf16.mxu0 0
      %4198 = vmatmul.mubr.bf16.gmra.mrb[0].mxu0 %v4072
      %v4199 = vpop.f32.mrb[0].mxu0
      %v4200 = vadd.f32 0.0, %v4199
      %v4201 = vpop.f32.mrb[0].mxu0
      %v4202 = vpop.f32.mrb[0].mxu0
      %v4203 = vadd.f32 0.0, %v4202
      %v4204 = vpop.f32.mrb[0].mxu0
      %4205 = vmatprep.mubr.bf16.mxu0 0
      %4206 = vmatmul.mubr.bf16.gmra.mrb[0].mxu0 %v4073
      %v4207 = vpop.f32.mrb[0].mxu0
      %v4208 = vadd.f32 0.0, %v4207
      %v4209 = vpop.f32.mrb[0].mxu0
      %v4210 = vpop.f32.mrb[0].mxu0
      %v4211 = vadd.f32 0.0, %v4210
      %v4212 = vpop.f32.mrb[0].mxu0
      %4213 = vmatprep.mubr.bf16.mxu0 0
      %4214 = vmatmul.mubr.bf16.gmra.mrb[0].mxu0 %v4074
      %v4215 = vpop.f32.mrb[0].mxu0
      %v4216 = vadd.f32 0.0, %v4215
      %v4217 = vpop.f32.mrb[0].mxu0
      %v4218 = vpop.f32.mrb[0].mxu0
      %v4219 = vadd.f32 0.0, %v4218
      %v4220 = vpop.f32.mrb[0].mxu0
      %4221 = vmatprep.mubr.bf16.mxu0 0
      %4222 = vmatmul.mubr.bf16.gmra.mrb[0].mxu0 %v4075
      %v4223 = vpop.f32.mrb[0].mxu0
      %v4224 = vadd.f32 0.0, %v4223
      %v4225 = vpop.f32.mrb[0].mxu0
      %v4226 = vpop.f32.mrb[0].mxu0
      %v4227 = vadd.f32 0.0, %v4226
      %v4228 = vpop.f32.mrb[0].mxu0
      %4229 = vmatprep.mubr.bf16.mxu0 0
      %4230 = vmatmul.mubr.bf16.gmra.mrb[0].mxu0 %v4076
      %v4231 = vpop.f32.mrb[0].mxu0
      %v4232 = vadd.f32 0.0, %v4231
      %v4233 = vpop.f32.mrb[0].mxu0
      %v4234 = vpop.f32.mrb[0].mxu0
      %v4235 = vadd.f32 0.0, %v4234
      %v4236 = vpop.f32.mrb[0].mxu0
      %4237 = vdwg.mxu0
      %v4238 = vld [vmem:[%s8] sm:$0x1]
      %v4240 = vlaneseq
      %v4241 = vshrl.u32 %v4240, 7
      %v4242 = vsub.s32 0, %v4241
      %v4243 = vrot.slane %v4238, %v4242
      %v4245 = vmul.f32 %v4176, %v4243
      %v4246 = vmul.f32 %v4179, %v4243
      %v4247 = vmul.f32 %v4184, %v4243
      %v4248 = vmul.f32 %v4187, %v4243
      %v4249 = vmul.f32 %v4192, %v4243
      %v4250 = vmul.f32 %v4195, %v4243
      %v4251 = vmul.f32 %v4200, %v4243
      %v4252 = vmul.f32 %v4203, %v4243
      %v4253 = vmul.f32 %v4208, %v4243
      %v4254 = vmul.f32 %v4211, %v4243
      %v4255 = vmul.f32 %v4216, %v4243
      %v4256 = vmul.f32 %v4219, %v4243
      %v4257 = vmul.f32 %v4224, %v4243
      %v4258 = vmul.f32 %v4227, %v4243
      %v4259 = vmul.f32 %v4232, %v4243
      %v4260 = vmul.f32 %v4235, %v4243
      %v4261 = vld [vmem:[%s9] sm:$0x1]
      %v4263 = vlaneseq
      %v4264 = vshrl.u32 %v4263, 7
      %v4265 = vsub.s32 0, %v4264
      %v4266 = vrot.slane %v4261, %v4265
      %v4268 = vadd.f32 %v4245, %v4266
      %v4269 = vadd.f32 %v4246, %v4266
      %v4270 = vadd.f32 %v4247, %v4266
      %v4271 = vadd.f32 %v4248, %v4266
      %v4272 = vadd.f32 %v4249, %v4266
      %v4273 = vadd.f32 %v4250, %v4266
      %v4274 = vadd.f32 %v4251, %v4266
      %v4275 = vadd.f32 %v4252, %v4266
      %v4276 = vadd.f32 %v4253, %v4266
      %v4277 = vadd.f32 %v4254, %v4266
      %v4278 = vadd.f32 %v4255, %v4266
      %v4279 = vadd.f32 %v4256, %v4266
      %v4280 = vadd.f32 %v4257, %v4266
      %v4281 = vadd.f32 %v4258, %v4266
      %v4282 = vadd.f32 %v4259, %v4266
      %v4283 = vadd.f32 %v4260, %v4266
      %v4284 = vadd.f32 %v4268, %v399
      %v4285 = vadd.f32 %v4269, %v400
      %v4286 = vadd.f32 %v4270, %v401
      %v4287 = vadd.f32 %v4271, %v402
      %v4288 = vadd.f32 %v4272, %v403
      %v4289 = vadd.f32 %v4273, %v404
      %v4290 = vadd.f32 %v4274, %v405
      %v4291 = vadd.f32 %v4275, %v406
      %v4292 = vadd.f32 %v4276, %v407
      %v4293 = vadd.f32 %v4277, %v408
      %v4294 = vadd.f32 %v4278, %v409
      %v4295 = vadd.f32 %v4279, %v410
      %v4296 = vadd.f32 %v4280, %v411
      %v4297 = vadd.f32 %v4281, %v412
      %v4298 = vadd.f32 %v4282, %v413
      %v4299 = vadd.f32 %v4283, %v414
      %v4300 = vmax.f32 %v4284, 0.0
      %v4301 = vmax.f32 %v4285, 0.0
      %v4302 = vmax.f32 %v4286, 0.0
      %v4303 = vmax.f32 %v4287, 0.0
      %v4304 = vmax.f32 %v4288, 0.0
      %v4305 = vmax.f32 %v4289, 0.0
      %v4306 = vmax.f32 %v4290, 0.0
      %v4307 = vmax.f32 %v4291, 0.0
      %v4308 = vmax.f32 %v4292, 0.0
      %v4309 = vmax.f32 %v4293, 0.0
      %v4310 = vmax.f32 %v4294, 0.0
      %v4311 = vmax.f32 %v4295, 0.0
      %v4312 = vmax.f32 %v4296, 0.0
      %v4313 = vmax.f32 %v4297, 0.0
      %v4314 = vmax.f32 %v4298, 0.0
      %v4315 = vmax.f32 %v4299, 0.0
      %4316 = vst [vmem:[%s393] sm:$0xff] %v4300
      %4317 = vst [vmem:[%s393 + $0x8] sm:$0xff] %v4301
      %4318 = vst [vmem:[%s393 + $0x10] sm:$0xff] %v4302
      %4319 = vst [vmem:[%s393 + $0x18] sm:$0xff] %v4303
      %4320 = vst [vmem:[%s393 + $0x20] sm:$0xff] %v4304
      %4321 = vst [vmem:[%s393 + $0x28] sm:$0xff] %v4305
      %4322 = vst [vmem:[%s393 + $0x30] sm:$0xff] %v4306
      %4323 = vst [vmem:[%s393 + $0x38] sm:$0xff] %v4307
      %4324 = vst [vmem:[%s393 + $0x40] sm:$0xff] %v4308
      %4325 = vst [vmem:[%s393 + $0x48] sm:$0xff] %v4309
      %4326 = vst [vmem:[%s393 + $0x50] sm:$0xff] %v4310
      %4327 = vst [vmem:[%s393 + $0x58] sm:$0xff] %v4311
      %4328 = vst [vmem:[%s393 + $0x60] sm:$0xff] %v4312
      %4329 = vst [vmem:[%s393 + $0x68] sm:$0xff] %v4313
      %4330 = vst [vmem:[%s393 + $0x70] sm:$0xff] %v4314
      %4331 = vst [vmem:[%s393 + $0x78] sm:$0xff] %v4315
      %s4332 = smul.u32 %s25, 2
      %s4333 = sadd.s32 %s4332, %s26
      %p4334 = scmp.lt.s32.totalorder %s4333, 3
      %s4335 = scalar_select %p4334, %s4333, 3
      %s4336 = smul.addr %s4335, 16
      %s4337 = smul.addr %s4336, 8
      %s4338 = scalar_lea.vmem %s10, %s4337
      // Predicated region
      $region61: #{bottleneck_forward.1} parent=59 // pred_check
        %p4339 = pneg %p274
      $region62: #{bottleneck_forward.1} parent=59 // pred_check_branch
        %4341 = sbr.rel (%p4339) target = $region64
      $region63: #{bottleneck_forward.1} parent=59 // pred_region
        %s4342 = smul.u32 %s25, 2
        %s4343 = sadd.s32 %s4342, %s26
      $region64: #{bottleneck_forward.1} parent=59 // pred_fallthru
        _
    $region60: #{bottleneck_forward.1} parent=5 // pred_fallthru
      _
    %p4344 = scmp.le.s32.totalorder 2, %s16
    // Predicated region
    $region65: #{bottleneck_forward.1} parent=5 // pred_check
      %p4345 = pneg %p4344
    $region66: #{bottleneck_forward.1} parent=5 // pred_check_branch
      %4347 = sbr.rel (%p4345) target = $region68
    $region67: #{bottleneck_forward.1} parent=5 // pred_region
      %s4348 = ssub.s32 %s16, 2
      // Predicated region
      $region69: #{bottleneck_forward.1} parent=67 // pred_check
        %p4349 = pneg %p280
      $region70: #{bottleneck_forward.1} parent=67 // pred_check_branch
        %4351 = sbr.rel (%p4349) target = $region72
      $region71: #{bottleneck_forward.1} parent=67 // pred_region
        %s4352 = smul.u32 %s27, 2
        %s4353 = sadd.s32 %s4352, %s28
        %p4354 = scmp.lt.s32.totalorder %s4353, 3
        %s4355 = scalar_select %p4354, %s4353, 3
        %s4356 = smul.addr %s4355, 16
        %s4357 = smul.addr %s4356, 8
        %s4358 = scalar_lea.vmem %s10, %s4357
      $region72: #{bottleneck_forward.1} parent=67 // pred_fallthru
        _
    $region68: #{bottleneck_forward.1} parent=5 // pred_fallthru
      _
  $region6: #{bottleneck_forward.1} parent=0 // loop_footer
    %s20 = sadd.s32 1, %s16
  $region7: #{bottleneck_forward.1} parent=0 // loop_footer_branch
    %15 = sbr.rel target = $region3
  $region8: #{bottleneck_forward.1} parent=0 // loop_exit
    _

</llo_original>
